<compile_context>
chip_gen: v7x
topology: tpu7x:2x2x1
jax: 0.10.0
libtpu: 0.0.40
codegen_flags: <defaults>
</compile_context>

<pallas_src>
import functools
import math

import jax
import jax.numpy as jnp
from jax import lax
from jax.experimental import pallas as pl
from jax.experimental.pallas import tpu as pltpu

BN_EPS = 1e-5


def _round_up(x, m):
    return (x + m - 1) // m * m


def _vmem_limit_bytes():
    cap = 64 * 1024 * 1024          # conservative fallback = v7x per-TC VMEM
    try:
        cap = int(pltpu.get_tpu_info().vmem_capacity_bytes)
    except Exception:
        pass
    # 3/4 of reported capacity, clamped to 48 MiB so the limit is valid on v7x
    # even if the query reports per-chip (128 MiB) instead of per-TC (64 MiB).
    return min((cap * 3) // 4, 48 * 1024 * 1024)


# --------------------------------------------------------------------------
# Fused Pallas kernel: K accumulating MXU matmuls over a VMEM-resident halo'd
# image + folded-BN bias + optional (1x1-shortcut matmul | residual add) + ReLU
# --------------------------------------------------------------------------
def _conv_fused_kernel(x_ref, w_ref, b_ref, *rest, tap_offsets, lanes,
                       has_res, has_sc, relu):
    """x_ref: [1, Cx, Rx] bf16 (flat, zero-halo'd image; spatial on lanes)
    w_ref: [K, Cout, Cx] bf16 (BN scale folded, per-tap transposed; resident)
    b_ref: [Cout, 1] f32 (folded BN bias, + shortcut-BN bias if fused)
    optional r_ref: [1, Cout, lanes] bf16 (identity residual, wide layout)
    optional xs_ref: [1, Cs, lanes] bf16 + ws_ref: [Cout, Cs] bf16 (1x1 proj)
    o_ref: [1, Cout, lanes]."""
    idx = 0
    r_ref = xs_ref = ws_ref = None
    if has_res:
        r_ref = rest[idx]; idx += 1
    if has_sc:
        xs_ref, ws_ref = rest[idx], rest[idx + 1]; idx += 2
    o_ref = rest[idx]

    # K*Cin contraction realized as K back-to-back accumulating MXU matmuls on
    # static lane-offset slices of the resident tile (no HBM im2col slab).
    acc = None
    for k, off in enumerate(tap_offsets):
        piece = x_ref[0, :, off:off + lanes]             # [Cx, lanes] bf16
        tap = jnp.dot(w_ref[k], piece, preferred_element_type=jnp.float32)
        acc = tap if acc is None else acc + tap

    out = acc + b_ref[...]                               # folded-BN bias (f32)
    if has_sc:                                           # fused 1x1 projection
        out = out + jnp.dot(ws_ref[...], xs_ref[0],
                            preferred_element_type=jnp.float32)
    if has_res:                                          # fused identity add
        out = out + r_ref[0].astype(jnp.float32)
    if relu:
        out = jnp.maximum(out, 0.0)
    o_ref[0] = out.astype(o_ref.dtype)


def _conv_call(x_slab, w_taps, bias, *, tap_offsets, lanes, relu,
               residual=None, shortcut=None, out_dtype=jnp.float32):
    """x_slab: [N, Cx, Rx] bf16.  w_taps: [K, Cout, Cx] bf16.  bias: [Cout,1].
    residual: [N, Cout, lanes] bf16.  shortcut: ([N, Cs, lanes], [Cout, Cs])."""
    n, cx, rx = x_slab.shape
    k, cout, _ = w_taps.shape
    assert len(tap_offsets) == k and lanes % 128 == 0 and rx % 128 == 0

    in_specs = [
        pl.BlockSpec((1, cx, rx), lambda i: (i, 0, 0)),
        # Constant index_map: weights/bias stay resident across grid steps.
        pl.BlockSpec((k, cout, cx), lambda i: (0, 0, 0)),
        pl.BlockSpec((cout, 1), lambda i: (0, 0)),
    ]
    args = [x_slab, w_taps, bias]

    has_res = residual is not None
    has_sc = shortcut is not None
    if has_res:
        in_specs.append(pl.BlockSpec((1, cout, lanes), lambda i: (i, 0, 0)))
        args.append(residual)
    if has_sc:
        xs, ws = shortcut
        cs = xs.shape[1]
        in_specs.append(pl.BlockSpec((1, cs, lanes), lambda i: (i, 0, 0)))
        in_specs.append(pl.BlockSpec((cout, cs), lambda i: (0, 0)))
        args += [xs, ws]

    kernel = functools.partial(
        _conv_fused_kernel, tap_offsets=tuple(tap_offsets), lanes=lanes,
        has_res=has_res, has_sc=has_sc, relu=relu)

    return pl.pallas_call(
        kernel,
        out_shape=jax.ShapeDtypeStruct((n, cout, lanes), out_dtype),
        grid_spec=pltpu.PrefetchScalarGridSpec(
            num_scalar_prefetch=0,
            grid=(n,),                                  # one image per step
            in_specs=in_specs,
            out_specs=pl.BlockSpec((1, cout, lanes), lambda i: (i, 0, 0)),
        ),
        compiler_params=pltpu.CompilerParams(
            dimension_semantics=("parallel",),          # shard images over TCs
            vmem_limit_bytes=_vmem_limit_bytes(),
        ),
    )(*args)


# --------------------------------------------------------------------------
# HBM-side slab builders (pure layout plumbing on bf16 streams)
# --------------------------------------------------------------------------
def _halo_slab(x_nchw, rx):
    """NCHW -> zero-pad H,W by 1 -> flat [N, C, Hp*Wp] -> lane tail-pad to rx."""
    x = x_nchw.astype(jnp.bfloat16)
    n, c, h, w = x.shape
    xp = jnp.pad(x, ((0, 0), (0, 0), (1, 1), (1, 1)))
    flat = xp.reshape(n, c, (h + 2) * (w + 2))
    return jnp.pad(flat, ((0, 0), (0, 0), (0, rx - flat.shape[-1])))


def _wide_slab(x_nchw, wide_w, lanes):
    """NCHW -> pad W on the right to wide_w -> flat [N, C, H*wide_w] -> lanes."""
    x = x_nchw.astype(jnp.bfloat16)
    n, c, h, w = x.shape
    xw = jnp.pad(x, ((0, 0), (0, 0), (0, 0), (0, wide_w - w)))
    flat = xw.reshape(n, c, h * wide_w)
    return jnp.pad(flat, ((0, 0), (0, 0), (0, lanes - flat.shape[-1])))


def _fold_bn_w(scale, w_hwio):
    """[kh,kw,Cin,Cout] -> per-tap transposed [K,Cout,Cin], BN scale folded (f32)."""
    kh, kw, cin, cout = w_hwio.shape
    wt = jnp.transpose(w_hwio, (0, 1, 3, 2)).reshape(kh * kw, cout, cin)
    return (wt * scale[None, :, None]).astype(jnp.bfloat16)


# --------------------------------------------------------------------------
# conv3x3 stride=1 (+BN +optional shortcut/residual +ReLU): in-kernel im2col
# --------------------------------------------------------------------------
def _conv3x3_s1(x_nchw, w, scale, bias, *, relu, residual=None, shortcut=None,
                out_dtype=jnp.float32):
    n, cin, h, wd = x_nchw.shape
    cout = w.shape[-1]
    wp = wd + 2                                     # wide output row width
    lanes = _round_up(h * wp, 128)                  # lane-dense output slab
    max_off = 2 * wp + 2
    rx = _round_up(max_off + lanes, 128)

    x_slab = _halo_slab(x_nchw, rx)                 # [n, cin, rx] bf16
    w_taps = _fold_bn_w(scale, w)                   # [9, cout, cin] bf16
    b = bias

    sc = None
    if shortcut is not None:                        # fuse 1x1 projection + BN
        xs4, w_sc, s_sc, b_sc = shortcut
        ws = (jnp.transpose(w_sc[0, 0]) * s_sc[:, None]).astype(jnp.bfloat16)
        sc = (_wide_slab(xs4, wp, lanes), ws)
        b = b + b_sc                                # both BN biases in one add
    res = _wide_slab(residual, wp, lanes) if residual is not None else None

    tap_offsets = [ky * wp + kx for ky in range(3) for kx in range(3)]
    out = _conv_call(x_slab, w_taps, b.reshape(-1, 1).astype(jnp.float32),
                     tap_offsets=tap_offsets, lanes=lanes, relu=relu,
                     residual=res, shortcut=sc, out_dtype=out_dtype)
    # Valid data at lane h*wp + w for w < wd; drop the garbage columns.
    return out[:, :, :h * wp].reshape(n, cout, h, wp)[:, :, :, :wd]


# --------------------------------------------------------------------------
# conv3x3 strided (+BN +ReLU): XLA-side patch slab, same fused kernel (K=1)
# --------------------------------------------------------------------------
def _conv3x3_strided(x_nchw, w, scale, bias, *, stride, relu,
                     out_dtype=jnp.float32):
    # TODO(synk): move the strided patch gather in-kernel as well (stride-2
    # duplication is only ~2.25x and this path runs once per downsample block).
    x = x_nchw.astype(jnp.bfloat16)
    n, cin, h, wd = x.shape
    kh, kw, _, cout = w.shape
    ho = (h + 2 - kh) // stride + 1
    wo = (wd + 2 - kw) // stride + 1
    xp = jnp.pad(x, ((0, 0), (0, 0), (1, 1), (1, 1)))
    pieces = []
    for ky in range(kh):
        for kx in range(kw):
            pieces.append(xp[:, :, ky:ky + stride * (ho - 1) + 1:stride,
                                    kx:kx + stride * (wo - 1) + 1:stride])
    patches = jnp.concatenate(pieces, axis=1)            # [n, K*cin, ho, wo]
    m = ho * wo
    lanes = _round_up(m, 128)
    slab = jnp.pad(patches.reshape(n, kh * kw * cin, m),
                   ((0, 0), (0, 0), (0, lanes - m)))
    wt = (jnp.transpose(w, (3, 0, 1, 2)).reshape(cout, kh * kw * cin)
          * scale[:, None]).astype(jnp.bfloat16)[None]   # [1, cout, K*cin]
    out = _conv_call(slab, wt, bias.reshape(-1, 1).astype(jnp.float32),
                     tap_offsets=[0], lanes=lanes, relu=relu,
                     out_dtype=out_dtype)
    return out[:, :, :m].reshape(n, cout, ho, wo)


# --------------------------------------------------------------------------
# ResidualBlock forward (mirrors the PyTorch module; NCHW in / NCHW out)
# --------------------------------------------------------------------------
def residual_block_fwd(x_nchw, params):
    x = x_nchw.astype(jnp.float32)
    s1, b1 = params["bn1"]
    s2, b2 = params["bn2"]
    stride = params["stride"]

    # conv1 + bn1 + relu  (bf16 output: the next matmul consumes bf16 anyway)
    if stride == 1:
        out1 = _conv3x3_s1(x, params["w1"], s1, b1, relu=True,
                           out_dtype=jnp.bfloat16)
    else:
        out1 = _conv3x3_strided(x, params["w1"], s1, b1, stride=stride,
                                relu=True, out_dtype=jnp.bfloat16)

    # conv2 + bn2 + (projection shortcut | identity residual) + final ReLU:
    # one fused kernel, no HBM round-trip of the shortcut activation.
    if "w_sc" in params:
        ssc, bsc = params["bn_sc"]
        ho, wo = out1.shape[2], out1.shape[3]
        x_sub = x[:, :, ::stride, ::stride][:, :, :ho, :wo]   # 1x1-conv input
        out = _conv3x3_s1(out1, params["w2"], s2, b2, relu=True,
                          shortcut=(x_sub, params["w_sc"], ssc, bsc),
                          out_dtype=jnp.float32)
    else:
        out = _conv3x3_s1(out1, params["w2"], s2, b2, relu=True,
                          residual=x, out_dtype=jnp.float32)
    return out


# --------------------------------------------------------------------------
# Deterministic parameter init (synthetic; shapes match the module)
# --------------------------------------------------------------------------
def init_bn(key, c):
    k1, k2, k3, k4 = jax.random.split(key, 4)
    gamma = 1.0 + 0.1 * jax.random.normal(k1, (c,), jnp.float32)
    beta = 0.1 * jax.random.normal(k2, (c,), jnp.float32)
    mean = 0.1 * jax.random.normal(k3, (c,), jnp.float32)
    var = 1.0 + 0.1 * jnp.abs(jax.random.normal(k4, (c,), jnp.float32))
    scale = gamma / jnp.sqrt(var + BN_EPS)
    bias = beta - mean * scale
    return scale, bias


def init_conv(key, kh, kw, cin, cout):
    fan_in = kh * kw * cin
    return (jax.random.normal(key, (kh, kw, cin, cout), jnp.float32)
            * (1.0 / math.sqrt(fan_in)))


def init_residual_block(key, inchannel, outchannel, stride):
    keys = jax.random.split(key, 6)
    p = {
        "w1": init_conv(keys[0], 3, 3, inchannel, outchannel),
        "bn1": init_bn(keys[1], outchannel),
        "w2": init_conv(keys[2], 3, 3, outchannel, outchannel),
        "bn2": init_bn(keys[3], outchannel),
        "stride": stride,
    }
    if stride != 1 or inchannel != outchannel:
        p["w_sc"] = init_conv(keys[4], 1, 1, inchannel, outchannel)
        p["bn_sc"] = init_bn(keys[5], outchannel)
    return p


# --------------------------------------------------------------------------
# Pure-JAX reference (f32, HIGHEST precision) for correctness checking
# --------------------------------------------------------------------------
def _ref_conv_bn(x, w, scale, bias, *, stride, padding, relu, residual=None):
    out = lax.conv_general_dilated(
        x, w, window_strides=(stride, stride),
        padding=[(padding, padding), (padding, padding)],
        dimension_numbers=("NCHW", "HWIO", "NCHW"),
        precision=lax.Precision.HIGHEST)
    out = out * scale[None, :, None, None] + bias[None, :, None, None]
    if residual is not None:
        out = out + residual
    if relu:
        out = jnp.maximum(out, 0.0)
    return out


def ref_residual_block_fwd(x, params):
    s1, b1 = params["bn1"]
    s2, b2 = params["bn2"]
    stride = params["stride"]
    out = _ref_conv_bn(x, params["w1"], s1, b1,
                       stride=stride, padding=1, relu=True)
    if "w_sc" in params:
        ssc, bsc = params["bn_sc"]
        shortcut = _ref_conv_bn(x, params["w_sc"], ssc, bsc,
                                stride=stride, padding=0, relu=False)
    else:
        shortcut = x
    return _ref_conv_bn(out, params["w2"], s2, b2, stride=1, padding=1,
                        relu=True, residual=shortcut)


# --------------------------------------------------------------------------
if __name__ == "__main__":
    key = jax.random.PRNGKey(0)
    kp1, kp2, kx = jax.random.split(key, 3)

    N, Cin, H, W = 2, 4, 16, 16
    Cout = 8
    x = jax.random.normal(kx, (N, Cin, H, W), jnp.float32)   # NCHW, like PyTorch

    # Block A: downsampling block with conv1x1 shortcut (stride=2, 4->8 ch).
    pA = init_residual_block(kp1, Cin, Cout, stride=2)
    # Block B: identity-shortcut block (stride=1, 8->8 ch).
    pB = init_residual_block(kp2, Cout, Cout, stride=1)

    fwd = jax.jit(lambda v: residual_block_fwd(residual_block_fwd(v, pA), pB))
    out = jax.block_until_ready(fwd(x))

    assert out.shape == (N, Cout, H // 2, W // 2), out.shape
    assert bool(jnp.all(jnp.isfinite(out)))

    ref = ref_residual_block_fwd(ref_residual_block_fwd(x, pA), pB)
    max_err = float(jnp.max(jnp.abs(out - ref)))
    assert bool(jnp.allclose(out, ref, atol=0.1, rtol=0.1)), max_err

    print("KERNEL_OK")
</pallas_src>

<mosaic_0001>
module attributes {stable_mosaic.version = 11 : i64} {
  func.func @_conv_fused_kernel(%arg0: i32, %arg1: memref<1x36x128xbf16, #tpu.memory_space<vmem>>, %arg2: memref<1x8x36xbf16, #tpu.memory_space<vmem>>, %arg3: memref<8x1xf32, #tpu.memory_space<vmem>>, %arg4: memref<1x8x128xbf16, #tpu.memory_space<vmem>>) attributes {dimension_semantics = [#tpu.dimension_semantics<parallel>], iteration_bounds = array<i64: 2>, scalar_prefetch = 0 : i64, scratch_operands = 0 : i64, tpu.core_type = #tpu.core_type<tc>, window_params = [{transform_indices = @transform_0, window_bounds = array<i64: 1, 36, 128>}, {pipeline_mode = #tpu.pipeline_mode<synchronous>, transform_indices = @transform_1, window_bounds = array<i64: 1, 8, 36>}, {pipeline_mode = #tpu.pipeline_mode<synchronous>, transform_indices = @transform_2, window_bounds = array<i64: 8, 1>}, {transform_indices = @transform_3, window_bounds = array<i64: 1, 8, 128>}]} {
    %c0 = arith.constant 0 : index
    %c0_0 = arith.constant 0 : index
    %c0_1 = arith.constant 0 : index
    %0 = vector.load %arg1[%c0, %c0_0, %c0_1] : memref<1x36x128xbf16, #tpu.memory_space<vmem>>, vector<1x36x128xbf16>
    %1 = vector.shape_cast %0 : vector<1x36x128xbf16> to vector<36x128xbf16>
    %c0_2 = arith.constant 0 : index
    %c0_3 = arith.constant 0 : index
    %c0_4 = arith.constant 0 : index
    %2 = vector.load %arg2[%c0_2, %c0_3, %c0_4] : memref<1x8x36xbf16, #tpu.memory_space<vmem>>, vector<1x8x36xbf16>
    %3 = vector.shape_cast %2 : vector<1x8x36xbf16> to vector<8x36xbf16>
    %cst = arith.constant dense<0.000000e+00> : vector<8x128xf32>
    %4 = tpu.matmul %3, %1, %cst {dimension_numbers = #tpu.dot_dimension_numbers<[1], [0], [0], [1], [0, 0, 1, 1], [], []>} : vector<8x36xbf16>, vector<36x128xbf16>, vector<8x128xf32> -> vector<8x128xf32>
    %c0_5 = arith.constant 0 : index
    %c0_6 = arith.constant 0 : index
    %5 = vector.load %arg3[%c0_5, %c0_6] : memref<8x1xf32, #tpu.memory_space<vmem>>, vector<8x1xf32>
    %6 = vector.broadcast %5 : vector<8x1xf32> to vector<8x128xf32>
    %7 = arith.addf %4, %6 : vector<8x128xf32>
    %cst_7 = arith.constant 0.000000e+00 : f32
    %8 = vector.broadcast %cst_7 : f32 to vector<8x128xf32>
    %9 = arith.maximumf %7, %8 : vector<8x128xf32>
    %10 = arith.truncf %9 : vector<8x128xf32> to vector<8x128xbf16>
    %c0_8 = arith.constant 0 : index
    %c0_9 = arith.constant 0 : index
    %c0_10 = arith.constant 0 : index
    %11 = vector.load %arg4[%c0_8, %c0_9, %c0_10] : memref<1x8x128xbf16, #tpu.memory_space<vmem>>, vector<1x8x128xbf16>
    %12 = vector.shape_cast %11 : vector<1x8x128xbf16> to vector<8x128xbf16>
    %13 = vector.shape_cast %10 : vector<8x128xbf16> to vector<1x8x128xbf16>
    tpu.vector_store %arg4[%c0_8, %c0_9, %c0_10], %13 {strides = array<i32>} : memref<1x8x128xbf16, #tpu.memory_space<vmem>>, vector<1x8x128xbf16>,
    return
  }
  func.func @transform_0(%arg0: i32) -> (i32, i32, i32) {
    %c0_i32 = arith.constant 0 : i32
    %c0_i32_0 = arith.constant 0 : i32
    %c0_i32_1 = arith.constant 0 : i32
    return %arg0, %c0_i32, %c0_i32_0 : i32, i32, i32
  }
  func.func @transform_1(%arg0: i32) -> (i32, i32, i32) {
    %c0_i32 = arith.constant 0 : i32
    %c0_i32_0 = arith.constant 0 : i32
    %c0_i32_1 = arith.constant 0 : i32
    %c0_i32_2 = arith.constant 0 : i32
    return %c0_i32, %c0_i32_0, %c0_i32_1 : i32, i32, i32
  }
  func.func @transform_2(%arg0: i32) -> (i32, i32) {
    %c0_i32 = arith.constant 0 : i32
    %c0_i32_0 = arith.constant 0 : i32
    %c0_i32_1 = arith.constant 0 : i32
    return %c0_i32, %c0_i32_0 : i32, i32
  }
  func.func @transform_3(%arg0: i32) -> (i32, i32, i32) {
    %c0_i32 = arith.constant 0 : i32
    %c0_i32_0 = arith.constant 0 : i32
    %c0_i32_1 = arith.constant 0 : i32
    return %arg0, %c0_i32, %c0_i32_0 : i32, i32, i32
  }
}

module attributes {stable_mosaic.version = 11 : i64} {
  func.func @_conv_fused_kernel(%arg0: i32, %arg1: memref<1x8x256xbf16, #tpu.memory_space<vmem>>, %arg2: memref<9x8x8xbf16, #tpu.memory_space<vmem>>, %arg3: memref<8x1xf32, #tpu.memory_space<vmem>>, %arg4: memref<1x4x128xbf16, #tpu.memory_space<vmem>>, %arg5: memref<8x4xbf16, #tpu.memory_space<vmem>>, %arg6: memref<1x8x128xf32, #tpu.memory_space<vmem>>) attributes {dimension_semantics = [#tpu.dimension_semantics<parallel>], iteration_bounds = array<i64: 2>, scalar_prefetch = 0 : i64, scratch_operands = 0 : i64, tpu.core_type = #tpu.core_type<tc>, window_params = [{transform_indices = @transform_0, window_bounds = array<i64: 1, 8, 256>}, {pipeline_mode = #tpu.pipeline_mode<synchronous>, transform_indices = @transform_1, window_bounds = array<i64: 9, 8, 8>}, {pipeline_mode = #tpu.pipeline_mode<synchronous>, transform_indices = @transform_2, window_bounds = array<i64: 8, 1>}, {transform_indices = @transform_3, window_bounds = array<i64: 1, 4, 128>}, {pipeline_mode = #tpu.pipeline_mode<synchronous>, transform_indices = @transform_4, window_bounds = array<i64: 8, 4>}, {transform_indices = @transform_5, window_bounds = array<i64: 1, 8, 128>}]} {
    %c0 = arith.constant 0 : index
    %c0_0 = arith.constant 0 : index
    %c0_1 = arith.constant 0 : index
    %0 = vector.load %arg1[%c0, %c0_0, %c0_1] : memref<1x8x256xbf16, #tpu.memory_space<vmem>>, vector<1x8x128xbf16>
    %1 = vector.shape_cast %0 : vector<1x8x128xbf16> to vector<8x128xbf16>
    %c0_2 = arith.constant 0 : index
    %c0_3 = arith.constant 0 : index
    %c0_4 = arith.constant 0 : index
    %2 = vector.load %arg2[%c0_2, %c0_3, %c0_4] : memref<9x8x8xbf16, #tpu.memory_space<vmem>>, vector<1x8x8xbf16>
    %3 = vector.shape_cast %2 : vector<1x8x8xbf16> to vector<8x8xbf16>
    %cst = arith.constant dense<0.000000e+00> : vector<8x128xf32>
    %4 = tpu.matmul %3, %1, %cst {dimension_numbers = #tpu.dot_dimension_numbers<[1], [0], [0], [1], [0, 0, 1, 1], [], []>} : vector<8x8xbf16>, vector<8x128xbf16>, vector<8x128xf32> -> vector<8x128xf32>
    %c0_5 = arith.constant 0 : index
    %c0_6 = arith.constant 0 : index
    %c1 = arith.constant 1 : index
    %5 = vector.load %arg1[%c0_5, %c0_6, %c1] : memref<1x8x256xbf16, #tpu.memory_space<vmem>>, vector<1x8x128xbf16>
    %6 = vector.shape_cast %5 : vector<1x8x128xbf16> to vector<8x128xbf16>
    %c1_7 = arith.constant 1 : index
    %c0_8 = arith.constant 0 : index
    %c0_9 = arith.constant 0 : index
    %7 = vector.load %arg2[%c1_7, %c0_8, %c0_9] : memref<9x8x8xbf16, #tpu.memory_space<vmem>>, vector<1x8x8xbf16>
    %8 = vector.shape_cast %7 : vector<1x8x8xbf16> to vector<8x8xbf16>
    %cst_10 = arith.constant dense<0.000000e+00> : vector<8x128xf32>
    %9 = tpu.matmul %8, %6, %cst_10 {dimension_numbers = #tpu.dot_dimension_numbers<[1], [0], [0], [1], [0, 0, 1, 1], [], []>} : vector<8x8xbf16>, vector<8x128xbf16>, vector<8x128xf32> -> vector<8x128xf32>
    %10 = arith.addf %4, %9 : vector<8x128xf32>
    %c0_11 = arith.constant 0 : index
    %c0_12 = arith.constant 0 : index
    %c2 = arith.constant 2 : index
    %11 = vector.load %arg1[%c0_11, %c0_12, %c2] : memref<1x8x256xbf16, #tpu.memory_space<vmem>>, vector<1x8x128xbf16>
    %12 = vector.shape_cast %11 : vector<1x8x128xbf16> to vector<8x128xbf16>
    %c2_13 = arith.constant 2 : index
    %c0_14 = arith.constant 0 : index
    %c0_15 = arith.constant 0 : index
    %13 = vector.load %arg2[%c2_13, %c0_14, %c0_15] : memref<9x8x8xbf16, #tpu.memory_space<vmem>>, vector<1x8x8xbf16>
    %14 = vector.shape_cast %13 : vector<1x8x8xbf16> to vector<8x8xbf16>
    %cst_16 = arith.constant dense<0.000000e+00> : vector<8x128xf32>
    %15 = tpu.matmul %14, %12, %cst_16 {dimension_numbers = #tpu.dot_dimension_numbers<[1], [0], [0], [1], [0, 0, 1, 1], [], []>} : vector<8x8xbf16>, vector<8x128xbf16>, vector<8x128xf32> -> vector<8x128xf32>
    %16 = arith.addf %10, %15 : vector<8x128xf32>
    %c0_17 = arith.constant 0 : index
    %c0_18 = arith.constant 0 : index
    %c10 = arith.constant 10 : index
    %17 = vector.load %arg1[%c0_17, %c0_18, %c10] : memref<1x8x256xbf16, #tpu.memory_space<vmem>>, vector<1x8x128xbf16>
    %18 = vector.shape_cast %17 : vector<1x8x128xbf16> to vector<8x128xbf16>
    %c3 = arith.constant 3 : index
    %c0_19 = arith.constant 0 : index
    %c0_20 = arith.constant 0 : index
    %19 = vector.load %arg2[%c3, %c0_19, %c0_20] : memref<9x8x8xbf16, #tpu.memory_space<vmem>>, vector<1x8x8xbf16>
    %20 = vector.shape_cast %19 : vector<1x8x8xbf16> to vector<8x8xbf16>
    %cst_21 = arith.constant dense<0.000000e+00> : vector<8x128xf32>
    %21 = tpu.matmul %20, %18, %cst_21 {dimension_numbers = #tpu.dot_dimension_numbers<[1], [0], [0], [1], [0, 0, 1, 1], [], []>} : vector<8x8xbf16>, vector<8x128xbf16>, vector<8x128xf32> -> vector<8x128xf32>
    %22 = arith.addf %16, %21 : vector<8x128xf32>
    %c0_22 = arith.constant 0 : index
    %c0_23 = arith.constant 0 : index
    %c11 = arith.constant 11 : index
    %23 = vector.load %arg1[%c0_22, %c0_23, %c11] : memref<1x8x256xbf16, #tpu.memory_space<vmem>>, vector<1x8x128xbf16>
    %24 = vector.shape_cast %23 : vector<1x8x128xbf16> to vector<8x128xbf16>
    %c4 = arith.constant 4 : index
    %c0_24 = arith.constant 0 : index
    %c0_25 = arith.constant 0 : index
    %25 = vector.load %arg2[%c4, %c0_24, %c0_25] : memref<9x8x8xbf16, #tpu.memory_space<vmem>>, vector<1x8x8xbf16>
    %26 = vector.shape_cast %25 : vector<1x8x8xbf16> to vector<8x8xbf16>
    %cst_26 = arith.constant dense<0.000000e+00> : vector<8x128xf32>
    %27 = tpu.matmul %26, %24, %cst_26 {dimension_numbers = #tpu.dot_dimension_numbers<[1], [0], [0], [1], [0, 0, 1, 1], [], []>} : vector<8x8xbf16>, vector<8x128xbf16>, vector<8x128xf32> -> vector<8x128xf32>
    %28 = arith.addf %22, %27 : vector<8x128xf32>
    %c0_27 = arith.constant 0 : index
    %c0_28 = arith.constant 0 : index
    %c12 = arith.constant 12 : index
    %29 = vector.load %arg1[%c0_27, %c0_28, %c12] : memref<1x8x256xbf16, #tpu.memory_space<vmem>>, vector<1x8x128xbf16>
    %30 = vector.shape_cast %29 : vector<1x8x128xbf16> to vector<8x128xbf16>
    %c5 = arith.constant 5 : index
    %c0_29 = arith.constant 0 : index
    %c0_30 = arith.constant 0 : index
    %31 = vector.load %arg2[%c5, %c0_29, %c0_30] : memref<9x8x8xbf16, #tpu.memory_space<vmem>>, vector<1x8x8xbf16>
    %32 = vector.shape_cast %31 : vector<1x8x8xbf16> to vector<8x8xbf16>
    %cst_31 = arith.constant dense<0.000000e+00> : vector<8x128xf32>
    %33 = tpu.matmul %32, %30, %cst_31 {dimension_numbers = #tpu.dot_dimension_numbers<[1], [0], [0], [1], [0, 0, 1, 1], [], []>} : vector<8x8xbf16>, vector<8x128xbf16>, vector<8x128xf32> -> vector<8x128xf32>
    %34 = arith.addf %28, %33 : vector<8x128xf32>
    %c0_32 = arith.constant 0 : index
    %c0_33 = arith.constant 0 : index
    %c20 = arith.constant 20 : index
    %35 = vector.load %arg1[%c0_32, %c0_33, %c20] : memref<1x8x256xbf16, #tpu.memory_space<vmem>>, vector<1x8x128xbf16>
    %36 = vector.shape_cast %35 : vector<1x8x128xbf16> to vector<8x128xbf16>
    %c6 = arith.constant 6 : index
    %c0_34 = arith.constant 0 : index
    %c0_35 = arith.constant 0 : index
    %37 = vector.load %arg2[%c6, %c0_34, %c0_35] : memref<9x8x8xbf16, #tpu.memory_space<vmem>>, vector<1x8x8xbf16>
    %38 = vector.shape_cast %37 : vector<1x8x8xbf16> to vector<8x8xbf16>
    %cst_36 = arith.constant dense<0.000000e+00> : vector<8x128xf32>
    %39 = tpu.matmul %38, %36, %cst_36 {dimension_numbers = #tpu.dot_dimension_numbers<[1], [0], [0], [1], [0, 0, 1, 1], [], []>} : vector<8x8xbf16>, vector<8x128xbf16>, vector<8x128xf32> -> vector<8x128xf32>
    %40 = arith.addf %34, %39 : vector<8x128xf32>
    %c0_37 = arith.constant 0 : index
    %c0_38 = arith.constant 0 : index
    %c21 = arith.constant 21 : index
    %41 = vector.load %arg1[%c0_37, %c0_38, %c21] : memref<1x8x256xbf16, #tpu.memory_space<vmem>>, vector<1x8x128xbf16>
    %42 = vector.shape_cast %41 : vector<1x8x128xbf16> to vector<8x128xbf16>
    %c7 = arith.constant 7 : index
    %c0_39 = arith.constant 0 : index
    %c0_40 = arith.constant 0 : index
    %43 = vector.load %arg2[%c7, %c0_39, %c0_40] : memref<9x8x8xbf16, #tpu.memory_space<vmem>>, vector<1x8x8xbf16>
    %44 = vector.shape_cast %43 : vector<1x8x8xbf16> to vector<8x8xbf16>
    %cst_41 = arith.constant dense<0.000000e+00> : vector<8x128xf32>
    %45 = tpu.matmul %44, %42, %cst_41 {dimension_numbers = #tpu.dot_dimension_numbers<[1], [0], [0], [1], [0, 0, 1, 1], [], []>} : vector<8x8xbf16>, vector<8x128xbf16>, vector<8x128xf32> -> vector<8x128xf32>
    %46 = arith.addf %40, %45 : vector<8x128xf32>
    %c0_42 = arith.constant 0 : index
    %c0_43 = arith.constant 0 : index
    %c22 = arith.constant 22 : index
    %47 = vector.load %arg1[%c0_42, %c0_43, %c22] : memref<1x8x256xbf16, #tpu.memory_space<vmem>>, vector<1x8x128xbf16>
    %48 = vector.shape_cast %47 : vector<1x8x128xbf16> to vector<8x128xbf16>
    %c8 = arith.constant 8 : index
    %c0_44 = arith.constant 0 : index
    %c0_45 = arith.constant 0 : index
    %49 = vector.load %arg2[%c8, %c0_44, %c0_45] : memref<9x8x8xbf16, #tpu.memory_space<vmem>>, vector<1x8x8xbf16>
    %50 = vector.shape_cast %49 : vector<1x8x8xbf16> to vector<8x8xbf16>
    %cst_46 = arith.constant dense<0.000000e+00> : vector<8x128xf32>
    %51 = tpu.matmul %50, %48, %cst_46 {dimension_numbers = #tpu.dot_dimension_numbers<[1], [0], [0], [1], [0, 0, 1, 1], [], []>} : vector<8x8xbf16>, vector<8x128xbf16>, vector<8x128xf32> -> vector<8x128xf32>
    %52 = arith.addf %46, %51 : vector<8x128xf32>
    %c0_47 = arith.constant 0 : index
    %c0_48 = arith.constant 0 : index
    %53 = vector.load %arg3[%c0_47, %c0_48] : memref<8x1xf32, #tpu.memory_space<vmem>>, vector<8x1xf32>
    %54 = vector.broadcast %53 : vector<8x1xf32> to vector<8x128xf32>
    %55 = arith.addf %52, %54 : vector<8x128xf32>
    %c0_49 = arith.constant 0 : index
    %c0_50 = arith.constant 0 : index
    %56 = vector.load %arg5[%c0_49, %c0_50] : memref<8x4xbf16, #tpu.memory_space<vmem>>, vector<8x4xbf16>
    %c0_51 = arith.constant 0 : index
    %c0_52 = arith.constant 0 : index
    %c0_53 = arith.constant 0 : index
    %57 = vector.load %arg4[%c0_51, %c0_52, %c0_53] : memref<1x4x128xbf16, #tpu.memory_space<vmem>>, vector<1x4x128xbf16>
    %58 = vector.shape_cast %57 : vector<1x4x128xbf16> to vector<4x128xbf16>
    %cst_54 = arith.constant dense<0.000000e+00> : vector<8x128xf32>
    %59 = tpu.matmul %56, %58, %cst_54 {dimension_numbers = #tpu.dot_dimension_numbers<[1], [0], [0], [1], [0, 0, 1, 1], [], []>} : vector<8x4xbf16>, vector<4x128xbf16>, vector<8x128xf32> -> vector<8x128xf32>
    %60 = arith.addf %55, %59 : vector<8x128xf32>
    %cst_55 = arith.constant 0.000000e+00 : f32
    %61 = vector.broadcast %cst_55 : f32 to vector<8x128xf32>
    %62 = arith.maximumf %60, %61 : vector<8x128xf32>
    %c0_56 = arith.constant 0 : index
    %c0_57 = arith.constant 0 : index
    %c0_58 = arith.constant 0 : index
    %63 = vector.load %arg6[%c0_56, %c0_57, %c0_58] : memref<1x8x128xf32, #tpu.memory_space<vmem>>, vector<1x8x128xf32>
    %64 = vector.shape_cast %63 : vector<1x8x128xf32> to vector<8x128xf32>
    %65 = vector.shape_cast %62 : vector<8x128xf32> to vector<1x8x128xf32>
    tpu.vector_store %arg6[%c0_56, %c0_57, %c0_58], %65 {strides = array<i32>} : memref<1x8x128xf32, #tpu.memory_space<vmem>>, vector<1x8x128xf32>,
    return
  }
  func.func @transform_0(%arg0: i32) -> (i32, i32, i32) {
    %c0_i32 = arith.constant 0 : i32
    %c0_i32_0 = arith.constant 0 : i32
    %c0_i32_1 = arith.constant 0 : i32
    return %arg0, %c0_i32, %c0_i32_0 : i32, i32, i32
  }
  func.func @transform_1(%arg0: i32) -> (i32, i32, i32) {
    %c0_i32 = arith.constant 0 : i32
    %c0_i32_0 = arith.constant 0 : i32
    %c0_i32_1 = arith.constant 0 : i32
    %c0_i32_2 = arith.constant 0 : i32
    return %c0_i32, %c0_i32_0, %c0_i32_1 : i32, i32, i32
  }
  func.func @transform_2(%arg0: i32) -> (i32, i32) {
    %c0_i32 = arith.constant 0 : i32
    %c0_i32_0 = arith.constant 0 : i32
    %c0_i32_1 = arith.constant 0 : i32
    return %c0_i32, %c0_i32_0 : i32, i32
  }
  func.func @transform_3(%arg0: i32) -> (i32, i32, i32) {
    %c0_i32 = arith.constant 0 : i32
    %c0_i32_0 = arith.constant 0 : i32
    %c0_i32_1 = arith.constant 0 : i32
    return %arg0, %c0_i32, %c0_i32_0 : i32, i32, i32
  }
  func.func @transform_4(%arg0: i32) -> (i32, i32) {
    %c0_i32 = arith.constant 0 : i32
    %c0_i32_0 = arith.constant 0 : i32
    %c0_i32_1 = arith.constant 0 : i32
    return %c0_i32, %c0_i32_0 : i32, i32
  }
  func.func @transform_5(%arg0: i32) -> (i32, i32, i32) {
    %c0_i32 = arith.constant 0 : i32
    %c0_i32_0 = arith.constant 0 : i32
    %c0_i32_1 = arith.constant 0 : i32
    return %arg0, %c0_i32, %c0_i32_0 : i32, i32, i32
  }
}

module attributes {stable_mosaic.version = 11 : i64} {
  func.func @_conv_fused_kernel(%arg0: i32, %arg1: memref<1x8x256xbf16, #tpu.memory_space<vmem>>, %arg2: memref<9x8x8xbf16, #tpu.memory_space<vmem>>, %arg3: memref<8x1xf32, #tpu.memory_space<vmem>>, %arg4: memref<1x8x128xbf16, #tpu.memory_space<vmem>>) attributes {dimension_semantics = [#tpu.dimension_semantics<parallel>], iteration_bounds = array<i64: 2>, scalar_prefetch = 0 : i64, scratch_operands = 0 : i64, tpu.core_type = #tpu.core_type<tc>, window_params = [{transform_indices = @transform_0, window_bounds = array<i64: 1, 8, 256>}, {pipeline_mode = #tpu.pipeline_mode<synchronous>, transform_indices = @transform_1, window_bounds = array<i64: 9, 8, 8>}, {pipeline_mode = #tpu.pipeline_mode<synchronous>, transform_indices = @transform_2, window_bounds = array<i64: 8, 1>}, {transform_indices = @transform_3, window_bounds = array<i64: 1, 8, 128>}]} {
    %c0 = arith.constant 0 : index
    %c0_0 = arith.constant 0 : index
    %c0_1 = arith.constant 0 : index
    %0 = vector.load %arg1[%c0, %c0_0, %c0_1] : memref<1x8x256xbf16, #tpu.memory_space<vmem>>, vector<1x8x128xbf16>
    %1 = vector.shape_cast %0 : vector<1x8x128xbf16> to vector<8x128xbf16>
    %c0_2 = arith.constant 0 : index
    %c0_3 = arith.constant 0 : index
    %c0_4 = arith.constant 0 : index
    %2 = vector.load %arg2[%c0_2, %c0_3, %c0_4] : memref<9x8x8xbf16, #tpu.memory_space<vmem>>, vector<1x8x8xbf16>
    %3 = vector.shape_cast %2 : vector<1x8x8xbf16> to vector<8x8xbf16>
    %cst = arith.constant dense<0.000000e+00> : vector<8x128xf32>
    %4 = tpu.matmul %3, %1, %cst {dimension_numbers = #tpu.dot_dimension_numbers<[1], [0], [0], [1], [0, 0, 1, 1], [], []>} : vector<8x8xbf16>, vector<8x128xbf16>, vector<8x128xf32> -> vector<8x128xf32>
    %c0_5 = arith.constant 0 : index
    %c0_6 = arith.constant 0 : index
    %c1 = arith.constant 1 : index
    %5 = vector.load %arg1[%c0_5, %c0_6, %c1] : memref<1x8x256xbf16, #tpu.memory_space<vmem>>, vector<1x8x128xbf16>
    %6 = vector.shape_cast %5 : vector<1x8x128xbf16> to vector<8x128xbf16>
    %c1_7 = arith.constant 1 : index
    %c0_8 = arith.constant 0 : index
    %c0_9 = arith.constant 0 : index
    %7 = vector.load %arg2[%c1_7, %c0_8, %c0_9] : memref<9x8x8xbf16, #tpu.memory_space<vmem>>, vector<1x8x8xbf16>
    %8 = vector.shape_cast %7 : vector<1x8x8xbf16> to vector<8x8xbf16>
    %cst_10 = arith.constant dense<0.000000e+00> : vector<8x128xf32>
    %9 = tpu.matmul %8, %6, %cst_10 {dimension_numbers = #tpu.dot_dimension_numbers<[1], [0], [0], [1], [0, 0, 1, 1], [], []>} : vector<8x8xbf16>, vector<8x128xbf16>, vector<8x128xf32> -> vector<8x128xf32>
    %10 = arith.addf %4, %9 : vector<8x128xf32>
    %c0_11 = arith.constant 0 : index
    %c0_12 = arith.constant 0 : index
    %c2 = arith.constant 2 : index
    %11 = vector.load %arg1[%c0_11, %c0_12, %c2] : memref<1x8x256xbf16, #tpu.memory_space<vmem>>, vector<1x8x128xbf16>
    %12 = vector.shape_cast %11 : vector<1x8x128xbf16> to vector<8x128xbf16>
    %c2_13 = arith.constant 2 : index
    %c0_14 = arith.constant 0 : index
    %c0_15 = arith.constant 0 : index
    %13 = vector.load %arg2[%c2_13, %c0_14, %c0_15] : memref<9x8x8xbf16, #tpu.memory_space<vmem>>, vector<1x8x8xbf16>
    %14 = vector.shape_cast %13 : vector<1x8x8xbf16> to vector<8x8xbf16>
    %cst_16 = arith.constant dense<0.000000e+00> : vector<8x128xf32>
    %15 = tpu.matmul %14, %12, %cst_16 {dimension_numbers = #tpu.dot_dimension_numbers<[1], [0], [0], [1], [0, 0, 1, 1], [], []>} : vector<8x8xbf16>, vector<8x128xbf16>, vector<8x128xf32> -> vector<8x128xf32>
    %16 = arith.addf %10, %15 : vector<8x128xf32>
    %c0_17 = arith.constant 0 : index
    %c0_18 = arith.constant 0 : index
    %c10 = arith.constant 10 : index
    %17 = vector.load %arg1[%c0_17, %c0_18, %c10] : memref<1x8x256xbf16, #tpu.memory_space<vmem>>, vector<1x8x128xbf16>
    %18 = vector.shape_cast %17 : vector<1x8x128xbf16> to vector<8x128xbf16>
    %c3 = arith.constant 3 : index
    %c0_19 = arith.constant 0 : index
    %c0_20 = arith.constant 0 : index
    %19 = vector.load %arg2[%c3, %c0_19, %c0_20] : memref<9x8x8xbf16, #tpu.memory_space<vmem>>, vector<1x8x8xbf16>
    %20 = vector.shape_cast %19 : vector<1x8x8xbf16> to vector<8x8xbf16>
    %cst_21 = arith.constant dense<0.000000e+00> : vector<8x128xf32>
    %21 = tpu.matmul %20, %18, %cst_21 {dimension_numbers = #tpu.dot_dimension_numbers<[1], [0], [0], [1], [0, 0, 1, 1], [], []>} : vector<8x8xbf16>, vector<8x128xbf16>, vector<8x128xf32> -> vector<8x128xf32>
    %22 = arith.addf %16, %21 : vector<8x128xf32>
    %c0_22 = arith.constant 0 : index
    %c0_23 = arith.constant 0 : index
    %c11 = arith.constant 11 : index
    %23 = vector.load %arg1[%c0_22, %c0_23, %c11] : memref<1x8x256xbf16, #tpu.memory_space<vmem>>, vector<1x8x128xbf16>
    %24 = vector.shape_cast %23 : vector<1x8x128xbf16> to vector<8x128xbf16>
    %c4 = arith.constant 4 : index
    %c0_24 = arith.constant 0 : index
    %c0_25 = arith.constant 0 : index
    %25 = vector.load %arg2[%c4, %c0_24, %c0_25] : memref<9x8x8xbf16, #tpu.memory_space<vmem>>, vector<1x8x8xbf16>
    %26 = vector.shape_cast %25 : vector<1x8x8xbf16> to vector<8x8xbf16>
    %cst_26 = arith.constant dense<0.000000e+00> : vector<8x128xf32>
    %27 = tpu.matmul %26, %24, %cst_26 {dimension_numbers = #tpu.dot_dimension_numbers<[1], [0], [0], [1], [0, 0, 1, 1], [], []>} : vector<8x8xbf16>, vector<8x128xbf16>, vector<8x128xf32> -> vector<8x128xf32>
    %28 = arith.addf %22, %27 : vector<8x128xf32>
    %c0_27 = arith.constant 0 : index
    %c0_28 = arith.constant 0 : index
    %c12 = arith.constant 12 : index
    %29 = vector.load %arg1[%c0_27, %c0_28, %c12] : memref<1x8x256xbf16, #tpu.memory_space<vmem>>, vector<1x8x128xbf16>
    %30 = vector.shape_cast %29 : vector<1x8x128xbf16> to vector<8x128xbf16>
    %c5 = arith.constant 5 : index
    %c0_29 = arith.constant 0 : index
    %c0_30 = arith.constant 0 : index
    %31 = vector.load %arg2[%c5, %c0_29, %c0_30] : memref<9x8x8xbf16, #tpu.memory_space<vmem>>, vector<1x8x8xbf16>
    %32 = vector.shape_cast %31 : vector<1x8x8xbf16> to vector<8x8xbf16>
    %cst_31 = arith.constant dense<0.000000e+00> : vector<8x128xf32>
    %33 = tpu.matmul %32, %30, %cst_31 {dimension_numbers = #tpu.dot_dimension_numbers<[1], [0], [0], [1], [0, 0, 1, 1], [], []>} : vector<8x8xbf16>, vector<8x128xbf16>, vector<8x128xf32> -> vector<8x128xf32>
    %34 = arith.addf %28, %33 : vector<8x128xf32>
    %c0_32 = arith.constant 0 : index
    %c0_33 = arith.constant 0 : index
    %c20 = arith.constant 20 : index
    %35 = vector.load %arg1[%c0_32, %c0_33, %c20] : memref<1x8x256xbf16, #tpu.memory_space<vmem>>, vector<1x8x128xbf16>
    %36 = vector.shape_cast %35 : vector<1x8x128xbf16> to vector<8x128xbf16>
    %c6 = arith.constant 6 : index
    %c0_34 = arith.constant 0 : index
    %c0_35 = arith.constant 0 : index
    %37 = vector.load %arg2[%c6, %c0_34, %c0_35] : memref<9x8x8xbf16, #tpu.memory_space<vmem>>, vector<1x8x8xbf16>
    %38 = vector.shape_cast %37 : vector<1x8x8xbf16> to vector<8x8xbf16>
    %cst_36 = arith.constant dense<0.000000e+00> : vector<8x128xf32>
    %39 = tpu.matmul %38, %36, %cst_36 {dimension_numbers = #tpu.dot_dimension_numbers<[1], [0], [0], [1], [0, 0, 1, 1], [], []>} : vector<8x8xbf16>, vector<8x128xbf16>, vector<8x128xf32> -> vector<8x128xf32>
    %40 = arith.addf %34, %39 : vector<8x128xf32>
    %c0_37 = arith.constant 0 : index
    %c0_38 = arith.constant 0 : index
    %c21 = arith.constant 21 : index
    %41 = vector.load %arg1[%c0_37, %c0_38, %c21] : memref<1x8x256xbf16, #tpu.memory_space<vmem>>, vector<1x8x128xbf16>
    %42 = vector.shape_cast %41 : vector<1x8x128xbf16> to vector<8x128xbf16>
    %c7 = arith.constant 7 : index
    %c0_39 = arith.constant 0 : index
    %c0_40 = arith.constant 0 : index
    %43 = vector.load %arg2[%c7, %c0_39, %c0_40] : memref<9x8x8xbf16, #tpu.memory_space<vmem>>, vector<1x8x8xbf16>
    %44 = vector.shape_cast %43 : vector<1x8x8xbf16> to vector<8x8xbf16>
    %cst_41 = arith.constant dense<0.000000e+00> : vector<8x128xf32>
    %45 = tpu.matmul %44, %42, %cst_41 {dimension_numbers = #tpu.dot_dimension_numbers<[1], [0], [0], [1], [0, 0, 1, 1], [], []>} : vector<8x8xbf16>, vector<8x128xbf16>, vector<8x128xf32> -> vector<8x128xf32>
    %46 = arith.addf %40, %45 : vector<8x128xf32>
    %c0_42 = arith.constant 0 : index
    %c0_43 = arith.constant 0 : index
    %c22 = arith.constant 22 : index
    %47 = vector.load %arg1[%c0_42, %c0_43, %c22] : memref<1x8x256xbf16, #tpu.memory_space<vmem>>, vector<1x8x128xbf16>
    %48 = vector.shape_cast %47 : vector<1x8x128xbf16> to vector<8x128xbf16>
    %c8 = arith.constant 8 : index
    %c0_44 = arith.constant 0 : index
    %c0_45 = arith.constant 0 : index
    %49 = vector.load %arg2[%c8, %c0_44, %c0_45] : memref<9x8x8xbf16, #tpu.memory_space<vmem>>, vector<1x8x8xbf16>
    %50 = vector.shape_cast %49 : vector<1x8x8xbf16> to vector<8x8xbf16>
    %cst_46 = arith.constant dense<0.000000e+00> : vector<8x128xf32>
    %51 = tpu.matmul %50, %48, %cst_46 {dimension_numbers = #tpu.dot_dimension_numbers<[1], [0], [0], [1], [0, 0, 1, 1], [], []>} : vector<8x8xbf16>, vector<8x128xbf16>, vector<8x128xf32> -> vector<8x128xf32>
    %52 = arith.addf %46, %51 : vector<8x128xf32>
    %c0_47 = arith.constant 0 : index
    %c0_48 = arith.constant 0 : index
    %53 = vector.load %arg3[%c0_47, %c0_48] : memref<8x1xf32, #tpu.memory_space<vmem>>, vector<8x1xf32>
    %54 = vector.broadcast %53 : vector<8x1xf32> to vector<8x128xf32>
    %55 = arith.addf %52, %54 : vector<8x128xf32>
    %cst_49 = arith.constant 0.000000e+00 : f32
    %56 = vector.broadcast %cst_49 : f32 to vector<8x128xf32>
    %57 = arith.maximumf %55, %56 : vector<8x128xf32>
    %58 = arith.truncf %57 : vector<8x128xf32> to vector<8x128xbf16>
    %c0_50 = arith.constant 0 : index
    %c0_51 = arith.constant 0 : index
    %c0_52 = arith.constant 0 : index
    %59 = vector.load %arg4[%c0_50, %c0_51, %c0_52] : memref<1x8x128xbf16, #tpu.memory_space<vmem>>, vector<1x8x128xbf16>
    %60 = vector.shape_cast %59 : vector<1x8x128xbf16> to vector<8x128xbf16>
    %61 = vector.shape_cast %58 : vector<8x128xbf16> to vector<1x8x128xbf16>
    tpu.vector_store %arg4[%c0_50, %c0_51, %c0_52], %61 {strides = array<i32>} : memref<1x8x128xbf16, #tpu.memory_space<vmem>>, vector<1x8x128xbf16>,
    return
  }
  func.func @transform_0(%arg0: i32) -> (i32, i32, i32) {
    %c0_i32 = arith.constant 0 : i32
    %c0_i32_0 = arith.constant 0 : i32
    %c0_i32_1 = arith.constant 0 : i32
    return %arg0, %c0_i32, %c0_i32_0 : i32, i32, i32
  }
  func.func @transform_1(%arg0: i32) -> (i32, i32, i32) {
    %c0_i32 = arith.constant 0 : i32
    %c0_i32_0 = arith.constant 0 : i32
    %c0_i32_1 = arith.constant 0 : i32
    %c0_i32_2 = arith.constant 0 : i32
    return %c0_i32, %c0_i32_0, %c0_i32_1 : i32, i32, i32
  }
  func.func @transform_2(%arg0: i32) -> (i32, i32) {
    %c0_i32 = arith.constant 0 : i32
    %c0_i32_0 = arith.constant 0 : i32
    %c0_i32_1 = arith.constant 0 : i32
    return %c0_i32, %c0_i32_0 : i32, i32
  }
  func.func @transform_3(%arg0: i32) -> (i32, i32, i32) {
    %c0_i32 = arith.constant 0 : i32
    %c0_i32_0 = arith.constant 0 : i32
    %c0_i32_1 = arith.constant 0 : i32
    return %arg0, %c0_i32, %c0_i32_0 : i32, i32, i32
  }
}

module attributes {stable_mosaic.version = 11 : i64} {
  func.func @_conv_fused_kernel(%arg0: i32, %arg1: memref<1x8x256xbf16, #tpu.memory_space<vmem>>, %arg2: memref<9x8x8xbf16, #tpu.memory_space<vmem>>, %arg3: memref<8x1xf32, #tpu.memory_space<vmem>>, %arg4: memref<1x8x128xbf16, #tpu.memory_space<vmem>>, %arg5: memref<1x8x128xf32, #tpu.memory_space<vmem>>) attributes {dimension_semantics = [#tpu.dimension_semantics<parallel>], iteration_bounds = array<i64: 2>, scalar_prefetch = 0 : i64, scratch_operands = 0 : i64, tpu.core_type = #tpu.core_type<tc>, window_params = [{transform_indices = @transform_0, window_bounds = array<i64: 1, 8, 256>}, {pipeline_mode = #tpu.pipeline_mode<synchronous>, transform_indices = @transform_1, window_bounds = array<i64: 9, 8, 8>}, {pipeline_mode = #tpu.pipeline_mode<synchronous>, transform_indices = @transform_2, window_bounds = array<i64: 8, 1>}, {transform_indices = @transform_3, window_bounds = array<i64: 1, 8, 128>}, {transform_indices = @transform_4, window_bounds = array<i64: 1, 8, 128>}]} {
    %c0 = arith.constant 0 : index
    %c0_0 = arith.constant 0 : index
    %c0_1 = arith.constant 0 : index
    %0 = vector.load %arg1[%c0, %c0_0, %c0_1] : memref<1x8x256xbf16, #tpu.memory_space<vmem>>, vector<1x8x128xbf16>
    %1 = vector.shape_cast %0 : vector<1x8x128xbf16> to vector<8x128xbf16>
    %c0_2 = arith.constant 0 : index
    %c0_3 = arith.constant 0 : index
    %c0_4 = arith.constant 0 : index
    %2 = vector.load %arg2[%c0_2, %c0_3, %c0_4] : memref<9x8x8xbf16, #tpu.memory_space<vmem>>, vector<1x8x8xbf16>
    %3 = vector.shape_cast %2 : vector<1x8x8xbf16> to vector<8x8xbf16>
    %cst = arith.constant dense<0.000000e+00> : vector<8x128xf32>
    %4 = tpu.matmul %3, %1, %cst {dimension_numbers = #tpu.dot_dimension_numbers<[1], [0], [0], [1], [0, 0, 1, 1], [], []>} : vector<8x8xbf16>, vector<8x128xbf16>, vector<8x128xf32> -> vector<8x128xf32>
    %c0_5 = arith.constant 0 : index
    %c0_6 = arith.constant 0 : index
    %c1 = arith.constant 1 : index
    %5 = vector.load %arg1[%c0_5, %c0_6, %c1] : memref<1x8x256xbf16, #tpu.memory_space<vmem>>, vector<1x8x128xbf16>
    %6 = vector.shape_cast %5 : vector<1x8x128xbf16> to vector<8x128xbf16>
    %c1_7 = arith.constant 1 : index
    %c0_8 = arith.constant 0 : index
    %c0_9 = arith.constant 0 : index
    %7 = vector.load %arg2[%c1_7, %c0_8, %c0_9] : memref<9x8x8xbf16, #tpu.memory_space<vmem>>, vector<1x8x8xbf16>
    %8 = vector.shape_cast %7 : vector<1x8x8xbf16> to vector<8x8xbf16>
    %cst_10 = arith.constant dense<0.000000e+00> : vector<8x128xf32>
    %9 = tpu.matmul %8, %6, %cst_10 {dimension_numbers = #tpu.dot_dimension_numbers<[1], [0], [0], [1], [0, 0, 1, 1], [], []>} : vector<8x8xbf16>, vector<8x128xbf16>, vector<8x128xf32> -> vector<8x128xf32>
    %10 = arith.addf %4, %9 : vector<8x128xf32>
    %c0_11 = arith.constant 0 : index
    %c0_12 = arith.constant 0 : index
    %c2 = arith.constant 2 : index
    %11 = vector.load %arg1[%c0_11, %c0_12, %c2] : memref<1x8x256xbf16, #tpu.memory_space<vmem>>, vector<1x8x128xbf16>
    %12 = vector.shape_cast %11 : vector<1x8x128xbf16> to vector<8x128xbf16>
    %c2_13 = arith.constant 2 : index
    %c0_14 = arith.constant 0 : index
    %c0_15 = arith.constant 0 : index
    %13 = vector.load %arg2[%c2_13, %c0_14, %c0_15] : memref<9x8x8xbf16, #tpu.memory_space<vmem>>, vector<1x8x8xbf16>
    %14 = vector.shape_cast %13 : vector<1x8x8xbf16> to vector<8x8xbf16>
    %cst_16 = arith.constant dense<0.000000e+00> : vector<8x128xf32>
    %15 = tpu.matmul %14, %12, %cst_16 {dimension_numbers = #tpu.dot_dimension_numbers<[1], [0], [0], [1], [0, 0, 1, 1], [], []>} : vector<8x8xbf16>, vector<8x128xbf16>, vector<8x128xf32> -> vector<8x128xf32>
    %16 = arith.addf %10, %15 : vector<8x128xf32>
    %c0_17 = arith.constant 0 : index
    %c0_18 = arith.constant 0 : index
    %c10 = arith.constant 10 : index
    %17 = vector.load %arg1[%c0_17, %c0_18, %c10] : memref<1x8x256xbf16, #tpu.memory_space<vmem>>, vector<1x8x128xbf16>
    %18 = vector.shape_cast %17 : vector<1x8x128xbf16> to vector<8x128xbf16>
    %c3 = arith.constant 3 : index
    %c0_19 = arith.constant 0 : index
    %c0_20 = arith.constant 0 : index
    %19 = vector.load %arg2[%c3, %c0_19, %c0_20] : memref<9x8x8xbf16, #tpu.memory_space<vmem>>, vector<1x8x8xbf16>
    %20 = vector.shape_cast %19 : vector<1x8x8xbf16> to vector<8x8xbf16>
    %cst_21 = arith.constant dense<0.000000e+00> : vector<8x128xf32>
    %21 = tpu.matmul %20, %18, %cst_21 {dimension_numbers = #tpu.dot_dimension_numbers<[1], [0], [0], [1], [0, 0, 1, 1], [], []>} : vector<8x8xbf16>, vector<8x128xbf16>, vector<8x128xf32> -> vector<8x128xf32>
    %22 = arith.addf %16, %21 : vector<8x128xf32>
    %c0_22 = arith.constant 0 : index
    %c0_23 = arith.constant 0 : index
    %c11 = arith.constant 11 : index
    %23 = vector.load %arg1[%c0_22, %c0_23, %c11] : memref<1x8x256xbf16, #tpu.memory_space<vmem>>, vector<1x8x128xbf16>
    %24 = vector.shape_cast %23 : vector<1x8x128xbf16> to vector<8x128xbf16>
    %c4 = arith.constant 4 : index
    %c0_24 = arith.constant 0 : index
    %c0_25 = arith.constant 0 : index
    %25 = vector.load %arg2[%c4, %c0_24, %c0_25] : memref<9x8x8xbf16, #tpu.memory_space<vmem>>, vector<1x8x8xbf16>
    %26 = vector.shape_cast %25 : vector<1x8x8xbf16> to vector<8x8xbf16>
    %cst_26 = arith.constant dense<0.000000e+00> : vector<8x128xf32>
    %27 = tpu.matmul %26, %24, %cst_26 {dimension_numbers = #tpu.dot_dimension_numbers<[1], [0], [0], [1], [0, 0, 1, 1], [], []>} : vector<8x8xbf16>, vector<8x128xbf16>, vector<8x128xf32> -> vector<8x128xf32>
    %28 = arith.addf %22, %27 : vector<8x128xf32>
    %c0_27 = arith.constant 0 : index
    %c0_28 = arith.constant 0 : index
    %c12 = arith.constant 12 : index
    %29 = vector.load %arg1[%c0_27, %c0_28, %c12] : memref<1x8x256xbf16, #tpu.memory_space<vmem>>, vector<1x8x128xbf16>
    %30 = vector.shape_cast %29 : vector<1x8x128xbf16> to vector<8x128xbf16>
    %c5 = arith.constant 5 : index
    %c0_29 = arith.constant 0 : index
    %c0_30 = arith.constant 0 : index
    %31 = vector.load %arg2[%c5, %c0_29, %c0_30] : memref<9x8x8xbf16, #tpu.memory_space<vmem>>, vector<1x8x8xbf16>
    %32 = vector.shape_cast %31 : vector<1x8x8xbf16> to vector<8x8xbf16>
    %cst_31 = arith.constant dense<0.000000e+00> : vector<8x128xf32>
    %33 = tpu.matmul %32, %30, %cst_31 {dimension_numbers = #tpu.dot_dimension_numbers<[1], [0], [0], [1], [0, 0, 1, 1], [], []>} : vector<8x8xbf16>, vector<8x128xbf16>, vector<8x128xf32> -> vector<8x128xf32>
    %34 = arith.addf %28, %33 : vector<8x128xf32>
    %c0_32 = arith.constant 0 : index
    %c0_33 = arith.constant 0 : index
    %c20 = arith.constant 20 : index
    %35 = vector.load %arg1[%c0_32, %c0_33, %c20] : memref<1x8x256xbf16, #tpu.memory_space<vmem>>, vector<1x8x128xbf16>
    %36 = vector.shape_cast %35 : vector<1x8x128xbf16> to vector<8x128xbf16>
    %c6 = arith.constant 6 : index
    %c0_34 = arith.constant 0 : index
    %c0_35 = arith.constant 0 : index
    %37 = vector.load %arg2[%c6, %c0_34, %c0_35] : memref<9x8x8xbf16, #tpu.memory_space<vmem>>, vector<1x8x8xbf16>
    %38 = vector.shape_cast %37 : vector<1x8x8xbf16> to vector<8x8xbf16>
    %cst_36 = arith.constant dense<0.000000e+00> : vector<8x128xf32>
    %39 = tpu.matmul %38, %36, %cst_36 {dimension_numbers = #tpu.dot_dimension_numbers<[1], [0], [0], [1], [0, 0, 1, 1], [], []>} : vector<8x8xbf16>, vector<8x128xbf16>, vector<8x128xf32> -> vector<8x128xf32>
    %40 = arith.addf %34, %39 : vector<8x128xf32>
    %c0_37 = arith.constant 0 : index
    %c0_38 = arith.constant 0 : index
    %c21 = arith.constant 21 : index
    %41 = vector.load %arg1[%c0_37, %c0_38, %c21] : memref<1x8x256xbf16, #tpu.memory_space<vmem>>, vector<1x8x128xbf16>
    %42 = vector.shape_cast %41 : vector<1x8x128xbf16> to vector<8x128xbf16>
    %c7 = arith.constant 7 : index
    %c0_39 = arith.constant 0 : index
    %c0_40 = arith.constant 0 : index
    %43 = vector.load %arg2[%c7, %c0_39, %c0_40] : memref<9x8x8xbf16, #tpu.memory_space<vmem>>, vector<1x8x8xbf16>
    %44 = vector.shape_cast %43 : vector<1x8x8xbf16> to vector<8x8xbf16>
    %cst_41 = arith.constant dense<0.000000e+00> : vector<8x128xf32>
    %45 = tpu.matmul %44, %42, %cst_41 {dimension_numbers = #tpu.dot_dimension_numbers<[1], [0], [0], [1], [0, 0, 1, 1], [], []>} : vector<8x8xbf16>, vector<8x128xbf16>, vector<8x128xf32> -> vector<8x128xf32>
    %46 = arith.addf %40, %45 : vector<8x128xf32>
    %c0_42 = arith.constant 0 : index
    %c0_43 = arith.constant 0 : index
    %c22 = arith.constant 22 : index
    %47 = vector.load %arg1[%c0_42, %c0_43, %c22] : memref<1x8x256xbf16, #tpu.memory_space<vmem>>, vector<1x8x128xbf16>
    %48 = vector.shape_cast %47 : vector<1x8x128xbf16> to vector<8x128xbf16>
    %c8 = arith.constant 8 : index
    %c0_44 = arith.constant 0 : index
    %c0_45 = arith.constant 0 : index
    %49 = vector.load %arg2[%c8, %c0_44, %c0_45] : memref<9x8x8xbf16, #tpu.memory_space<vmem>>, vector<1x8x8xbf16>
    %50 = vector.shape_cast %49 : vector<1x8x8xbf16> to vector<8x8xbf16>
    %cst_46 = arith.constant dense<0.000000e+00> : vector<8x128xf32>
    %51 = tpu.matmul %50, %48, %cst_46 {dimension_numbers = #tpu.dot_dimension_numbers<[1], [0], [0], [1], [0, 0, 1, 1], [], []>} : vector<8x8xbf16>, vector<8x128xbf16>, vector<8x128xf32> -> vector<8x128xf32>
    %52 = arith.addf %46, %51 : vector<8x128xf32>
    %c0_47 = arith.constant 0 : index
    %c0_48 = arith.constant 0 : index
    %53 = vector.load %arg3[%c0_47, %c0_48] : memref<8x1xf32, #tpu.memory_space<vmem>>, vector<8x1xf32>
    %54 = vector.broadcast %53 : vector<8x1xf32> to vector<8x128xf32>
    %55 = arith.addf %52, %54 : vector<8x128xf32>
    %c0_49 = arith.constant 0 : index
    %c0_50 = arith.constant 0 : index
    %c0_51 = arith.constant 0 : index
    %56 = vector.load %arg4[%c0_49, %c0_50, %c0_51] : memref<1x8x128xbf16, #tpu.memory_space<vmem>>, vector<1x8x128xbf16>
    %57 = vector.shape_cast %56 : vector<1x8x128xbf16> to vector<8x128xbf16>
    %58 = arith.extf %57 : vector<8x128xbf16> to vector<8x128xf32>
    %59 = arith.addf %55, %58 : vector<8x128xf32>
    %cst_52 = arith.constant 0.000000e+00 : f32
    %60 = vector.broadcast %cst_52 : f32 to vector<8x128xf32>
    %61 = arith.maximumf %59, %60 : vector<8x128xf32>
    %c0_53 = arith.constant 0 : index
    %c0_54 = arith.constant 0 : index
    %c0_55 = arith.constant 0 : index
    %62 = vector.load %arg5[%c0_53, %c0_54, %c0_55] : memref<1x8x128xf32, #tpu.memory_space<vmem>>, vector<1x8x128xf32>
    %63 = vector.shape_cast %62 : vector<1x8x128xf32> to vector<8x128xf32>
    %64 = vector.shape_cast %61 : vector<8x128xf32> to vector<1x8x128xf32>
    tpu.vector_store %arg5[%c0_53, %c0_54, %c0_55], %64 {strides = array<i32>} : memref<1x8x128xf32, #tpu.memory_space<vmem>>, vector<1x8x128xf32>,
    return
  }
  func.func @transform_0(%arg0: i32) -> (i32, i32, i32) {
    %c0_i32 = arith.constant 0 : i32
    %c0_i32_0 = arith.constant 0 : i32
    %c0_i32_1 = arith.constant 0 : i32
    return %arg0, %c0_i32, %c0_i32_0 : i32, i32, i32
  }
  func.func @transform_1(%arg0: i32) -> (i32, i32, i32) {
    %c0_i32 = arith.constant 0 : i32
    %c0_i32_0 = arith.constant 0 : i32
    %c0_i32_1 = arith.constant 0 : i32
    %c0_i32_2 = arith.constant 0 : i32
    return %c0_i32, %c0_i32_0, %c0_i32_1 : i32, i32, i32
  }
  func.func @transform_2(%arg0: i32) -> (i32, i32) {
    %c0_i32 = arith.constant 0 : i32
    %c0_i32_0 = arith.constant 0 : i32
    %c0_i32_1 = arith.constant 0 : i32
    return %c0_i32, %c0_i32_0 : i32, i32
  }
  func.func @transform_3(%arg0: i32) -> (i32, i32, i32) {
    %c0_i32 = arith.constant 0 : i32
    %c0_i32_0 = arith.constant 0 : i32
    %c0_i32_1 = arith.constant 0 : i32
    return %arg0, %c0_i32, %c0_i32_0 : i32, i32, i32
  }
  func.func @transform_4(%arg0: i32) -> (i32, i32, i32) {
    %c0_i32 = arith.constant 0 : i32
    %c0_i32_0 = arith.constant 0 : i32
    %c0_i32_1 = arith.constant 0 : i32
    return %arg0, %c0_i32, %c0_i32_0 : i32, i32, i32
  }
}

</mosaic_0001>

<llo_original>
// kernel: _lambda_.4
$region0: #{_lambda_.4}
  #allocation0 [shape = 'u32[]', space=smem, size = 0x4, offset = 0x4, fixed_abs, tag = 'smem constant byte address 0x4 - core index']
  #allocation1 [shape = 'u32[144,128]{1,0:T(1,128)}', space=vmem, size = 0x12000, scoped, tag = 'internal scratch']
  %s0 = inlined_call_operand.vmem [shape: bf16[2,36,128], index: 0, kind: input, shape index: {}]
  %s1 = inlined_call_operand.vmem [shape: bf16[1,8,36], index: 1, kind: input, shape index: {}]
  %s2 = inlined_call_operand.vmem [shape: f32[8,1], index: 2, kind: input, shape index: {}]
  %s3 = inlined_call_operand.vmem [shape: bf16[2,8,128], index: 3, kind: output, shape index: {}]
  %s4 = sld [smem:[#allocation0]]
  $region45: #{_lambda_.4} parent=0
    _
  %s6 = ssub.s32 1, %s4
  %s7 = scalar_select 0, %s6, %s4
  loop: start=0, step=1, limit=4
  $region2: #{_lambda_.4} parent=0 // loop_pre_header
    _
  $region3: #{_lambda_.4} parent=0 // loop_header
    %s9 = sphi 0, %s13
    %p10 = scmp.ge.s32.totalorder %s9, 4
    %s19 = sphi 0, %s21
    %s22 = sphi 0, %s19
    %s23 = sphi 0, %s22
    %s39 = sphi 0, %s23
    %s43 = sphi 0, %s43
    %s45 = sphi 0, %s43
    %s46 = sphi 0, %s45
    %s60 = sphi 0, %s46
    %s64 = sphi 0, %s64
    %s66 = sphi 0, %s64
    %s67 = sphi 0, %s66
    %s81 = sphi 0, %s67
    %s87 = sphi 0, %s89
    %s90 = sphi 0, %s87
    %s91 = sphi 0, %s90
    %s107 = sphi 0, %s91
  $region4: #{_lambda_.4} parent=0 // loop_header_branch
    %12 = sbr.rel (%p10) target = $region8
  $region5: #{_lambda_.4} parent=0 // loop_body
    %s14 = ssub.s32 %s9, 1
    %s15 = ssub.s32 %s9, 2
    %s16 = sadd.s32 %s9, 1
    %s17 = ssub.s32 %s9, %s16
    %p18 = scmp.eq.s32.totalorder %s17, 0
    %s20 = sadd.s32 %s19, 1
    %s21 = scalar_select %p18, %s19, %s20
    %p24 = pneg %p18
    %p25 = scmp.eq.s32.totalorder %s9, 1
    %p26 = por %p24, %p25
    %p27 = scmp.ne.s32.totalorder %s19, %s22
    %p28 = scmp.eq.s32.totalorder %s9, 0
    %p29 = por %p27, %p28
    %p30 = scmp.ne.s32.totalorder %s19, %s22
    %p31 = scmp.eq.s32.totalorder %s14, 1
    %p32 = por %p30, %p31
    %p33 = scmp.ne.s32.totalorder %s22, %s23
    %p34 = scmp.eq.s32.totalorder %s14, 0
    %p35 = por %p33, %p34
    %p36 = scmp.ne.s32.totalorder %s22, %s23
    %p37 = scmp.eq.s32.totalorder %s15, 1
    %p38 = por %p36, %p37
    %p40 = scmp.ne.s32.totalorder %s23, %s39
    %p41 = scmp.eq.s32.totalorder %s15, 0
    %p42 = por %p40, %p41
    %s44 = sadd.s32 %s43, 1
    %p47 = scmp.eq.s32.totalorder %s9, 1
    %p48 = scmp.ne.s32.totalorder %s43, %s45
    %p49 = scmp.eq.s32.totalorder %s9, 0
    %p50 = por %p48, %p49
    %p51 = scmp.ne.s32.totalorder %s43, %s45
    %p52 = scmp.eq.s32.totalorder %s14, 1
    %p53 = por %p51, %p52
    %p54 = scmp.ne.s32.totalorder %s45, %s46
    %p55 = scmp.eq.s32.totalorder %s14, 0
    %p56 = por %p54, %p55
    %p57 = scmp.ne.s32.totalorder %s45, %s46
    %p58 = scmp.eq.s32.totalorder %s15, 1
    %p59 = por %p57, %p58
    %p61 = scmp.ne.s32.totalorder %s46, %s60
    %p62 = scmp.eq.s32.totalorder %s15, 0
    %p63 = por %p61, %p62
    %s65 = sadd.s32 %s64, 1
    %p68 = scmp.eq.s32.totalorder %s9, 1
    %p69 = scmp.ne.s32.totalorder %s64, %s66
    %p70 = scmp.eq.s32.totalorder %s9, 0
    %p71 = por %p69, %p70
    %p72 = scmp.ne.s32.totalorder %s64, %s66
    %p73 = scmp.eq.s32.totalorder %s14, 1
    %p74 = por %p72, %p73
    %p75 = scmp.ne.s32.totalorder %s66, %s67
    %p76 = scmp.eq.s32.totalorder %s14, 0
    %p77 = por %p75, %p76
    %p78 = scmp.ne.s32.totalorder %s66, %s67
    %p79 = scmp.eq.s32.totalorder %s15, 1
    %p80 = por %p78, %p79
    %p82 = scmp.ne.s32.totalorder %s67, %s81
    %p83 = scmp.eq.s32.totalorder %s15, 0
    %p84 = por %p82, %p83
    %s85 = ssub.s32 %s9, %s16
    %p86 = scmp.eq.s32.totalorder %s85, 0
    %s88 = sadd.s32 %s87, 1
    %s89 = scalar_select %p86, %s87, %s88
    %p92 = pneg %p86
    %p93 = scmp.eq.s32.totalorder %s9, 1
    %p94 = por %p92, %p93
    %p95 = scmp.ne.s32.totalorder %s87, %s90
    %p96 = scmp.eq.s32.totalorder %s9, 0
    %p97 = por %p95, %p96
    %p98 = scmp.ne.s32.totalorder %s87, %s90
    %p99 = scmp.eq.s32.totalorder %s14, 1
    %p100 = por %p98, %p99
    %p101 = scmp.ne.s32.totalorder %s90, %s91
    %p102 = scmp.eq.s32.totalorder %s14, 0
    %p103 = por %p101, %p102
    %p104 = scmp.ne.s32.totalorder %s90, %s91
    %p105 = scmp.eq.s32.totalorder %s15, 1
    %p106 = por %p104, %p105
    %p108 = scmp.ne.s32.totalorder %s91, %s107
    %p109 = scmp.eq.s32.totalorder %s15, 0
    %p110 = por %p108, %p109
    %p111 = scmp.le.s32.totalorder 1, %s9
    %p112 = scmp.lt.s32.totalorder %s9, 3
    %p113 = pnand %p111, %p112
    %p114 = pneg %p113
    // Predicated region
    $region9: #{_lambda_.4} parent=5 // pred_check
      _
    $region10: #{_lambda_.4} parent=5 // pred_check_branch
      %116 = sbr.rel (%p113) target = $region12
    $region11: #{_lambda_.4} parent=5 // pred_region
      %s117 = ssub.s32 %s9, 1
      // Predicated region
      $region13: #{_lambda_.4} parent=11 // pred_check
        %p118 = pneg %p56
      $region14: #{_lambda_.4} parent=11 // pred_check_branch
        %120 = sbr.rel (%p118) target = $region16
      $region15: #{_lambda_.4} parent=11 // pred_region
        _
      $region16: #{_lambda_.4} parent=11 // pred_fallthru
        _
      // Predicated region
      $region17: #{_lambda_.4} parent=11 // pred_check
        %p121 = pneg %p77
      $region18: #{_lambda_.4} parent=11 // pred_check_branch
        %123 = sbr.rel (%p121) target = $region20
      $region19: #{_lambda_.4} parent=11 // pred_region
        _
      $region20: #{_lambda_.4} parent=11 // pred_fallthru
        _
    $region12: #{_lambda_.4} parent=5 // pred_fallthru
      _
    %p124 = scmp.lt.s32.totalorder %s9, 2
    // Predicated region
    $region21: #{_lambda_.4} parent=5 // pred_check
      %p125 = pneg %p124
    $region22: #{_lambda_.4} parent=5 // pred_check_branch
      %127 = sbr.rel (%p125) target = $region24
    $region23: #{_lambda_.4} parent=5 // pred_region
      // Predicated region
      $region25: #{_lambda_.4} parent=23 // pred_check
        %p128 = pneg %p29
      $region26: #{_lambda_.4} parent=23 // pred_check_branch
        %130 = sbr.rel (%p128) target = $region28
      $region27: #{_lambda_.4} parent=23 // pred_region
        %p131 = scmp.lt.s32.totalorder %s9, 1
        %s132 = scalar_select %p131, %s9, 1
        %s133 = smul.addr %s132, 5
        %s134 = smul.addr %s133, 4
        %s135 = scalar_lea.vmem %s0, %s134
      $region28: #{_lambda_.4} parent=23 // pred_fallthru
        _
    $region24: #{_lambda_.4} parent=5 // pred_fallthru
      _
    %p136 = scmp.le.s32.totalorder 1, %s9
    %p137 = scmp.lt.s32.totalorder %s9, 3
    %p138 = pnand %p136, %p137
    %p139 = pneg %p138
    // Predicated region
    $region29: #{_lambda_.4} parent=5 // pred_check
      _
    $region30: #{_lambda_.4} parent=5 // pred_check_branch
      %141 = sbr.rel (%p138) target = $region32
    $region31: #{_lambda_.4} parent=5 // pred_region
      %s142 = ssub.s32 %s9, 1
      %p143 = scmp.lt.s32.totalorder %s14, 1
      %s144 = scalar_select %p143, %s14, 1
      %s145 = smul.addr %s144, 5
      %s146 = smul.addr %s145, 4
      %s147 = scalar_lea.vmem %s0, %s146
      %p148 = pneg %p35
      %p149 = pneg %p32
      %p150 = pneg %p56
      %p151 = pneg %p53
      %p152 = pneg %p77
      %p153 = pneg %p74
      %p154 = pneg %p103
      %p155 = pneg %p100
      %p156 = scmp.lt.s32.totalorder %s14, 1
      %s157 = scalar_select %p156, %s14, 1
      %s158 = smul.addr %s157, 4
      %s159 = scalar_lea.vmem %s3, %s158
      %p160 = scmp.lt.s32.totalorder %s14, 1
      %s161 = scalar_select %p160, %s14, 1
      %s162 = smul.addr %s161, 5
      %s163 = smul.addr %s162, 4
      %s164 = scalar_lea.vmem %s0, %s163
      %p165 = scmp.lt.s32.totalorder %s14, 1
      %s166 = scalar_select %p165, %s14, 1
      %s167 = smul.addr %s166, 4
      %s168 = scalar_lea.vmem %s3, %s167
      %v170 = vld [vmem:[%s164] sm:$0xf]
      %v171 = vld [vmem:[%s164 + $0x4] sm:$0xf]
      %v172 = vld [vmem:[%s164 + $0x8] sm:$0xf]
      %v173 = vld [vmem:[%s164 + $0xc] sm:$0xf]
      %v174 = vld [vmem:[%s164 + $0x10] sm:$0x3]
      %v175 = vld [vmem:[%s1] sm:$0xf]
      %v176 = vld [vmem:[%s2] sm:$0xff]
      %178 = vset.pattern.permute.xlu0 0
      %179 = vperm.xlu0 %178, %v176
      %v180 = vpop.permute.xlu0 %179
      %v187 = vunpack.c.l.b16 %v170
      %v188 = vunpack.c.l.b16 %v171
      %v189 = vunpack.c.l.b16 %v172
      %v190 = vunpack.c.l.b16 %v173
      %v191 = vunpack.c.l.b16 %v174
      %v192 = vpack.c.b16 %v188, %v187
      %v193 = vpack.c.b16 %v190, %v189
      %v194 = vpack.c.b16 %v191, %v191
      %vm197 = vcmask 293888
      %v199 = vsel %vm197, %v175, 0
      %vm201 = vcmask 1041408
      %v203 = vsel %vm201, %v194, 0
      %205 = vmatprep.subr.bf16.mxu0 0
      %206 = vmatpush1.bf16.msra.mxu0 %v192
      %207 = vmatprep.subr.bf16.mxu0 0
      %208 = vmatpush1.bf16.msra.mxu0 %v193
      %209 = vmatprep.subr.bf16.mxu0 0
      %210 = vmatpush1.bf16.msra.mxu0 %v203
      %211 = vmatprep.subr.bf16.mxu0 0
      %212 = vmatpush1.bf16.msra.mxu0 0
      %213 = vmatprep.subr.bf16.mxu0 0
      %214 = vmatpush1.bf16.msra.mxu0 0
      %215 = vmatprep.subr.bf16.mxu0 0
      %216 = vmatpush1.bf16.msra.mxu0 0
      %217 = vmatprep.subr.bf16.mxu0 0
      %218 = vmatpush1.bf16.msra.mxu0 0
      %219 = vmatprep.subr.bf16.mxu0 0
      %220 = vmatpush1.bf16.msra.mxu0 0
      %221 = vmatprep.subr.bf16.mxu0 0
      %222 = vmatpush1.bf16.msra.mxu0 0
      %223 = vmatprep.subr.bf16.mxu0 0
      %224 = vmatpush1.bf16.msra.mxu0 0
      %225 = vmatprep.subr.bf16.mxu0 0
      %226 = vmatpush1.bf16.msra.mxu0 0
      %227 = vmatprep.subr.bf16.mxu0 0
      %228 = vmatpush1.bf16.msra.mxu0 0
      %229 = vmatprep.subr.bf16.mxu0 0
      %230 = vmatpush1.bf16.msra.mxu0 0
      %231 = vmatprep.subr.bf16.mxu0 0
      %232 = vmatpush1.bf16.msra.mxu0 0
      %233 = vmatprep.subr.bf16.mxu0 0
      %234 = vmatpush1.bf16.msra.mxu0 0
      %235 = vmatprep.subr.bf16.mxu0 0
      %236 = vmatpush1.bf16.msra.mxu0 0
      %237 = vmatprep.mubr.bf16.mxu0 0
      %238 = vmatmul.mubr.bf16.gmra.mrb[0].mxu0 %v199
      %v239 = vpop.f32.mrb[0].mxu0
      %v240 = vadd.f32 %v180, %v239
      %v241 = vpop.f32.mrb[0].mxu0
      %v242 = vpop.f32.mrb[0].mxu0
      %v243 = vpop.f32.mrb[0].mxu0
      %244 = vdwg.mxu0
      %v245 = vmax.f32 %v240, 0.0
      %v246 = vpack.c.bf16 %v245, %v245
      %247 = vst [vmem:[%s168] sm:$0xf] %v246
      %p248 = scmp.lt.s32.totalorder %s14, 1
      %s249 = scalar_select %p248, %s14, 1
      %s250 = smul.addr %s249, 4
      %s251 = scalar_lea.vmem %s3, %s250
      // Predicated region
      $region33: #{_lambda_.4} parent=31 // pred_check
        %p252 = pneg %p100
      $region34: #{_lambda_.4} parent=31 // pred_check_branch
        %254 = sbr.rel (%p252) target = $region36
      $region35: #{_lambda_.4} parent=31 // pred_region
        _
      $region36: #{_lambda_.4} parent=31 // pred_fallthru
        _
    $region32: #{_lambda_.4} parent=5 // pred_fallthru
      _
    %p255 = scmp.le.s32.totalorder 2, %s9
    // Predicated region
    $region37: #{_lambda_.4} parent=5 // pred_check
      %p256 = pneg %p255
    $region38: #{_lambda_.4} parent=5 // pred_check_branch
      %258 = sbr.rel (%p256) target = $region40
    $region39: #{_lambda_.4} parent=5 // pred_region
      %s259 = ssub.s32 %s9, 2
      // Predicated region
      $region41: #{_lambda_.4} parent=39 // pred_check
        %p260 = pneg %p106
      $region42: #{_lambda_.4} parent=39 // pred_check_branch
        %262 = sbr.rel (%p260) target = $region44
      $region43: #{_lambda_.4} parent=39 // pred_region
        %p263 = scmp.lt.s32.totalorder %s15, 1
        %s264 = scalar_select %p263, %s15, 1
        %s265 = smul.addr %s264, 4
        %s266 = scalar_lea.vmem %s3, %s265
      $region44: #{_lambda_.4} parent=39 // pred_fallthru
        _
    $region40: #{_lambda_.4} parent=5 // pred_fallthru
      _
  $region6: #{_lambda_.4} parent=0 // loop_footer
    %s13 = sadd.s32 1, %s9
  $region7: #{_lambda_.4} parent=0 // loop_footer_branch
    %8 = sbr.rel target = $region3
  $region8: #{_lambda_.4} parent=0 // loop_exit
    _

// kernel: _lambda_.5
$region0: #{_lambda_.5}
  #allocation0 [shape = 'u32[]', space=smem, size = 0x4, offset = 0x4, fixed_abs, tag = 'smem constant byte address 0x4 - core index']
  #allocation1 [shape = 'u32[144,128]{1,0:T(1,128)}', space=vmem, size = 0x12000, scoped, tag = 'internal scratch']
  %s0 = inlined_call_operand.vmem [shape: bf16[2,8,256], index: 0, kind: input, shape index: {}]
  %s1 = inlined_call_operand.vmem [shape: bf16[9,8,8], index: 1, kind: input, shape index: {}]
  %s2 = inlined_call_operand.vmem [shape: f32[8,1], index: 2, kind: input, shape index: {}]
  %s3 = inlined_call_operand.vmem [shape: bf16[2,4,128], index: 3, kind: input, shape index: {}]
  %s4 = inlined_call_operand.vmem [shape: bf16[8,4], index: 4, kind: input, shape index: {}]
  %s5 = inlined_call_operand.vmem [shape: f32[2,8,128], index: 5, kind: output, shape index: {}]
  %s6 = sld [smem:[#allocation0]]
  $region53: #{_lambda_.5} parent=0
    _
  %s8 = ssub.s32 1, %s6
  %s9 = scalar_select 0, %s8, %s6
  loop: start=0, step=1, limit=4
  $region2: #{_lambda_.5} parent=0 // loop_pre_header
    _
  $region3: #{_lambda_.5} parent=0 // loop_header
    %s11 = sphi 0, %s15
    %p12 = scmp.ge.s32.totalorder %s11, 4
    %s21 = sphi 0, %s23
    %s24 = sphi 0, %s21
    %s25 = sphi 0, %s24
    %s41 = sphi 0, %s25
    %s45 = sphi 0, %s45
    %s47 = sphi 0, %s45
    %s48 = sphi 0, %s47
    %s62 = sphi 0, %s48
    %s66 = sphi 0, %s66
    %s68 = sphi 0, %s66
    %s69 = sphi 0, %s68
    %s83 = sphi 0, %s69
    %s89 = sphi 0, %s91
    %s92 = sphi 0, %s89
    %s93 = sphi 0, %s92
    %s109 = sphi 0, %s93
    %s113 = sphi 0, %s113
    %s115 = sphi 0, %s113
    %s116 = sphi 0, %s115
    %s130 = sphi 0, %s116
    %s136 = sphi 0, %s138
    %s139 = sphi 0, %s136
    %s140 = sphi 0, %s139
    %s156 = sphi 0, %s140
  $region4: #{_lambda_.5} parent=0 // loop_header_branch
    %14 = sbr.rel (%p12) target = $region8
  $region5: #{_lambda_.5} parent=0 // loop_body
    %s16 = ssub.s32 %s11, 1
    %s17 = ssub.s32 %s11, 2
    %s18 = sadd.s32 %s11, 1
    %s19 = ssub.s32 %s11, %s18
    %p20 = scmp.eq.s32.totalorder %s19, 0
    %s22 = sadd.s32 %s21, 1
    %s23 = scalar_select %p20, %s21, %s22
    %p26 = pneg %p20
    %p27 = scmp.eq.s32.totalorder %s11, 1
    %p28 = por %p26, %p27
    %p29 = scmp.ne.s32.totalorder %s21, %s24
    %p30 = scmp.eq.s32.totalorder %s11, 0
    %p31 = por %p29, %p30
    %p32 = scmp.ne.s32.totalorder %s21, %s24
    %p33 = scmp.eq.s32.totalorder %s16, 1
    %p34 = por %p32, %p33
    %p35 = scmp.ne.s32.totalorder %s24, %s25
    %p36 = scmp.eq.s32.totalorder %s16, 0
    %p37 = por %p35, %p36
    %p38 = scmp.ne.s32.totalorder %s24, %s25
    %p39 = scmp.eq.s32.totalorder %s17, 1
    %p40 = por %p38, %p39
    %p42 = scmp.ne.s32.totalorder %s25, %s41
    %p43 = scmp.eq.s32.totalorder %s17, 0
    %p44 = por %p42, %p43
    %s46 = sadd.s32 %s45, 1
    %p49 = scmp.eq.s32.totalorder %s11, 1
    %p50 = scmp.ne.s32.totalorder %s45, %s47
    %p51 = scmp.eq.s32.totalorder %s11, 0
    %p52 = por %p50, %p51
    %p53 = scmp.ne.s32.totalorder %s45, %s47
    %p54 = scmp.eq.s32.totalorder %s16, 1
    %p55 = por %p53, %p54
    %p56 = scmp.ne.s32.totalorder %s47, %s48
    %p57 = scmp.eq.s32.totalorder %s16, 0
    %p58 = por %p56, %p57
    %p59 = scmp.ne.s32.totalorder %s47, %s48
    %p60 = scmp.eq.s32.totalorder %s17, 1
    %p61 = por %p59, %p60
    %p63 = scmp.ne.s32.totalorder %s48, %s62
    %p64 = scmp.eq.s32.totalorder %s17, 0
    %p65 = por %p63, %p64
    %s67 = sadd.s32 %s66, 1
    %p70 = scmp.eq.s32.totalorder %s11, 1
    %p71 = scmp.ne.s32.totalorder %s66, %s68
    %p72 = scmp.eq.s32.totalorder %s11, 0
    %p73 = por %p71, %p72
    %p74 = scmp.ne.s32.totalorder %s66, %s68
    %p75 = scmp.eq.s32.totalorder %s16, 1
    %p76 = por %p74, %p75
    %p77 = scmp.ne.s32.totalorder %s68, %s69
    %p78 = scmp.eq.s32.totalorder %s16, 0
    %p79 = por %p77, %p78
    %p80 = scmp.ne.s32.totalorder %s68, %s69
    %p81 = scmp.eq.s32.totalorder %s17, 1
    %p82 = por %p80, %p81
    %p84 = scmp.ne.s32.totalorder %s69, %s83
    %p85 = scmp.eq.s32.totalorder %s17, 0
    %p86 = por %p84, %p85
    %s87 = ssub.s32 %s11, %s18
    %p88 = scmp.eq.s32.totalorder %s87, 0
    %s90 = sadd.s32 %s89, 1
    %s91 = scalar_select %p88, %s89, %s90
    %p94 = pneg %p88
    %p95 = scmp.eq.s32.totalorder %s11, 1
    %p96 = por %p94, %p95
    %p97 = scmp.ne.s32.totalorder %s89, %s92
    %p98 = scmp.eq.s32.totalorder %s11, 0
    %p99 = por %p97, %p98
    %p100 = scmp.ne.s32.totalorder %s89, %s92
    %p101 = scmp.eq.s32.totalorder %s16, 1
    %p102 = por %p100, %p101
    %p103 = scmp.ne.s32.totalorder %s92, %s93
    %p104 = scmp.eq.s32.totalorder %s16, 0
    %p105 = por %p103, %p104
    %p106 = scmp.ne.s32.totalorder %s92, %s93
    %p107 = scmp.eq.s32.totalorder %s17, 1
    %p108 = por %p106, %p107
    %p110 = scmp.ne.s32.totalorder %s93, %s109
    %p111 = scmp.eq.s32.totalorder %s17, 0
    %p112 = por %p110, %p111
    %s114 = sadd.s32 %s113, 1
    %p117 = scmp.eq.s32.totalorder %s11, 1
    %p118 = scmp.ne.s32.totalorder %s113, %s115
    %p119 = scmp.eq.s32.totalorder %s11, 0
    %p120 = por %p118, %p119
    %p121 = scmp.ne.s32.totalorder %s113, %s115
    %p122 = scmp.eq.s32.totalorder %s16, 1
    %p123 = por %p121, %p122
    %p124 = scmp.ne.s32.totalorder %s115, %s116
    %p125 = scmp.eq.s32.totalorder %s16, 0
    %p126 = por %p124, %p125
    %p127 = scmp.ne.s32.totalorder %s115, %s116
    %p128 = scmp.eq.s32.totalorder %s17, 1
    %p129 = por %p127, %p128
    %p131 = scmp.ne.s32.totalorder %s116, %s130
    %p132 = scmp.eq.s32.totalorder %s17, 0
    %p133 = por %p131, %p132
    %s134 = ssub.s32 %s11, %s18
    %p135 = scmp.eq.s32.totalorder %s134, 0
    %s137 = sadd.s32 %s136, 1
    %s138 = scalar_select %p135, %s136, %s137
    %p141 = pneg %p135
    %p142 = scmp.eq.s32.totalorder %s11, 1
    %p143 = por %p141, %p142
    %p144 = scmp.ne.s32.totalorder %s136, %s139
    %p145 = scmp.eq.s32.totalorder %s11, 0
    %p146 = por %p144, %p145
    %p147 = scmp.ne.s32.totalorder %s136, %s139
    %p148 = scmp.eq.s32.totalorder %s16, 1
    %p149 = por %p147, %p148
    %p150 = scmp.ne.s32.totalorder %s139, %s140
    %p151 = scmp.eq.s32.totalorder %s16, 0
    %p152 = por %p150, %p151
    %p153 = scmp.ne.s32.totalorder %s139, %s140
    %p154 = scmp.eq.s32.totalorder %s17, 1
    %p155 = por %p153, %p154
    %p157 = scmp.ne.s32.totalorder %s140, %s156
    %p158 = scmp.eq.s32.totalorder %s17, 0
    %p159 = por %p157, %p158
    %p160 = scmp.le.s32.totalorder 1, %s11
    %p161 = scmp.lt.s32.totalorder %s11, 3
    %p162 = pnand %p160, %p161
    %p163 = pneg %p162
    // Predicated region
    $region9: #{_lambda_.5} parent=5 // pred_check
      _
    $region10: #{_lambda_.5} parent=5 // pred_check_branch
      %165 = sbr.rel (%p162) target = $region12
    $region11: #{_lambda_.5} parent=5 // pred_region
      %s166 = ssub.s32 %s11, 1
      // Predicated region
      $region13: #{_lambda_.5} parent=11 // pred_check
        %p167 = pneg %p58
      $region14: #{_lambda_.5} parent=11 // pred_check_branch
        %169 = sbr.rel (%p167) target = $region16
      $region15: #{_lambda_.5} parent=11 // pred_region
        _
      $region16: #{_lambda_.5} parent=11 // pred_fallthru
        _
      // Predicated region
      $region17: #{_lambda_.5} parent=11 // pred_check
        %p170 = pneg %p79
      $region18: #{_lambda_.5} parent=11 // pred_check_branch
        %172 = sbr.rel (%p170) target = $region20
      $region19: #{_lambda_.5} parent=11 // pred_region
        _
      $region20: #{_lambda_.5} parent=11 // pred_fallthru
        _
      // Predicated region
      $region21: #{_lambda_.5} parent=11 // pred_check
        %p173 = pneg %p126
      $region22: #{_lambda_.5} parent=11 // pred_check_branch
        %175 = sbr.rel (%p173) target = $region24
      $region23: #{_lambda_.5} parent=11 // pred_region
        _
      $region24: #{_lambda_.5} parent=11 // pred_fallthru
        _
    $region12: #{_lambda_.5} parent=5 // pred_fallthru
      _
    %p176 = scmp.lt.s32.totalorder %s11, 2
    // Predicated region
    $region25: #{_lambda_.5} parent=5 // pred_check
      %p177 = pneg %p176
    $region26: #{_lambda_.5} parent=5 // pred_check_branch
      %179 = sbr.rel (%p177) target = $region28
    $region27: #{_lambda_.5} parent=5 // pred_region
      // Predicated region
      $region29: #{_lambda_.5} parent=27 // pred_check
        %p180 = pneg %p31
      $region30: #{_lambda_.5} parent=27 // pred_check_branch
        %182 = sbr.rel (%p180) target = $region32
      $region31: #{_lambda_.5} parent=27 // pred_region
        %p183 = scmp.lt.s32.totalorder %s11, 1
        %s184 = scalar_select %p183, %s11, 1
        %s185 = smul.addr %s184, 2
        %s186 = smul.addr %s185, 4
        %s187 = scalar_lea.vmem %s0, %s186
      $region32: #{_lambda_.5} parent=27 // pred_fallthru
        _
      // Predicated region
      $region33: #{_lambda_.5} parent=27 // pred_check
        %p188 = pneg %p99
      $region34: #{_lambda_.5} parent=27 // pred_check_branch
        %190 = sbr.rel (%p188) target = $region36
      $region35: #{_lambda_.5} parent=27 // pred_region
        %p191 = scmp.lt.s32.totalorder %s11, 1
        %s192 = scalar_select %p191, %s11, 1
        %s193 = smul.addr %s192, 2
        %s194 = scalar_lea.vmem %s3, %s193
      $region36: #{_lambda_.5} parent=27 // pred_fallthru
        _
    $region28: #{_lambda_.5} parent=5 // pred_fallthru
      _
    %p195 = scmp.le.s32.totalorder 1, %s11
    %p196 = scmp.lt.s32.totalorder %s11, 3
    %p197 = pnand %p195, %p196
    %p198 = pneg %p197
    // Predicated region
    $region37: #{_lambda_.5} parent=5 // pred_check
      _
    $region38: #{_lambda_.5} parent=5 // pred_check_branch
      %200 = sbr.rel (%p197) target = $region40
    $region39: #{_lambda_.5} parent=5 // pred_region
      %s201 = ssub.s32 %s11, 1
      %p202 = scmp.lt.s32.totalorder %s16, 1
      %s203 = scalar_select %p202, %s16, 1
      %s204 = smul.addr %s203, 2
      %s205 = smul.addr %s204, 4
      %s206 = scalar_lea.vmem %s0, %s205
      %p207 = pneg %p37
      %p208 = pneg %p34
      %p209 = pneg %p58
      %p210 = pneg %p55
      %p211 = pneg %p79
      %p212 = pneg %p76
      %p213 = scmp.lt.s32.totalorder %s16, 1
      %s214 = scalar_select %p213, %s16, 1
      %s215 = smul.addr %s214, 2
      %s216 = scalar_lea.vmem %s3, %s215
      %p217 = pneg %p105
      %p218 = pneg %p102
      %p219 = pneg %p126
      %p220 = pneg %p123
      %p221 = pneg %p152
      %p222 = pneg %p149
      %p223 = scmp.lt.s32.totalorder %s16, 1
      %s224 = scalar_select %p223, %s16, 1
      %s225 = smul.addr %s224, 8
      %s226 = scalar_lea.vmem %s5, %s225
      %p227 = scmp.lt.s32.totalorder %s16, 1
      %s228 = scalar_select %p227, %s16, 1
      %s229 = smul.addr %s228, 2
      %s230 = smul.addr %s229, 4
      %s231 = scalar_lea.vmem %s0, %s230
      %p232 = scmp.lt.s32.totalorder %s16, 1
      %s233 = scalar_select %p232, %s16, 1
      %s234 = smul.addr %s233, 2
      %s235 = scalar_lea.vmem %s3, %s234
      %p236 = scmp.lt.s32.totalorder %s16, 1
      %s237 = scalar_select %p236, %s16, 1
      %s238 = smul.addr %s237, 8
      %s239 = scalar_lea.vmem %s5, %s238
      %v241 = vld [vmem:[%s231] sm:$0xf]
      %v242 = vld [vmem:[%s1] sm:$0xf]
      %v243 = vld [vmem:[%s231] sm:$0xff]
      %s244 = scalar_lea.vmem %s1, 4
      %v245 = vld [vmem:[%s244] sm:$0xf]
      %v247 = vunpack.c.l.b16 %v243
      %v248 = vunpack.c.h.b16 %v243
      %v249 = vpack.c.b16 %v247, %v247
      %v250 = vpack.c.b16 %v248, %v248
      %251 = vrot.lane.b32.xlu0 %v249, 127
      %v252 = vpop.permute.xlu0 %251
      %253 = vrot.lane.b32.xlu0 %v250, 127
      %v254 = vpop.permute.xlu0 %253
      %vm255 = vcmask 1039360
      %v256 = vsel %vm255, %v252, %v254
      %vm257 = vcmask 64512
      %v259 = vsel %vm257, %v245, 0
      %vm261 = vcmask 1043456
      %v263 = vsel %vm261, %v256, 0
      %265 = vmatprep.subr.bf16.mxu0 0
      %266 = vmatpush1.bf16.msra.mxu0 %v263
      %267 = vmatprep.subr.bf16.mxu0 0
      %268 = vmatpush1.bf16.msra.mxu0 0
      %269 = vmatprep.subr.bf16.mxu0 0
      %270 = vmatpush1.bf16.msra.mxu0 0
      %271 = vmatprep.subr.bf16.mxu0 0
      %272 = vmatpush1.bf16.msra.mxu0 0
      %273 = vmatprep.subr.bf16.mxu0 0
      %274 = vmatpush1.bf16.msra.mxu0 0
      %275 = vmatprep.subr.bf16.mxu0 0
      %276 = vmatpush1.bf16.msra.mxu0 0
      %277 = vmatprep.subr.bf16.mxu0 0
      %278 = vmatpush1.bf16.msra.mxu0 0
      %279 = vmatprep.subr.bf16.mxu0 0
      %280 = vmatpush1.bf16.msra.mxu0 0
      %281 = vmatprep.subr.bf16.mxu0 0
      %282 = vmatpush1.bf16.msra.mxu0 0
      %283 = vmatprep.subr.bf16.mxu0 0
      %284 = vmatpush1.bf16.msra.mxu0 0
      %285 = vmatprep.subr.bf16.mxu0 0
      %286 = vmatpush1.bf16.msra.mxu0 0
      %287 = vmatprep.subr.bf16.mxu0 0
      %288 = vmatpush1.bf16.msra.mxu0 0
      %289 = vmatprep.subr.bf16.mxu0 0
      %290 = vmatpush1.bf16.msra.mxu0 0
      %291 = vmatprep.subr.bf16.mxu0 0
      %292 = vmatpush1.bf16.msra.mxu0 0
      %293 = vmatprep.subr.bf16.mxu0 0
      %294 = vmatpush1.bf16.msra.mxu0 0
      %295 = vmatprep.subr.bf16.mxu0 0
      %296 = vmatpush1.bf16.msra.mxu0 0
      %297 = vmatprep.mubr.bf16.mxu0 0
      %298 = vmatmul.mubr.bf16.gmra.mrb[0].mxu0 %v259
      %v299 = vpop.f32.mrb[0].mxu0
      %v300 = vadd.f32 0.0, %v299
      %v301 = vpop.f32.mrb[0].mxu0
      %v302 = vpop.f32.mrb[0].mxu0
      %v303 = vpop.f32.mrb[0].mxu0
      %304 = vdwg.mxu0
      %v306 = vsel %vm257, %v242, 0
      %v309 = vsel %vm261, %v241, 0
      %311 = vmatprep.subr.bf16.mxu0 0
      %312 = vmatpush1.bf16.msra.mxu0 %v309
      %313 = vmatprep.subr.bf16.mxu0 0
      %314 = vmatpush1.bf16.msra.mxu0 0
      %315 = vmatprep.subr.bf16.mxu0 0
      %316 = vmatpush1.bf16.msra.mxu0 0
      %317 = vmatprep.subr.bf16.mxu0 0
      %318 = vmatpush1.bf16.msra.mxu0 0
      %319 = vmatprep.subr.bf16.mxu0 0
      %320 = vmatpush1.bf16.msra.mxu0 0
      %321 = vmatprep.subr.bf16.mxu0 0
      %322 = vmatpush1.bf16.msra.mxu0 0
      %323 = vmatprep.subr.bf16.mxu0 0
      %324 = vmatpush1.bf16.msra.mxu0 0
      %325 = vmatprep.subr.bf16.mxu0 0
      %326 = vmatpush1.bf16.msra.mxu0 0
      %327 = vmatprep.subr.bf16.mxu0 0
      %328 = vmatpush1.bf16.msra.mxu0 0
      %329 = vmatprep.subr.bf16.mxu0 0
      %330 = vmatpush1.bf16.msra.mxu0 0
      %331 = vmatprep.subr.bf16.mxu0 0
      %332 = vmatpush1.bf16.msra.mxu0 0
      %333 = vmatprep.subr.bf16.mxu0 0
      %334 = vmatpush1.bf16.msra.mxu0 0
      %335 = vmatprep.subr.bf16.mxu0 0
      %336 = vmatpush1.bf16.msra.mxu0 0
      %337 = vmatprep.subr.bf16.mxu0 0
      %338 = vmatpush1.bf16.msra.mxu0 0
      %339 = vmatprep.subr.bf16.mxu0 0
      %340 = vmatpush1.bf16.msra.mxu0 0
      %341 = vmatprep.subr.bf16.mxu0 0
      %342 = vmatpush1.bf16.msra.mxu0 0
      %343 = vmatprep.mubr.bf16.mxu0 0
      %344 = vmatmul.mubr.bf16.gmra.mrb[0].mxu0 %v306
      %v345 = vpop.f32.mrb[0].mxu0
      %v346 = vadd.f32 %v300, %v345
      %v347 = vpop.f32.mrb[0].mxu0
      %v348 = vpop.f32.mrb[0].mxu0
      %v349 = vpop.f32.mrb[0].mxu0
      %350 = vdwg.mxu0
      %s351 = scalar_lea.vmem %s1, 8
      %v352 = vld [vmem:[%s351] sm:$0xf]
      %353 = vrot.lane.b32.xlu0 %v249, 126
      %v354 = vpop.permute.xlu0 %353
      %355 = vrot.lane.b32.xlu0 %v250, 126
      %v356 = vpop.permute.xlu0 %355
      %vm357 = vcmask 1031168
      %v358 = vsel %vm357, %v354, %v356
      %v360 = vsel %vm257, %v352, 0
      %v363 = vsel %vm261, %v358, 0
      %365 = vmatprep.subr.bf16.mxu0 0
      %366 = vmatpush1.bf16.msra.mxu0 %v363
      %367 = vmatprep.subr.bf16.mxu0 0
      %368 = vmatpush1.bf16.msra.mxu0 0
      %369 = vmatprep.subr.bf16.mxu0 0
      %370 = vmatpush1.bf16.msra.mxu0 0
      %371 = vmatprep.subr.bf16.mxu0 0
      %372 = vmatpush1.bf16.msra.mxu0 0
      %373 = vmatprep.subr.bf16.mxu0 0
      %374 = vmatpush1.bf16.msra.mxu0 0
      %375 = vmatprep.subr.bf16.mxu0 0
      %376 = vmatpush1.bf16.msra.mxu0 0
      %377 = vmatprep.subr.bf16.mxu0 0
      %378 = vmatpush1.bf16.msra.mxu0 0
      %379 = vmatprep.subr.bf16.mxu0 0
      %380 = vmatpush1.bf16.msra.mxu0 0
      %381 = vmatprep.subr.bf16.mxu0 0
      %382 = vmatpush1.bf16.msra.mxu0 0
      %383 = vmatprep.subr.bf16.mxu0 0
      %384 = vmatpush1.bf16.msra.mxu0 0
      %385 = vmatprep.subr.bf16.mxu0 0
      %386 = vmatpush1.bf16.msra.mxu0 0
      %387 = vmatprep.subr.bf16.mxu0 0
      %388 = vmatpush1.bf16.msra.mxu0 0
      %389 = vmatprep.subr.bf16.mxu0 0
      %390 = vmatpush1.bf16.msra.mxu0 0
      %391 = vmatprep.subr.bf16.mxu0 0
      %392 = vmatpush1.bf16.msra.mxu0 0
      %393 = vmatprep.subr.bf16.mxu0 0
      %394 = vmatpush1.bf16.msra.mxu0 0
      %395 = vmatprep.subr.bf16.mxu0 0
      %396 = vmatpush1.bf16.msra.mxu0 0
      %397 = vmatprep.mubr.bf16.mxu0 0
      %398 = vmatmul.mubr.bf16.gmra.mrb[0].mxu0 %v360
      %v399 = vpop.f32.mrb[0].mxu0
      %v400 = vadd.f32 0.0, %v399
      %v401 = vpop.f32.mrb[0].mxu0
      %v402 = vpop.f32.mrb[0].mxu0
      %v403 = vpop.f32.mrb[0].mxu0
      %404 = vdwg.mxu0
      %v405 = vadd.f32 %v346, %v400
      %s406 = scalar_lea.vmem %s1, 12
      %v407 = vld [vmem:[%s406] sm:$0xf]
      %408 = vrot.lane.b32.xlu0 %v249, 118
      %v409 = vpop.permute.xlu0 %408
      %410 = vrot.lane.b32.xlu0 %v250, 118
      %v411 = vpop.permute.xlu0 %410
      %vm412 = vcmask 965632
      %v413 = vsel %vm412, %v409, %v411
      %v415 = vsel %vm257, %v407, 0
      %v418 = vsel %vm261, %v413, 0
      %420 = vmatprep.subr.bf16.mxu0 0
      %421 = vmatpush1.bf16.msra.mxu0 %v418
      %422 = vmatprep.subr.bf16.mxu0 0
      %423 = vmatpush1.bf16.msra.mxu0 0
      %424 = vmatprep.subr.bf16.mxu0 0
      %425 = vmatpush1.bf16.msra.mxu0 0
      %426 = vmatprep.subr.bf16.mxu0 0
      %427 = vmatpush1.bf16.msra.mxu0 0
      %428 = vmatprep.subr.bf16.mxu0 0
      %429 = vmatpush1.bf16.msra.mxu0 0
      %430 = vmatprep.subr.bf16.mxu0 0
      %431 = vmatpush1.bf16.msra.mxu0 0
      %432 = vmatprep.subr.bf16.mxu0 0
      %433 = vmatpush1.bf16.msra.mxu0 0
      %434 = vmatprep.subr.bf16.mxu0 0
      %435 = vmatpush1.bf16.msra.mxu0 0
      %436 = vmatprep.subr.bf16.mxu0 0
      %437 = vmatpush1.bf16.msra.mxu0 0
      %438 = vmatprep.subr.bf16.mxu0 0
      %439 = vmatpush1.bf16.msra.mxu0 0
      %440 = vmatprep.subr.bf16.mxu0 0
      %441 = vmatpush1.bf16.msra.mxu0 0
      %442 = vmatprep.subr.bf16.mxu0 0
      %443 = vmatpush1.bf16.msra.mxu0 0
      %444 = vmatprep.subr.bf16.mxu0 0
      %445 = vmatpush1.bf16.msra.mxu0 0
      %446 = vmatprep.subr.bf16.mxu0 0
      %447 = vmatpush1.bf16.msra.mxu0 0
      %448 = vmatprep.subr.bf16.mxu0 0
      %449 = vmatpush1.bf16.msra.mxu0 0
      %450 = vmatprep.subr.bf16.mxu0 0
      %451 = vmatpush1.bf16.msra.mxu0 0
      %452 = vmatprep.mubr.bf16.mxu0 0
      %453 = vmatmul.mubr.bf16.gmra.mrb[0].mxu0 %v415
      %v454 = vpop.f32.mrb[0].mxu0
      %v455 = vadd.f32 0.0, %v454
      %v456 = vpop.f32.mrb[0].mxu0
      %v457 = vpop.f32.mrb[0].mxu0
      %v458 = vpop.f32.mrb[0].mxu0
      %459 = vdwg.mxu0
      %v460 = vadd.f32 %v405, %v455
      %s461 = scalar_lea.vmem %s1, 16
      %v462 = vld [vmem:[%s461] sm:$0xf]
      %463 = vrot.lane.b32.xlu0 %v249, 117
      %v464 = vpop.permute.xlu0 %463
      %465 = vrot.lane.b32.xlu0 %v250, 117
      %v466 = vpop.permute.xlu0 %465
      %vm467 = vcmask 957440
      %v468 = vsel %vm467, %v464, %v466
      %v470 = vsel %vm257, %v462, 0
      %v473 = vsel %vm261, %v468, 0
      %475 = vmatprep.subr.bf16.mxu0 0
      %476 = vmatpush1.bf16.msra.mxu0 %v473
      %477 = vmatprep.subr.bf16.mxu0 0
      %478 = vmatpush1.bf16.msra.mxu0 0
      %479 = vmatprep.subr.bf16.mxu0 0
      %480 = vmatpush1.bf16.msra.mxu0 0
      %481 = vmatprep.subr.bf16.mxu0 0
      %482 = vmatpush1.bf16.msra.mxu0 0
      %483 = vmatprep.subr.bf16.mxu0 0
      %484 = vmatpush1.bf16.msra.mxu0 0
      %485 = vmatprep.subr.bf16.mxu0 0
      %486 = vmatpush1.bf16.msra.mxu0 0
      %487 = vmatprep.subr.bf16.mxu0 0
      %488 = vmatpush1.bf16.msra.mxu0 0
      %489 = vmatprep.subr.bf16.mxu0 0
      %490 = vmatpush1.bf16.msra.mxu0 0
      %491 = vmatprep.subr.bf16.mxu0 0
      %492 = vmatpush1.bf16.msra.mxu0 0
      %493 = vmatprep.subr.bf16.mxu0 0
      %494 = vmatpush1.bf16.msra.mxu0 0
      %495 = vmatprep.subr.bf16.mxu0 0
      %496 = vmatpush1.bf16.msra.mxu0 0
      %497 = vmatprep.subr.bf16.mxu0 0
      %498 = vmatpush1.bf16.msra.mxu0 0
      %499 = vmatprep.subr.bf16.mxu0 0
      %500 = vmatpush1.bf16.msra.mxu0 0
      %501 = vmatprep.subr.bf16.mxu0 0
      %502 = vmatpush1.bf16.msra.mxu0 0
      %503 = vmatprep.subr.bf16.mxu0 0
      %504 = vmatpush1.bf16.msra.mxu0 0
      %505 = vmatprep.subr.bf16.mxu0 0
      %506 = vmatpush1.bf16.msra.mxu0 0
      %507 = vmatprep.mubr.bf16.mxu0 0
      %508 = vmatmul.mubr.bf16.gmra.mrb[0].mxu0 %v470
      %v509 = vpop.f32.mrb[0].mxu0
      %v510 = vadd.f32 0.0, %v509
      %v511 = vpop.f32.mrb[0].mxu0
      %v512 = vpop.f32.mrb[0].mxu0
      %v513 = vpop.f32.mrb[0].mxu0
      %514 = vdwg.mxu0
      %v515 = vadd.f32 %v460, %v510
      %s516 = scalar_lea.vmem %s1, 20
      %v517 = vld [vmem:[%s516] sm:$0xf]
      %518 = vrot.lane.b32.xlu0 %v249, 116
      %v519 = vpop.permute.xlu0 %518
      %520 = vrot.lane.b32.xlu0 %v250, 116
      %v521 = vpop.permute.xlu0 %520
      %vm522 = vcmask 949248
      %v523 = vsel %vm522, %v519, %v521
      %v525 = vsel %vm257, %v517, 0
      %v528 = vsel %vm261, %v523, 0
      %530 = vmatprep.subr.bf16.mxu0 0
      %531 = vmatpush1.bf16.msra.mxu0 %v528
      %532 = vmatprep.subr.bf16.mxu0 0
      %533 = vmatpush1.bf16.msra.mxu0 0
      %534 = vmatprep.subr.bf16.mxu0 0
      %535 = vmatpush1.bf16.msra.mxu0 0
      %536 = vmatprep.subr.bf16.mxu0 0
      %537 = vmatpush1.bf16.msra.mxu0 0
      %538 = vmatprep.subr.bf16.mxu0 0
      %539 = vmatpush1.bf16.msra.mxu0 0
      %540 = vmatprep.subr.bf16.mxu0 0
      %541 = vmatpush1.bf16.msra.mxu0 0
      %542 = vmatprep.subr.bf16.mxu0 0
      %543 = vmatpush1.bf16.msra.mxu0 0
      %544 = vmatprep.subr.bf16.mxu0 0
      %545 = vmatpush1.bf16.msra.mxu0 0
      %546 = vmatprep.subr.bf16.mxu0 0
      %547 = vmatpush1.bf16.msra.mxu0 0
      %548 = vmatprep.subr.bf16.mxu0 0
      %549 = vmatpush1.bf16.msra.mxu0 0
      %550 = vmatprep.subr.bf16.mxu0 0
      %551 = vmatpush1.bf16.msra.mxu0 0
      %552 = vmatprep.subr.bf16.mxu0 0
      %553 = vmatpush1.bf16.msra.mxu0 0
      %554 = vmatprep.subr.bf16.mxu0 0
      %555 = vmatpush1.bf16.msra.mxu0 0
      %556 = vmatprep.subr.bf16.mxu0 0
      %557 = vmatpush1.bf16.msra.mxu0 0
      %558 = vmatprep.subr.bf16.mxu0 0
      %559 = vmatpush1.bf16.msra.mxu0 0
      %560 = vmatprep.subr.bf16.mxu0 0
      %561 = vmatpush1.bf16.msra.mxu0 0
      %562 = vmatprep.mubr.bf16.mxu0 0
      %563 = vmatmul.mubr.bf16.gmra.mrb[0].mxu0 %v525
      %v564 = vpop.f32.mrb[0].mxu0
      %v565 = vadd.f32 0.0, %v564
      %v566 = vpop.f32.mrb[0].mxu0
      %v567 = vpop.f32.mrb[0].mxu0
      %v568 = vpop.f32.mrb[0].mxu0
      %569 = vdwg.mxu0
      %v570 = vadd.f32 %v515, %v565
      %s571 = scalar_lea.vmem %s1, 24
      %v572 = vld [vmem:[%s571] sm:$0xf]
      %573 = vrot.lane.b32.xlu0 %v249, 108
      %v574 = vpop.permute.xlu0 %573
      %575 = vrot.lane.b32.xlu0 %v250, 108
      %v576 = vpop.permute.xlu0 %575
      %vm577 = vcmask 883712
      %v578 = vsel %vm577, %v574, %v576
      %v580 = vsel %vm257, %v572, 0
      %v583 = vsel %vm261, %v578, 0
      %585 = vmatprep.subr.bf16.mxu0 0
      %586 = vmatpush1.bf16.msra.mxu0 %v583
      %587 = vmatprep.subr.bf16.mxu0 0
      %588 = vmatpush1.bf16.msra.mxu0 0
      %589 = vmatprep.subr.bf16.mxu0 0
      %590 = vmatpush1.bf16.msra.mxu0 0
      %591 = vmatprep.subr.bf16.mxu0 0
      %592 = vmatpush1.bf16.msra.mxu0 0
      %593 = vmatprep.subr.bf16.mxu0 0
      %594 = vmatpush1.bf16.msra.mxu0 0
      %595 = vmatprep.subr.bf16.mxu0 0
      %596 = vmatpush1.bf16.msra.mxu0 0
      %597 = vmatprep.subr.bf16.mxu0 0
      %598 = vmatpush1.bf16.msra.mxu0 0
      %599 = vmatprep.subr.bf16.mxu0 0
      %600 = vmatpush1.bf16.msra.mxu0 0
      %601 = vmatprep.subr.bf16.mxu0 0
      %602 = vmatpush1.bf16.msra.mxu0 0
      %603 = vmatprep.subr.bf16.mxu0 0
      %604 = vmatpush1.bf16.msra.mxu0 0
      %605 = vmatprep.subr.bf16.mxu0 0
      %606 = vmatpush1.bf16.msra.mxu0 0
      %607 = vmatprep.subr.bf16.mxu0 0
      %608 = vmatpush1.bf16.msra.mxu0 0
      %609 = vmatprep.subr.bf16.mxu0 0
      %610 = vmatpush1.bf16.msra.mxu0 0
      %611 = vmatprep.subr.bf16.mxu0 0
      %612 = vmatpush1.bf16.msra.mxu0 0
      %613 = vmatprep.subr.bf16.mxu0 0
      %614 = vmatpush1.bf16.msra.mxu0 0
      %615 = vmatprep.subr.bf16.mxu0 0
      %616 = vmatpush1.bf16.msra.mxu0 0
      %617 = vmatprep.mubr.bf16.mxu0 0
      %618 = vmatmul.mubr.bf16.gmra.mrb[0].mxu0 %v580
      %v619 = vpop.f32.mrb[0].mxu0
      %v620 = vadd.f32 0.0, %v619
      %v621 = vpop.f32.mrb[0].mxu0
      %v622 = vpop.f32.mrb[0].mxu0
      %v623 = vpop.f32.mrb[0].mxu0
      %624 = vdwg.mxu0
      %v625 = vadd.f32 %v570, %v620
      %s626 = scalar_lea.vmem %s1, 28
      %v627 = vld [vmem:[%s626] sm:$0xf]
      %628 = vrot.lane.b32.xlu0 %v249, 107
      %v629 = vpop.permute.xlu0 %628
      %630 = vrot.lane.b32.xlu0 %v250, 107
      %v631 = vpop.permute.xlu0 %630
      %vm632 = vcmask 875520
      %v633 = vsel %vm632, %v629, %v631
      %v635 = vsel %vm257, %v627, 0
      %v638 = vsel %vm261, %v633, 0
      %640 = vmatprep.subr.bf16.mxu0 0
      %641 = vmatpush1.bf16.msra.mxu0 %v638
      %642 = vmatprep.subr.bf16.mxu0 0
      %643 = vmatpush1.bf16.msra.mxu0 0
      %644 = vmatprep.subr.bf16.mxu0 0
      %645 = vmatpush1.bf16.msra.mxu0 0
      %646 = vmatprep.subr.bf16.mxu0 0
      %647 = vmatpush1.bf16.msra.mxu0 0
      %648 = vmatprep.subr.bf16.mxu0 0
      %649 = vmatpush1.bf16.msra.mxu0 0
      %650 = vmatprep.subr.bf16.mxu0 0
      %651 = vmatpush1.bf16.msra.mxu0 0
      %652 = vmatprep.subr.bf16.mxu0 0
      %653 = vmatpush1.bf16.msra.mxu0 0
      %654 = vmatprep.subr.bf16.mxu0 0
      %655 = vmatpush1.bf16.msra.mxu0 0
      %656 = vmatprep.subr.bf16.mxu0 0
      %657 = vmatpush1.bf16.msra.mxu0 0
      %658 = vmatprep.subr.bf16.mxu0 0
      %659 = vmatpush1.bf16.msra.mxu0 0
      %660 = vmatprep.subr.bf16.mxu0 0
      %661 = vmatpush1.bf16.msra.mxu0 0
      %662 = vmatprep.subr.bf16.mxu0 0
      %663 = vmatpush1.bf16.msra.mxu0 0
      %664 = vmatprep.subr.bf16.mxu0 0
      %665 = vmatpush1.bf16.msra.mxu0 0
      %666 = vmatprep.subr.bf16.mxu0 0
      %667 = vmatpush1.bf16.msra.mxu0 0
      %668 = vmatprep.subr.bf16.mxu0 0
      %669 = vmatpush1.bf16.msra.mxu0 0
      %670 = vmatprep.subr.bf16.mxu0 0
      %671 = vmatpush1.bf16.msra.mxu0 0
      %672 = vmatprep.mubr.bf16.mxu0 0
      %673 = vmatmul.mubr.bf16.gmra.mrb[0].mxu0 %v635
      %v674 = vpop.f32.mrb[0].mxu0
      %v675 = vadd.f32 0.0, %v674
      %v676 = vpop.f32.mrb[0].mxu0
      %v677 = vpop.f32.mrb[0].mxu0
      %v678 = vpop.f32.mrb[0].mxu0
      %679 = vdwg.mxu0
      %v680 = vadd.f32 %v625, %v675
      %s681 = scalar_lea.vmem %s1, 32
      %v682 = vld [vmem:[%s681] sm:$0xf]
      %683 = vrot.lane.b32.xlu0 %v249, 106
      %v684 = vpop.permute.xlu0 %683
      %685 = vrot.lane.b32.xlu0 %v250, 106
      %v686 = vpop.permute.xlu0 %685
      %vm687 = vcmask 867328
      %v688 = vsel %vm687, %v684, %v686
      %v690 = vsel %vm257, %v682, 0
      %v693 = vsel %vm261, %v688, 0
      %695 = vmatprep.subr.bf16.mxu0 0
      %696 = vmatpush1.bf16.msra.mxu0 %v693
      %697 = vmatprep.subr.bf16.mxu0 0
      %698 = vmatpush1.bf16.msra.mxu0 0
      %699 = vmatprep.subr.bf16.mxu0 0
      %700 = vmatpush1.bf16.msra.mxu0 0
      %701 = vmatprep.subr.bf16.mxu0 0
      %702 = vmatpush1.bf16.msra.mxu0 0
      %703 = vmatprep.subr.bf16.mxu0 0
      %704 = vmatpush1.bf16.msra.mxu0 0
      %705 = vmatprep.subr.bf16.mxu0 0
      %706 = vmatpush1.bf16.msra.mxu0 0
      %707 = vmatprep.subr.bf16.mxu0 0
      %708 = vmatpush1.bf16.msra.mxu0 0
      %709 = vmatprep.subr.bf16.mxu0 0
      %710 = vmatpush1.bf16.msra.mxu0 0
      %711 = vmatprep.subr.bf16.mxu0 0
      %712 = vmatpush1.bf16.msra.mxu0 0
      %713 = vmatprep.subr.bf16.mxu0 0
      %714 = vmatpush1.bf16.msra.mxu0 0
      %715 = vmatprep.subr.bf16.mxu0 0
      %716 = vmatpush1.bf16.msra.mxu0 0
      %717 = vmatprep.subr.bf16.mxu0 0
      %718 = vmatpush1.bf16.msra.mxu0 0
      %719 = vmatprep.subr.bf16.mxu0 0
      %720 = vmatpush1.bf16.msra.mxu0 0
      %721 = vmatprep.subr.bf16.mxu0 0
      %722 = vmatpush1.bf16.msra.mxu0 0
      %723 = vmatprep.subr.bf16.mxu0 0
      %724 = vmatpush1.bf16.msra.mxu0 0
      %725 = vmatprep.subr.bf16.mxu0 0
      %726 = vmatpush1.bf16.msra.mxu0 0
      %727 = vmatprep.mubr.bf16.mxu0 0
      %728 = vmatmul.mubr.bf16.gmra.mrb[0].mxu0 %v690
      %v729 = vpop.f32.mrb[0].mxu0
      %v730 = vadd.f32 0.0, %v729
      %v731 = vpop.f32.mrb[0].mxu0
      %v732 = vpop.f32.mrb[0].mxu0
      %v733 = vpop.f32.mrb[0].mxu0
      %734 = vdwg.mxu0
      %v735 = vadd.f32 %v680, %v730
      %v736 = vld [vmem:[%s2] sm:$0xff]
      %738 = vset.pattern.permute.xlu0 0
      %739 = vperm.xlu0 %738, %v736
      %v740 = vpop.permute.xlu0 %739
      %v742 = vadd.f32 %v735, %v740
      %v743 = vld [vmem:[%s4] sm:$0xf]
      %v744 = vld [vmem:[%s235] sm:$0x3]
      %vm745 = vcmask 31744
      %v747 = vsel %vm745, %v743, 0
      %vm749 = vcmask 1041408
      %v751 = vsel %vm749, %v744, 0
      %753 = vmatprep.subr.bf16.mxu0 0
      %754 = vmatpush1.bf16.msra.mxu0 %v751
      %755 = vmatprep.subr.bf16.mxu0 0
      %756 = vmatpush1.bf16.msra.mxu0 0
      %757 = vmatprep.subr.bf16.mxu0 0
      %758 = vmatpush1.bf16.msra.mxu0 0
      %759 = vmatprep.subr.bf16.mxu0 0
      %760 = vmatpush1.bf16.msra.mxu0 0
      %761 = vmatprep.subr.bf16.mxu0 0
      %762 = vmatpush1.bf16.msra.mxu0 0
      %763 = vmatprep.subr.bf16.mxu0 0
      %764 = vmatpush1.bf16.msra.mxu0 0
      %765 = vmatprep.subr.bf16.mxu0 0
      %766 = vmatpush1.bf16.msra.mxu0 0
      %767 = vmatprep.subr.bf16.mxu0 0
      %768 = vmatpush1.bf16.msra.mxu0 0
      %769 = vmatprep.subr.bf16.mxu0 0
      %770 = vmatpush1.bf16.msra.mxu0 0
      %771 = vmatprep.subr.bf16.mxu0 0
      %772 = vmatpush1.bf16.msra.mxu0 0
      %773 = vmatprep.subr.bf16.mxu0 0
      %774 = vmatpush1.bf16.msra.mxu0 0
      %775 = vmatprep.subr.bf16.mxu0 0
      %776 = vmatpush1.bf16.msra.mxu0 0
      %777 = vmatprep.subr.bf16.mxu0 0
      %778 = vmatpush1.bf16.msra.mxu0 0
      %779 = vmatprep.subr.bf16.mxu0 0
      %780 = vmatpush1.bf16.msra.mxu0 0
      %781 = vmatprep.subr.bf16.mxu0 0
      %782 = vmatpush1.bf16.msra.mxu0 0
      %783 = vmatprep.subr.bf16.mxu0 0
      %784 = vmatpush1.bf16.msra.mxu0 0
      %785 = vmatprep.mubr.bf16.mxu0 0
      %786 = vmatmul.mubr.bf16.gmra.mrb[0].mxu0 %v747
      %v787 = vpop.f32.mrb[0].mxu0
      %v788 = vadd.f32 0.0, %v787
      %v789 = vpop.f32.mrb[0].mxu0
      %v790 = vpop.f32.mrb[0].mxu0
      %v791 = vpop.f32.mrb[0].mxu0
      %792 = vdwg.mxu0
      %v793 = vadd.f32 %v742, %v788
      %v794 = vmax.f32 %v793, 0.0
      %795 = vst [vmem:[%s239] sm:$0xff] %v794
      %p796 = scmp.lt.s32.totalorder %s16, 1
      %s797 = scalar_select %p796, %s16, 1
      %s798 = smul.addr %s797, 8
      %s799 = scalar_lea.vmem %s5, %s798
      // Predicated region
      $region41: #{_lambda_.5} parent=39 // pred_check
        %p800 = pneg %p149
      $region42: #{_lambda_.5} parent=39 // pred_check_branch
        %802 = sbr.rel (%p800) target = $region44
      $region43: #{_lambda_.5} parent=39 // pred_region
        _
      $region44: #{_lambda_.5} parent=39 // pred_fallthru
        _
    $region40: #{_lambda_.5} parent=5 // pred_fallthru
      _
    %p803 = scmp.le.s32.totalorder 2, %s11
    // Predicated region
    $region45: #{_lambda_.5} parent=5 // pred_check
      %p804 = pneg %p803
    $region46: #{_lambda_.5} parent=5 // pred_check_branch
      %806 = sbr.rel (%p804) target = $region48
    $region47: #{_lambda_.5} parent=5 // pred_region
      %s807 = ssub.s32 %s11, 2
      // Predicated region
      $region49: #{_lambda_.5} parent=47 // pred_check
        %p808 = pneg %p155
      $region50: #{_lambda_.5} parent=47 // pred_check_branch
        %810 = sbr.rel (%p808) target = $region52
      $region51: #{_lambda_.5} parent=47 // pred_region
        %p811 = scmp.lt.s32.totalorder %s17, 1
        %s812 = scalar_select %p811, %s17, 1
        %s813 = smul.addr %s812, 8
        %s814 = scalar_lea.vmem %s5, %s813
      $region52: #{_lambda_.5} parent=47 // pred_fallthru
        _
    $region48: #{_lambda_.5} parent=5 // pred_fallthru
      _
  $region6: #{_lambda_.5} parent=0 // loop_footer
    %s15 = sadd.s32 1, %s11
  $region7: #{_lambda_.5} parent=0 // loop_footer_branch
    %10 = sbr.rel target = $region3
  $region8: #{_lambda_.5} parent=0 // loop_exit
    _

// kernel: _lambda_.6
$region0: #{_lambda_.6}
  #allocation0 [shape = 'u32[]', space=smem, size = 0x4, offset = 0x4, fixed_abs, tag = 'smem constant byte address 0x4 - core index']
  #allocation1 [shape = 'u32[144,128]{1,0:T(1,128)}', space=vmem, size = 0x12000, scoped, tag = 'internal scratch']
  %s0 = inlined_call_operand.vmem [shape: bf16[2,8,256], index: 0, kind: input, shape index: {}]
  %s1 = inlined_call_operand.vmem [shape: bf16[9,8,8], index: 1, kind: input, shape index: {}]
  %s2 = inlined_call_operand.vmem [shape: f32[8,1], index: 2, kind: input, shape index: {}]
  %s3 = inlined_call_operand.vmem [shape: bf16[2,8,128], index: 3, kind: output, shape index: {}]
  %s4 = sld [smem:[#allocation0]]
  $region45: #{_lambda_.6} parent=0
    _
  %s6 = ssub.s32 1, %s4
  %s7 = scalar_select 0, %s6, %s4
  loop: start=0, step=1, limit=4
  $region2: #{_lambda_.6} parent=0 // loop_pre_header
    _
  $region3: #{_lambda_.6} parent=0 // loop_header
    %s9 = sphi 0, %s13
    %p10 = scmp.ge.s32.totalorder %s9, 4
    %s19 = sphi 0, %s21
    %s22 = sphi 0, %s19
    %s23 = sphi 0, %s22
    %s39 = sphi 0, %s23
    %s43 = sphi 0, %s43
    %s45 = sphi 0, %s43
    %s46 = sphi 0, %s45
    %s60 = sphi 0, %s46
    %s64 = sphi 0, %s64
    %s66 = sphi 0, %s64
    %s67 = sphi 0, %s66
    %s81 = sphi 0, %s67
    %s87 = sphi 0, %s89
    %s90 = sphi 0, %s87
    %s91 = sphi 0, %s90
    %s107 = sphi 0, %s91
  $region4: #{_lambda_.6} parent=0 // loop_header_branch
    %12 = sbr.rel (%p10) target = $region8
  $region5: #{_lambda_.6} parent=0 // loop_body
    %s14 = ssub.s32 %s9, 1
    %s15 = ssub.s32 %s9, 2
    %s16 = sadd.s32 %s9, 1
    %s17 = ssub.s32 %s9, %s16
    %p18 = scmp.eq.s32.totalorder %s17, 0
    %s20 = sadd.s32 %s19, 1
    %s21 = scalar_select %p18, %s19, %s20
    %p24 = pneg %p18
    %p25 = scmp.eq.s32.totalorder %s9, 1
    %p26 = por %p24, %p25
    %p27 = scmp.ne.s32.totalorder %s19, %s22
    %p28 = scmp.eq.s32.totalorder %s9, 0
    %p29 = por %p27, %p28
    %p30 = scmp.ne.s32.totalorder %s19, %s22
    %p31 = scmp.eq.s32.totalorder %s14, 1
    %p32 = por %p30, %p31
    %p33 = scmp.ne.s32.totalorder %s22, %s23
    %p34 = scmp.eq.s32.totalorder %s14, 0
    %p35 = por %p33, %p34
    %p36 = scmp.ne.s32.totalorder %s22, %s23
    %p37 = scmp.eq.s32.totalorder %s15, 1
    %p38 = por %p36, %p37
    %p40 = scmp.ne.s32.totalorder %s23, %s39
    %p41 = scmp.eq.s32.totalorder %s15, 0
    %p42 = por %p40, %p41
    %s44 = sadd.s32 %s43, 1
    %p47 = scmp.eq.s32.totalorder %s9, 1
    %p48 = scmp.ne.s32.totalorder %s43, %s45
    %p49 = scmp.eq.s32.totalorder %s9, 0
    %p50 = por %p48, %p49
    %p51 = scmp.ne.s32.totalorder %s43, %s45
    %p52 = scmp.eq.s32.totalorder %s14, 1
    %p53 = por %p51, %p52
    %p54 = scmp.ne.s32.totalorder %s45, %s46
    %p55 = scmp.eq.s32.totalorder %s14, 0
    %p56 = por %p54, %p55
    %p57 = scmp.ne.s32.totalorder %s45, %s46
    %p58 = scmp.eq.s32.totalorder %s15, 1
    %p59 = por %p57, %p58
    %p61 = scmp.ne.s32.totalorder %s46, %s60
    %p62 = scmp.eq.s32.totalorder %s15, 0
    %p63 = por %p61, %p62
    %s65 = sadd.s32 %s64, 1
    %p68 = scmp.eq.s32.totalorder %s9, 1
    %p69 = scmp.ne.s32.totalorder %s64, %s66
    %p70 = scmp.eq.s32.totalorder %s9, 0
    %p71 = por %p69, %p70
    %p72 = scmp.ne.s32.totalorder %s64, %s66
    %p73 = scmp.eq.s32.totalorder %s14, 1
    %p74 = por %p72, %p73
    %p75 = scmp.ne.s32.totalorder %s66, %s67
    %p76 = scmp.eq.s32.totalorder %s14, 0
    %p77 = por %p75, %p76
    %p78 = scmp.ne.s32.totalorder %s66, %s67
    %p79 = scmp.eq.s32.totalorder %s15, 1
    %p80 = por %p78, %p79
    %p82 = scmp.ne.s32.totalorder %s67, %s81
    %p83 = scmp.eq.s32.totalorder %s15, 0
    %p84 = por %p82, %p83
    %s85 = ssub.s32 %s9, %s16
    %p86 = scmp.eq.s32.totalorder %s85, 0
    %s88 = sadd.s32 %s87, 1
    %s89 = scalar_select %p86, %s87, %s88
    %p92 = pneg %p86
    %p93 = scmp.eq.s32.totalorder %s9, 1
    %p94 = por %p92, %p93
    %p95 = scmp.ne.s32.totalorder %s87, %s90
    %p96 = scmp.eq.s32.totalorder %s9, 0
    %p97 = por %p95, %p96
    %p98 = scmp.ne.s32.totalorder %s87, %s90
    %p99 = scmp.eq.s32.totalorder %s14, 1
    %p100 = por %p98, %p99
    %p101 = scmp.ne.s32.totalorder %s90, %s91
    %p102 = scmp.eq.s32.totalorder %s14, 0
    %p103 = por %p101, %p102
    %p104 = scmp.ne.s32.totalorder %s90, %s91
    %p105 = scmp.eq.s32.totalorder %s15, 1
    %p106 = por %p104, %p105
    %p108 = scmp.ne.s32.totalorder %s91, %s107
    %p109 = scmp.eq.s32.totalorder %s15, 0
    %p110 = por %p108, %p109
    %p111 = scmp.le.s32.totalorder 1, %s9
    %p112 = scmp.lt.s32.totalorder %s9, 3
    %p113 = pnand %p111, %p112
    %p114 = pneg %p113
    // Predicated region
    $region9: #{_lambda_.6} parent=5 // pred_check
      _
    $region10: #{_lambda_.6} parent=5 // pred_check_branch
      %116 = sbr.rel (%p113) target = $region12
    $region11: #{_lambda_.6} parent=5 // pred_region
      %s117 = ssub.s32 %s9, 1
      // Predicated region
      $region13: #{_lambda_.6} parent=11 // pred_check
        %p118 = pneg %p56
      $region14: #{_lambda_.6} parent=11 // pred_check_branch
        %120 = sbr.rel (%p118) target = $region16
      $region15: #{_lambda_.6} parent=11 // pred_region
        _
      $region16: #{_lambda_.6} parent=11 // pred_fallthru
        _
      // Predicated region
      $region17: #{_lambda_.6} parent=11 // pred_check
        %p121 = pneg %p77
      $region18: #{_lambda_.6} parent=11 // pred_check_branch
        %123 = sbr.rel (%p121) target = $region20
      $region19: #{_lambda_.6} parent=11 // pred_region
        _
      $region20: #{_lambda_.6} parent=11 // pred_fallthru
        _
    $region12: #{_lambda_.6} parent=5 // pred_fallthru
      _
    %p124 = scmp.lt.s32.totalorder %s9, 2
    // Predicated region
    $region21: #{_lambda_.6} parent=5 // pred_check
      %p125 = pneg %p124
    $region22: #{_lambda_.6} parent=5 // pred_check_branch
      %127 = sbr.rel (%p125) target = $region24
    $region23: #{_lambda_.6} parent=5 // pred_region
      // Predicated region
      $region25: #{_lambda_.6} parent=23 // pred_check
        %p128 = pneg %p29
      $region26: #{_lambda_.6} parent=23 // pred_check_branch
        %130 = sbr.rel (%p128) target = $region28
      $region27: #{_lambda_.6} parent=23 // pred_region
        %p131 = scmp.lt.s32.totalorder %s9, 1
        %s132 = scalar_select %p131, %s9, 1
        %s133 = smul.addr %s132, 2
        %s134 = smul.addr %s133, 4
        %s135 = scalar_lea.vmem %s0, %s134
      $region28: #{_lambda_.6} parent=23 // pred_fallthru
        _
    $region24: #{_lambda_.6} parent=5 // pred_fallthru
      _
    %p136 = scmp.le.s32.totalorder 1, %s9
    %p137 = scmp.lt.s32.totalorder %s9, 3
    %p138 = pnand %p136, %p137
    %p139 = pneg %p138
    // Predicated region
    $region29: #{_lambda_.6} parent=5 // pred_check
      _
    $region30: #{_lambda_.6} parent=5 // pred_check_branch
      %141 = sbr.rel (%p138) target = $region32
    $region31: #{_lambda_.6} parent=5 // pred_region
      %s142 = ssub.s32 %s9, 1
      %p143 = scmp.lt.s32.totalorder %s14, 1
      %s144 = scalar_select %p143, %s14, 1
      %s145 = smul.addr %s144, 2
      %s146 = smul.addr %s145, 4
      %s147 = scalar_lea.vmem %s0, %s146
      %p148 = pneg %p35
      %p149 = pneg %p32
      %p150 = pneg %p56
      %p151 = pneg %p53
      %p152 = pneg %p77
      %p153 = pneg %p74
      %p154 = pneg %p103
      %p155 = pneg %p100
      %p156 = scmp.lt.s32.totalorder %s14, 1
      %s157 = scalar_select %p156, %s14, 1
      %s158 = smul.addr %s157, 4
      %s159 = scalar_lea.vmem %s3, %s158
      %p160 = scmp.lt.s32.totalorder %s14, 1
      %s161 = scalar_select %p160, %s14, 1
      %s162 = smul.addr %s161, 2
      %s163 = smul.addr %s162, 4
      %s164 = scalar_lea.vmem %s0, %s163
      %p165 = scmp.lt.s32.totalorder %s14, 1
      %s166 = scalar_select %p165, %s14, 1
      %s167 = smul.addr %s166, 4
      %s168 = scalar_lea.vmem %s3, %s167
      %v170 = vld [vmem:[%s164] sm:$0xf]
      %v171 = vld [vmem:[%s1] sm:$0xf]
      %v172 = vld [vmem:[%s164] sm:$0xff]
      %s173 = scalar_lea.vmem %s1, 4
      %v174 = vld [vmem:[%s173] sm:$0xf]
      %v176 = vunpack.c.l.b16 %v172
      %v177 = vunpack.c.h.b16 %v172
      %v178 = vpack.c.b16 %v176, %v176
      %v179 = vpack.c.b16 %v177, %v177
      %180 = vrot.lane.b32.xlu0 %v178, 127
      %v181 = vpop.permute.xlu0 %180
      %182 = vrot.lane.b32.xlu0 %v179, 127
      %v183 = vpop.permute.xlu0 %182
      %vm184 = vcmask 1039360
      %v185 = vsel %vm184, %v181, %v183
      %vm186 = vcmask 64512
      %v188 = vsel %vm186, %v174, 0
      %vm190 = vcmask 1043456
      %v192 = vsel %vm190, %v185, 0
      %194 = vmatprep.subr.bf16.mxu0 0
      %195 = vmatpush1.bf16.msra.mxu0 %v192
      %196 = vmatprep.subr.bf16.mxu0 0
      %197 = vmatpush1.bf16.msra.mxu0 0
      %198 = vmatprep.subr.bf16.mxu0 0
      %199 = vmatpush1.bf16.msra.mxu0 0
      %200 = vmatprep.subr.bf16.mxu0 0
      %201 = vmatpush1.bf16.msra.mxu0 0
      %202 = vmatprep.subr.bf16.mxu0 0
      %203 = vmatpush1.bf16.msra.mxu0 0
      %204 = vmatprep.subr.bf16.mxu0 0
      %205 = vmatpush1.bf16.msra.mxu0 0
      %206 = vmatprep.subr.bf16.mxu0 0
      %207 = vmatpush1.bf16.msra.mxu0 0
      %208 = vmatprep.subr.bf16.mxu0 0
      %209 = vmatpush1.bf16.msra.mxu0 0
      %210 = vmatprep.subr.bf16.mxu0 0
      %211 = vmatpush1.bf16.msra.mxu0 0
      %212 = vmatprep.subr.bf16.mxu0 0
      %213 = vmatpush1.bf16.msra.mxu0 0
      %214 = vmatprep.subr.bf16.mxu0 0
      %215 = vmatpush1.bf16.msra.mxu0 0
      %216 = vmatprep.subr.bf16.mxu0 0
      %217 = vmatpush1.bf16.msra.mxu0 0
      %218 = vmatprep.subr.bf16.mxu0 0
      %219 = vmatpush1.bf16.msra.mxu0 0
      %220 = vmatprep.subr.bf16.mxu0 0
      %221 = vmatpush1.bf16.msra.mxu0 0
      %222 = vmatprep.subr.bf16.mxu0 0
      %223 = vmatpush1.bf16.msra.mxu0 0
      %224 = vmatprep.subr.bf16.mxu0 0
      %225 = vmatpush1.bf16.msra.mxu0 0
      %226 = vmatprep.mubr.bf16.mxu0 0
      %227 = vmatmul.mubr.bf16.gmra.mrb[0].mxu0 %v188
      %v228 = vpop.f32.mrb[0].mxu0
      %v229 = vadd.f32 0.0, %v228
      %v230 = vpop.f32.mrb[0].mxu0
      %v231 = vpop.f32.mrb[0].mxu0
      %v232 = vpop.f32.mrb[0].mxu0
      %233 = vdwg.mxu0
      %v235 = vsel %vm186, %v171, 0
      %v238 = vsel %vm190, %v170, 0
      %240 = vmatprep.subr.bf16.mxu0 0
      %241 = vmatpush1.bf16.msra.mxu0 %v238
      %242 = vmatprep.subr.bf16.mxu0 0
      %243 = vmatpush1.bf16.msra.mxu0 0
      %244 = vmatprep.subr.bf16.mxu0 0
      %245 = vmatpush1.bf16.msra.mxu0 0
      %246 = vmatprep.subr.bf16.mxu0 0
      %247 = vmatpush1.bf16.msra.mxu0 0
      %248 = vmatprep.subr.bf16.mxu0 0
      %249 = vmatpush1.bf16.msra.mxu0 0
      %250 = vmatprep.subr.bf16.mxu0 0
      %251 = vmatpush1.bf16.msra.mxu0 0
      %252 = vmatprep.subr.bf16.mxu0 0
      %253 = vmatpush1.bf16.msra.mxu0 0
      %254 = vmatprep.subr.bf16.mxu0 0
      %255 = vmatpush1.bf16.msra.mxu0 0
      %256 = vmatprep.subr.bf16.mxu0 0
      %257 = vmatpush1.bf16.msra.mxu0 0
      %258 = vmatprep.subr.bf16.mxu0 0
      %259 = vmatpush1.bf16.msra.mxu0 0
      %260 = vmatprep.subr.bf16.mxu0 0
      %261 = vmatpush1.bf16.msra.mxu0 0
      %262 = vmatprep.subr.bf16.mxu0 0
      %263 = vmatpush1.bf16.msra.mxu0 0
      %264 = vmatprep.subr.bf16.mxu0 0
      %265 = vmatpush1.bf16.msra.mxu0 0
      %266 = vmatprep.subr.bf16.mxu0 0
      %267 = vmatpush1.bf16.msra.mxu0 0
      %268 = vmatprep.subr.bf16.mxu0 0
      %269 = vmatpush1.bf16.msra.mxu0 0
      %270 = vmatprep.subr.bf16.mxu0 0
      %271 = vmatpush1.bf16.msra.mxu0 0
      %272 = vmatprep.mubr.bf16.mxu0 0
      %273 = vmatmul.mubr.bf16.gmra.mrb[0].mxu0 %v235
      %v274 = vpop.f32.mrb[0].mxu0
      %v275 = vadd.f32 %v229, %v274
      %v276 = vpop.f32.mrb[0].mxu0
      %v277 = vpop.f32.mrb[0].mxu0
      %v278 = vpop.f32.mrb[0].mxu0
      %279 = vdwg.mxu0
      %s280 = scalar_lea.vmem %s1, 8
      %v281 = vld [vmem:[%s280] sm:$0xf]
      %282 = vrot.lane.b32.xlu0 %v178, 126
      %v283 = vpop.permute.xlu0 %282
      %284 = vrot.lane.b32.xlu0 %v179, 126
      %v285 = vpop.permute.xlu0 %284
      %vm286 = vcmask 1031168
      %v287 = vsel %vm286, %v283, %v285
      %v289 = vsel %vm186, %v281, 0
      %v292 = vsel %vm190, %v287, 0
      %294 = vmatprep.subr.bf16.mxu0 0
      %295 = vmatpush1.bf16.msra.mxu0 %v292
      %296 = vmatprep.subr.bf16.mxu0 0
      %297 = vmatpush1.bf16.msra.mxu0 0
      %298 = vmatprep.subr.bf16.mxu0 0
      %299 = vmatpush1.bf16.msra.mxu0 0
      %300 = vmatprep.subr.bf16.mxu0 0
      %301 = vmatpush1.bf16.msra.mxu0 0
      %302 = vmatprep.subr.bf16.mxu0 0
      %303 = vmatpush1.bf16.msra.mxu0 0
      %304 = vmatprep.subr.bf16.mxu0 0
      %305 = vmatpush1.bf16.msra.mxu0 0
      %306 = vmatprep.subr.bf16.mxu0 0
      %307 = vmatpush1.bf16.msra.mxu0 0
      %308 = vmatprep.subr.bf16.mxu0 0
      %309 = vmatpush1.bf16.msra.mxu0 0
      %310 = vmatprep.subr.bf16.mxu0 0
      %311 = vmatpush1.bf16.msra.mxu0 0
      %312 = vmatprep.subr.bf16.mxu0 0
      %313 = vmatpush1.bf16.msra.mxu0 0
      %314 = vmatprep.subr.bf16.mxu0 0
      %315 = vmatpush1.bf16.msra.mxu0 0
      %316 = vmatprep.subr.bf16.mxu0 0
      %317 = vmatpush1.bf16.msra.mxu0 0
      %318 = vmatprep.subr.bf16.mxu0 0
      %319 = vmatpush1.bf16.msra.mxu0 0
      %320 = vmatprep.subr.bf16.mxu0 0
      %321 = vmatpush1.bf16.msra.mxu0 0
      %322 = vmatprep.subr.bf16.mxu0 0
      %323 = vmatpush1.bf16.msra.mxu0 0
      %324 = vmatprep.subr.bf16.mxu0 0
      %325 = vmatpush1.bf16.msra.mxu0 0
      %326 = vmatprep.mubr.bf16.mxu0 0
      %327 = vmatmul.mubr.bf16.gmra.mrb[0].mxu0 %v289
      %v328 = vpop.f32.mrb[0].mxu0
      %v329 = vadd.f32 0.0, %v328
      %v330 = vpop.f32.mrb[0].mxu0
      %v331 = vpop.f32.mrb[0].mxu0
      %v332 = vpop.f32.mrb[0].mxu0
      %333 = vdwg.mxu0
      %v334 = vadd.f32 %v275, %v329
      %s335 = scalar_lea.vmem %s1, 12
      %v336 = vld [vmem:[%s335] sm:$0xf]
      %337 = vrot.lane.b32.xlu0 %v178, 118
      %v338 = vpop.permute.xlu0 %337
      %339 = vrot.lane.b32.xlu0 %v179, 118
      %v340 = vpop.permute.xlu0 %339
      %vm341 = vcmask 965632
      %v342 = vsel %vm341, %v338, %v340
      %v344 = vsel %vm186, %v336, 0
      %v347 = vsel %vm190, %v342, 0
      %349 = vmatprep.subr.bf16.mxu0 0
      %350 = vmatpush1.bf16.msra.mxu0 %v347
      %351 = vmatprep.subr.bf16.mxu0 0
      %352 = vmatpush1.bf16.msra.mxu0 0
      %353 = vmatprep.subr.bf16.mxu0 0
      %354 = vmatpush1.bf16.msra.mxu0 0
      %355 = vmatprep.subr.bf16.mxu0 0
      %356 = vmatpush1.bf16.msra.mxu0 0
      %357 = vmatprep.subr.bf16.mxu0 0
      %358 = vmatpush1.bf16.msra.mxu0 0
      %359 = vmatprep.subr.bf16.mxu0 0
      %360 = vmatpush1.bf16.msra.mxu0 0
      %361 = vmatprep.subr.bf16.mxu0 0
      %362 = vmatpush1.bf16.msra.mxu0 0
      %363 = vmatprep.subr.bf16.mxu0 0
      %364 = vmatpush1.bf16.msra.mxu0 0
      %365 = vmatprep.subr.bf16.mxu0 0
      %366 = vmatpush1.bf16.msra.mxu0 0
      %367 = vmatprep.subr.bf16.mxu0 0
      %368 = vmatpush1.bf16.msra.mxu0 0
      %369 = vmatprep.subr.bf16.mxu0 0
      %370 = vmatpush1.bf16.msra.mxu0 0
      %371 = vmatprep.subr.bf16.mxu0 0
      %372 = vmatpush1.bf16.msra.mxu0 0
      %373 = vmatprep.subr.bf16.mxu0 0
      %374 = vmatpush1.bf16.msra.mxu0 0
      %375 = vmatprep.subr.bf16.mxu0 0
      %376 = vmatpush1.bf16.msra.mxu0 0
      %377 = vmatprep.subr.bf16.mxu0 0
      %378 = vmatpush1.bf16.msra.mxu0 0
      %379 = vmatprep.subr.bf16.mxu0 0
      %380 = vmatpush1.bf16.msra.mxu0 0
      %381 = vmatprep.mubr.bf16.mxu0 0
      %382 = vmatmul.mubr.bf16.gmra.mrb[0].mxu0 %v344
      %v383 = vpop.f32.mrb[0].mxu0
      %v384 = vadd.f32 0.0, %v383
      %v385 = vpop.f32.mrb[0].mxu0
      %v386 = vpop.f32.mrb[0].mxu0
      %v387 = vpop.f32.mrb[0].mxu0
      %388 = vdwg.mxu0
      %v389 = vadd.f32 %v334, %v384
      %s390 = scalar_lea.vmem %s1, 16
      %v391 = vld [vmem:[%s390] sm:$0xf]
      %392 = vrot.lane.b32.xlu0 %v178, 117
      %v393 = vpop.permute.xlu0 %392
      %394 = vrot.lane.b32.xlu0 %v179, 117
      %v395 = vpop.permute.xlu0 %394
      %vm396 = vcmask 957440
      %v397 = vsel %vm396, %v393, %v395
      %v399 = vsel %vm186, %v391, 0
      %v402 = vsel %vm190, %v397, 0
      %404 = vmatprep.subr.bf16.mxu0 0
      %405 = vmatpush1.bf16.msra.mxu0 %v402
      %406 = vmatprep.subr.bf16.mxu0 0
      %407 = vmatpush1.bf16.msra.mxu0 0
      %408 = vmatprep.subr.bf16.mxu0 0
      %409 = vmatpush1.bf16.msra.mxu0 0
      %410 = vmatprep.subr.bf16.mxu0 0
      %411 = vmatpush1.bf16.msra.mxu0 0
      %412 = vmatprep.subr.bf16.mxu0 0
      %413 = vmatpush1.bf16.msra.mxu0 0
      %414 = vmatprep.subr.bf16.mxu0 0
      %415 = vmatpush1.bf16.msra.mxu0 0
      %416 = vmatprep.subr.bf16.mxu0 0
      %417 = vmatpush1.bf16.msra.mxu0 0
      %418 = vmatprep.subr.bf16.mxu0 0
      %419 = vmatpush1.bf16.msra.mxu0 0
      %420 = vmatprep.subr.bf16.mxu0 0
      %421 = vmatpush1.bf16.msra.mxu0 0
      %422 = vmatprep.subr.bf16.mxu0 0
      %423 = vmatpush1.bf16.msra.mxu0 0
      %424 = vmatprep.subr.bf16.mxu0 0
      %425 = vmatpush1.bf16.msra.mxu0 0
      %426 = vmatprep.subr.bf16.mxu0 0
      %427 = vmatpush1.bf16.msra.mxu0 0
      %428 = vmatprep.subr.bf16.mxu0 0
      %429 = vmatpush1.bf16.msra.mxu0 0
      %430 = vmatprep.subr.bf16.mxu0 0
      %431 = vmatpush1.bf16.msra.mxu0 0
      %432 = vmatprep.subr.bf16.mxu0 0
      %433 = vmatpush1.bf16.msra.mxu0 0
      %434 = vmatprep.subr.bf16.mxu0 0
      %435 = vmatpush1.bf16.msra.mxu0 0
      %436 = vmatprep.mubr.bf16.mxu0 0
      %437 = vmatmul.mubr.bf16.gmra.mrb[0].mxu0 %v399
      %v438 = vpop.f32.mrb[0].mxu0
      %v439 = vadd.f32 0.0, %v438
      %v440 = vpop.f32.mrb[0].mxu0
      %v441 = vpop.f32.mrb[0].mxu0
      %v442 = vpop.f32.mrb[0].mxu0
      %443 = vdwg.mxu0
      %v444 = vadd.f32 %v389, %v439
      %s445 = scalar_lea.vmem %s1, 20
      %v446 = vld [vmem:[%s445] sm:$0xf]
      %447 = vrot.lane.b32.xlu0 %v178, 116
      %v448 = vpop.permute.xlu0 %447
      %449 = vrot.lane.b32.xlu0 %v179, 116
      %v450 = vpop.permute.xlu0 %449
      %vm451 = vcmask 949248
      %v452 = vsel %vm451, %v448, %v450
      %v454 = vsel %vm186, %v446, 0
      %v457 = vsel %vm190, %v452, 0
      %459 = vmatprep.subr.bf16.mxu0 0
      %460 = vmatpush1.bf16.msra.mxu0 %v457
      %461 = vmatprep.subr.bf16.mxu0 0
      %462 = vmatpush1.bf16.msra.mxu0 0
      %463 = vmatprep.subr.bf16.mxu0 0
      %464 = vmatpush1.bf16.msra.mxu0 0
      %465 = vmatprep.subr.bf16.mxu0 0
      %466 = vmatpush1.bf16.msra.mxu0 0
      %467 = vmatprep.subr.bf16.mxu0 0
      %468 = vmatpush1.bf16.msra.mxu0 0
      %469 = vmatprep.subr.bf16.mxu0 0
      %470 = vmatpush1.bf16.msra.mxu0 0
      %471 = vmatprep.subr.bf16.mxu0 0
      %472 = vmatpush1.bf16.msra.mxu0 0
      %473 = vmatprep.subr.bf16.mxu0 0
      %474 = vmatpush1.bf16.msra.mxu0 0
      %475 = vmatprep.subr.bf16.mxu0 0
      %476 = vmatpush1.bf16.msra.mxu0 0
      %477 = vmatprep.subr.bf16.mxu0 0
      %478 = vmatpush1.bf16.msra.mxu0 0
      %479 = vmatprep.subr.bf16.mxu0 0
      %480 = vmatpush1.bf16.msra.mxu0 0
      %481 = vmatprep.subr.bf16.mxu0 0
      %482 = vmatpush1.bf16.msra.mxu0 0
      %483 = vmatprep.subr.bf16.mxu0 0
      %484 = vmatpush1.bf16.msra.mxu0 0
      %485 = vmatprep.subr.bf16.mxu0 0
      %486 = vmatpush1.bf16.msra.mxu0 0
      %487 = vmatprep.subr.bf16.mxu0 0
      %488 = vmatpush1.bf16.msra.mxu0 0
      %489 = vmatprep.subr.bf16.mxu0 0
      %490 = vmatpush1.bf16.msra.mxu0 0
      %491 = vmatprep.mubr.bf16.mxu0 0
      %492 = vmatmul.mubr.bf16.gmra.mrb[0].mxu0 %v454
      %v493 = vpop.f32.mrb[0].mxu0
      %v494 = vadd.f32 0.0, %v493
      %v495 = vpop.f32.mrb[0].mxu0
      %v496 = vpop.f32.mrb[0].mxu0
      %v497 = vpop.f32.mrb[0].mxu0
      %498 = vdwg.mxu0
      %v499 = vadd.f32 %v444, %v494
      %s500 = scalar_lea.vmem %s1, 24
      %v501 = vld [vmem:[%s500] sm:$0xf]
      %502 = vrot.lane.b32.xlu0 %v178, 108
      %v503 = vpop.permute.xlu0 %502
      %504 = vrot.lane.b32.xlu0 %v179, 108
      %v505 = vpop.permute.xlu0 %504
      %vm506 = vcmask 883712
      %v507 = vsel %vm506, %v503, %v505
      %v509 = vsel %vm186, %v501, 0
      %v512 = vsel %vm190, %v507, 0
      %514 = vmatprep.subr.bf16.mxu0 0
      %515 = vmatpush1.bf16.msra.mxu0 %v512
      %516 = vmatprep.subr.bf16.mxu0 0
      %517 = vmatpush1.bf16.msra.mxu0 0
      %518 = vmatprep.subr.bf16.mxu0 0
      %519 = vmatpush1.bf16.msra.mxu0 0
      %520 = vmatprep.subr.bf16.mxu0 0
      %521 = vmatpush1.bf16.msra.mxu0 0
      %522 = vmatprep.subr.bf16.mxu0 0
      %523 = vmatpush1.bf16.msra.mxu0 0
      %524 = vmatprep.subr.bf16.mxu0 0
      %525 = vmatpush1.bf16.msra.mxu0 0
      %526 = vmatprep.subr.bf16.mxu0 0
      %527 = vmatpush1.bf16.msra.mxu0 0
      %528 = vmatprep.subr.bf16.mxu0 0
      %529 = vmatpush1.bf16.msra.mxu0 0
      %530 = vmatprep.subr.bf16.mxu0 0
      %531 = vmatpush1.bf16.msra.mxu0 0
      %532 = vmatprep.subr.bf16.mxu0 0
      %533 = vmatpush1.bf16.msra.mxu0 0
      %534 = vmatprep.subr.bf16.mxu0 0
      %535 = vmatpush1.bf16.msra.mxu0 0
      %536 = vmatprep.subr.bf16.mxu0 0
      %537 = vmatpush1.bf16.msra.mxu0 0
      %538 = vmatprep.subr.bf16.mxu0 0
      %539 = vmatpush1.bf16.msra.mxu0 0
      %540 = vmatprep.subr.bf16.mxu0 0
      %541 = vmatpush1.bf16.msra.mxu0 0
      %542 = vmatprep.subr.bf16.mxu0 0
      %543 = vmatpush1.bf16.msra.mxu0 0
      %544 = vmatprep.subr.bf16.mxu0 0
      %545 = vmatpush1.bf16.msra.mxu0 0
      %546 = vmatprep.mubr.bf16.mxu0 0
      %547 = vmatmul.mubr.bf16.gmra.mrb[0].mxu0 %v509
      %v548 = vpop.f32.mrb[0].mxu0
      %v549 = vadd.f32 0.0, %v548
      %v550 = vpop.f32.mrb[0].mxu0
      %v551 = vpop.f32.mrb[0].mxu0
      %v552 = vpop.f32.mrb[0].mxu0
      %553 = vdwg.mxu0
      %v554 = vadd.f32 %v499, %v549
      %s555 = scalar_lea.vmem %s1, 28
      %v556 = vld [vmem:[%s555] sm:$0xf]
      %557 = vrot.lane.b32.xlu0 %v178, 107
      %v558 = vpop.permute.xlu0 %557
      %559 = vrot.lane.b32.xlu0 %v179, 107
      %v560 = vpop.permute.xlu0 %559
      %vm561 = vcmask 875520
      %v562 = vsel %vm561, %v558, %v560
      %v564 = vsel %vm186, %v556, 0
      %v567 = vsel %vm190, %v562, 0
      %569 = vmatprep.subr.bf16.mxu0 0
      %570 = vmatpush1.bf16.msra.mxu0 %v567
      %571 = vmatprep.subr.bf16.mxu0 0
      %572 = vmatpush1.bf16.msra.mxu0 0
      %573 = vmatprep.subr.bf16.mxu0 0
      %574 = vmatpush1.bf16.msra.mxu0 0
      %575 = vmatprep.subr.bf16.mxu0 0
      %576 = vmatpush1.bf16.msra.mxu0 0
      %577 = vmatprep.subr.bf16.mxu0 0
      %578 = vmatpush1.bf16.msra.mxu0 0
      %579 = vmatprep.subr.bf16.mxu0 0
      %580 = vmatpush1.bf16.msra.mxu0 0
      %581 = vmatprep.subr.bf16.mxu0 0
      %582 = vmatpush1.bf16.msra.mxu0 0
      %583 = vmatprep.subr.bf16.mxu0 0
      %584 = vmatpush1.bf16.msra.mxu0 0
      %585 = vmatprep.subr.bf16.mxu0 0
      %586 = vmatpush1.bf16.msra.mxu0 0
      %587 = vmatprep.subr.bf16.mxu0 0
      %588 = vmatpush1.bf16.msra.mxu0 0
      %589 = vmatprep.subr.bf16.mxu0 0
      %590 = vmatpush1.bf16.msra.mxu0 0
      %591 = vmatprep.subr.bf16.mxu0 0
      %592 = vmatpush1.bf16.msra.mxu0 0
      %593 = vmatprep.subr.bf16.mxu0 0
      %594 = vmatpush1.bf16.msra.mxu0 0
      %595 = vmatprep.subr.bf16.mxu0 0
      %596 = vmatpush1.bf16.msra.mxu0 0
      %597 = vmatprep.subr.bf16.mxu0 0
      %598 = vmatpush1.bf16.msra.mxu0 0
      %599 = vmatprep.subr.bf16.mxu0 0
      %600 = vmatpush1.bf16.msra.mxu0 0
      %601 = vmatprep.mubr.bf16.mxu0 0
      %602 = vmatmul.mubr.bf16.gmra.mrb[0].mxu0 %v564
      %v603 = vpop.f32.mrb[0].mxu0
      %v604 = vadd.f32 0.0, %v603
      %v605 = vpop.f32.mrb[0].mxu0
      %v606 = vpop.f32.mrb[0].mxu0
      %v607 = vpop.f32.mrb[0].mxu0
      %608 = vdwg.mxu0
      %v609 = vadd.f32 %v554, %v604
      %s610 = scalar_lea.vmem %s1, 32
      %v611 = vld [vmem:[%s610] sm:$0xf]
      %612 = vrot.lane.b32.xlu0 %v178, 106
      %v613 = vpop.permute.xlu0 %612
      %614 = vrot.lane.b32.xlu0 %v179, 106
      %v615 = vpop.permute.xlu0 %614
      %vm616 = vcmask 867328
      %v617 = vsel %vm616, %v613, %v615
      %v619 = vsel %vm186, %v611, 0
      %v622 = vsel %vm190, %v617, 0
      %624 = vmatprep.subr.bf16.mxu0 0
      %625 = vmatpush1.bf16.msra.mxu0 %v622
      %626 = vmatprep.subr.bf16.mxu0 0
      %627 = vmatpush1.bf16.msra.mxu0 0
      %628 = vmatprep.subr.bf16.mxu0 0
      %629 = vmatpush1.bf16.msra.mxu0 0
      %630 = vmatprep.subr.bf16.mxu0 0
      %631 = vmatpush1.bf16.msra.mxu0 0
      %632 = vmatprep.subr.bf16.mxu0 0
      %633 = vmatpush1.bf16.msra.mxu0 0
      %634 = vmatprep.subr.bf16.mxu0 0
      %635 = vmatpush1.bf16.msra.mxu0 0
      %636 = vmatprep.subr.bf16.mxu0 0
      %637 = vmatpush1.bf16.msra.mxu0 0
      %638 = vmatprep.subr.bf16.mxu0 0
      %639 = vmatpush1.bf16.msra.mxu0 0
      %640 = vmatprep.subr.bf16.mxu0 0
      %641 = vmatpush1.bf16.msra.mxu0 0
      %642 = vmatprep.subr.bf16.mxu0 0
      %643 = vmatpush1.bf16.msra.mxu0 0
      %644 = vmatprep.subr.bf16.mxu0 0
      %645 = vmatpush1.bf16.msra.mxu0 0
      %646 = vmatprep.subr.bf16.mxu0 0
      %647 = vmatpush1.bf16.msra.mxu0 0
      %648 = vmatprep.subr.bf16.mxu0 0
      %649 = vmatpush1.bf16.msra.mxu0 0
      %650 = vmatprep.subr.bf16.mxu0 0
      %651 = vmatpush1.bf16.msra.mxu0 0
      %652 = vmatprep.subr.bf16.mxu0 0
      %653 = vmatpush1.bf16.msra.mxu0 0
      %654 = vmatprep.subr.bf16.mxu0 0
      %655 = vmatpush1.bf16.msra.mxu0 0
      %656 = vmatprep.mubr.bf16.mxu0 0
      %657 = vmatmul.mubr.bf16.gmra.mrb[0].mxu0 %v619
      %v658 = vpop.f32.mrb[0].mxu0
      %v659 = vadd.f32 0.0, %v658
      %v660 = vpop.f32.mrb[0].mxu0
      %v661 = vpop.f32.mrb[0].mxu0
      %v662 = vpop.f32.mrb[0].mxu0
      %663 = vdwg.mxu0
      %v664 = vadd.f32 %v609, %v659
      %v665 = vld [vmem:[%s2] sm:$0xff]
      %667 = vset.pattern.permute.xlu0 0
      %668 = vperm.xlu0 %667, %v665
      %v669 = vpop.permute.xlu0 %668
      %v671 = vadd.f32 %v664, %v669
      %v672 = vmax.f32 %v671, 0.0
      %v673 = vpack.c.bf16 %v672, %v672
      %674 = vst [vmem:[%s168] sm:$0xf] %v673
      %p675 = scmp.lt.s32.totalorder %s14, 1
      %s676 = scalar_select %p675, %s14, 1
      %s677 = smul.addr %s676, 4
      %s678 = scalar_lea.vmem %s3, %s677
      // Predicated region
      $region33: #{_lambda_.6} parent=31 // pred_check
        %p679 = pneg %p100
      $region34: #{_lambda_.6} parent=31 // pred_check_branch
        %681 = sbr.rel (%p679) target = $region36
      $region35: #{_lambda_.6} parent=31 // pred_region
        _
      $region36: #{_lambda_.6} parent=31 // pred_fallthru
        _
    $region32: #{_lambda_.6} parent=5 // pred_fallthru
      _
    %p682 = scmp.le.s32.totalorder 2, %s9
    // Predicated region
    $region37: #{_lambda_.6} parent=5 // pred_check
      %p683 = pneg %p682
    $region38: #{_lambda_.6} parent=5 // pred_check_branch
      %685 = sbr.rel (%p683) target = $region40
    $region39: #{_lambda_.6} parent=5 // pred_region
      %s686 = ssub.s32 %s9, 2
      // Predicated region
      $region41: #{_lambda_.6} parent=39 // pred_check
        %p687 = pneg %p106
      $region42: #{_lambda_.6} parent=39 // pred_check_branch
        %689 = sbr.rel (%p687) target = $region44
      $region43: #{_lambda_.6} parent=39 // pred_region
        %p690 = scmp.lt.s32.totalorder %s15, 1
        %s691 = scalar_select %p690, %s15, 1
        %s692 = smul.addr %s691, 4
        %s693 = scalar_lea.vmem %s3, %s692
      $region44: #{_lambda_.6} parent=39 // pred_fallthru
        _
    $region40: #{_lambda_.6} parent=5 // pred_fallthru
      _
  $region6: #{_lambda_.6} parent=0 // loop_footer
    %s13 = sadd.s32 1, %s9
  $region7: #{_lambda_.6} parent=0 // loop_footer_branch
    %8 = sbr.rel target = $region3
  $region8: #{_lambda_.6} parent=0 // loop_exit
    _

// kernel: _lambda_.7
$region0: #{_lambda_.7}
  #allocation0 [shape = 'u32[]', space=smem, size = 0x4, offset = 0x4, fixed_abs, tag = 'smem constant byte address 0x4 - core index']
  #allocation1 [shape = 'u32[144,128]{1,0:T(1,128)}', space=vmem, size = 0x12000, scoped, tag = 'internal scratch']
  %s0 = inlined_call_operand.vmem [shape: bf16[2,8,256], index: 0, kind: input, shape index: {}]
  %s1 = inlined_call_operand.vmem [shape: bf16[9,8,8], index: 1, kind: input, shape index: {}]
  %s2 = inlined_call_operand.vmem [shape: f32[8,1], index: 2, kind: input, shape index: {}]
  %s3 = inlined_call_operand.vmem [shape: bf16[2,8,128], index: 3, kind: input, shape index: {}]
  %s4 = inlined_call_operand.vmem [shape: f32[2,8,128], index: 4, kind: output, shape index: {}]
  %s5 = sld [smem:[#allocation0]]
  $region49: #{_lambda_.7} parent=0
    _
  %s7 = ssub.s32 1, %s5
  %s8 = scalar_select 0, %s7, %s5
  loop: start=0, step=1, limit=4
  $region2: #{_lambda_.7} parent=0 // loop_pre_header
    _
  $region3: #{_lambda_.7} parent=0 // loop_header
    %s10 = sphi 0, %s14
    %p11 = scmp.ge.s32.totalorder %s10, 4
    %s20 = sphi 0, %s22
    %s23 = sphi 0, %s20
    %s24 = sphi 0, %s23
    %s40 = sphi 0, %s24
    %s44 = sphi 0, %s44
    %s46 = sphi 0, %s44
    %s47 = sphi 0, %s46
    %s61 = sphi 0, %s47
    %s65 = sphi 0, %s65
    %s67 = sphi 0, %s65
    %s68 = sphi 0, %s67
    %s82 = sphi 0, %s68
    %s88 = sphi 0, %s90
    %s91 = sphi 0, %s88
    %s92 = sphi 0, %s91
    %s108 = sphi 0, %s92
    %s114 = sphi 0, %s116
    %s117 = sphi 0, %s114
    %s118 = sphi 0, %s117
    %s134 = sphi 0, %s118
  $region4: #{_lambda_.7} parent=0 // loop_header_branch
    %13 = sbr.rel (%p11) target = $region8
  $region5: #{_lambda_.7} parent=0 // loop_body
    %s15 = ssub.s32 %s10, 1
    %s16 = ssub.s32 %s10, 2
    %s17 = sadd.s32 %s10, 1
    %s18 = ssub.s32 %s10, %s17
    %p19 = scmp.eq.s32.totalorder %s18, 0
    %s21 = sadd.s32 %s20, 1
    %s22 = scalar_select %p19, %s20, %s21
    %p25 = pneg %p19
    %p26 = scmp.eq.s32.totalorder %s10, 1
    %p27 = por %p25, %p26
    %p28 = scmp.ne.s32.totalorder %s20, %s23
    %p29 = scmp.eq.s32.totalorder %s10, 0
    %p30 = por %p28, %p29
    %p31 = scmp.ne.s32.totalorder %s20, %s23
    %p32 = scmp.eq.s32.totalorder %s15, 1
    %p33 = por %p31, %p32
    %p34 = scmp.ne.s32.totalorder %s23, %s24
    %p35 = scmp.eq.s32.totalorder %s15, 0
    %p36 = por %p34, %p35
    %p37 = scmp.ne.s32.totalorder %s23, %s24
    %p38 = scmp.eq.s32.totalorder %s16, 1
    %p39 = por %p37, %p38
    %p41 = scmp.ne.s32.totalorder %s24, %s40
    %p42 = scmp.eq.s32.totalorder %s16, 0
    %p43 = por %p41, %p42
    %s45 = sadd.s32 %s44, 1
    %p48 = scmp.eq.s32.totalorder %s10, 1
    %p49 = scmp.ne.s32.totalorder %s44, %s46
    %p50 = scmp.eq.s32.totalorder %s10, 0
    %p51 = por %p49, %p50
    %p52 = scmp.ne.s32.totalorder %s44, %s46
    %p53 = scmp.eq.s32.totalorder %s15, 1
    %p54 = por %p52, %p53
    %p55 = scmp.ne.s32.totalorder %s46, %s47
    %p56 = scmp.eq.s32.totalorder %s15, 0
    %p57 = por %p55, %p56
    %p58 = scmp.ne.s32.totalorder %s46, %s47
    %p59 = scmp.eq.s32.totalorder %s16, 1
    %p60 = por %p58, %p59
    %p62 = scmp.ne.s32.totalorder %s47, %s61
    %p63 = scmp.eq.s32.totalorder %s16, 0
    %p64 = por %p62, %p63
    %s66 = sadd.s32 %s65, 1
    %p69 = scmp.eq.s32.totalorder %s10, 1
    %p70 = scmp.ne.s32.totalorder %s65, %s67
    %p71 = scmp.eq.s32.totalorder %s10, 0
    %p72 = por %p70, %p71
    %p73 = scmp.ne.s32.totalorder %s65, %s67
    %p74 = scmp.eq.s32.totalorder %s15, 1
    %p75 = por %p73, %p74
    %p76 = scmp.ne.s32.totalorder %s67, %s68
    %p77 = scmp.eq.s32.totalorder %s15, 0
    %p78 = por %p76, %p77
    %p79 = scmp.ne.s32.totalorder %s67, %s68
    %p80 = scmp.eq.s32.totalorder %s16, 1
    %p81 = por %p79, %p80
    %p83 = scmp.ne.s32.totalorder %s68, %s82
    %p84 = scmp.eq.s32.totalorder %s16, 0
    %p85 = por %p83, %p84
    %s86 = ssub.s32 %s10, %s17
    %p87 = scmp.eq.s32.totalorder %s86, 0
    %s89 = sadd.s32 %s88, 1
    %s90 = scalar_select %p87, %s88, %s89
    %p93 = pneg %p87
    %p94 = scmp.eq.s32.totalorder %s10, 1
    %p95 = por %p93, %p94
    %p96 = scmp.ne.s32.totalorder %s88, %s91
    %p97 = scmp.eq.s32.totalorder %s10, 0
    %p98 = por %p96, %p97
    %p99 = scmp.ne.s32.totalorder %s88, %s91
    %p100 = scmp.eq.s32.totalorder %s15, 1
    %p101 = por %p99, %p100
    %p102 = scmp.ne.s32.totalorder %s91, %s92
    %p103 = scmp.eq.s32.totalorder %s15, 0
    %p104 = por %p102, %p103
    %p105 = scmp.ne.s32.totalorder %s91, %s92
    %p106 = scmp.eq.s32.totalorder %s16, 1
    %p107 = por %p105, %p106
    %p109 = scmp.ne.s32.totalorder %s92, %s108
    %p110 = scmp.eq.s32.totalorder %s16, 0
    %p111 = por %p109, %p110
    %s112 = ssub.s32 %s10, %s17
    %p113 = scmp.eq.s32.totalorder %s112, 0
    %s115 = sadd.s32 %s114, 1
    %s116 = scalar_select %p113, %s114, %s115
    %p119 = pneg %p113
    %p120 = scmp.eq.s32.totalorder %s10, 1
    %p121 = por %p119, %p120
    %p122 = scmp.ne.s32.totalorder %s114, %s117
    %p123 = scmp.eq.s32.totalorder %s10, 0
    %p124 = por %p122, %p123
    %p125 = scmp.ne.s32.totalorder %s114, %s117
    %p126 = scmp.eq.s32.totalorder %s15, 1
    %p127 = por %p125, %p126
    %p128 = scmp.ne.s32.totalorder %s117, %s118
    %p129 = scmp.eq.s32.totalorder %s15, 0
    %p130 = por %p128, %p129
    %p131 = scmp.ne.s32.totalorder %s117, %s118
    %p132 = scmp.eq.s32.totalorder %s16, 1
    %p133 = por %p131, %p132
    %p135 = scmp.ne.s32.totalorder %s118, %s134
    %p136 = scmp.eq.s32.totalorder %s16, 0
    %p137 = por %p135, %p136
    %p138 = scmp.le.s32.totalorder 1, %s10
    %p139 = scmp.lt.s32.totalorder %s10, 3
    %p140 = pnand %p138, %p139
    %p141 = pneg %p140
    // Predicated region
    $region9: #{_lambda_.7} parent=5 // pred_check
      _
    $region10: #{_lambda_.7} parent=5 // pred_check_branch
      %143 = sbr.rel (%p140) target = $region12
    $region11: #{_lambda_.7} parent=5 // pred_region
      %s144 = ssub.s32 %s10, 1
      // Predicated region
      $region13: #{_lambda_.7} parent=11 // pred_check
        %p145 = pneg %p57
      $region14: #{_lambda_.7} parent=11 // pred_check_branch
        %147 = sbr.rel (%p145) target = $region16
      $region15: #{_lambda_.7} parent=11 // pred_region
        _
      $region16: #{_lambda_.7} parent=11 // pred_fallthru
        _
      // Predicated region
      $region17: #{_lambda_.7} parent=11 // pred_check
        %p148 = pneg %p78
      $region18: #{_lambda_.7} parent=11 // pred_check_branch
        %150 = sbr.rel (%p148) target = $region20
      $region19: #{_lambda_.7} parent=11 // pred_region
        _
      $region20: #{_lambda_.7} parent=11 // pred_fallthru
        _
    $region12: #{_lambda_.7} parent=5 // pred_fallthru
      _
    %p151 = scmp.lt.s32.totalorder %s10, 2
    // Predicated region
    $region21: #{_lambda_.7} parent=5 // pred_check
      %p152 = pneg %p151
    $region22: #{_lambda_.7} parent=5 // pred_check_branch
      %154 = sbr.rel (%p152) target = $region24
    $region23: #{_lambda_.7} parent=5 // pred_region
      // Predicated region
      $region25: #{_lambda_.7} parent=23 // pred_check
        %p155 = pneg %p30
      $region26: #{_lambda_.7} parent=23 // pred_check_branch
        %157 = sbr.rel (%p155) target = $region28
      $region27: #{_lambda_.7} parent=23 // pred_region
        %p158 = scmp.lt.s32.totalorder %s10, 1
        %s159 = scalar_select %p158, %s10, 1
        %s160 = smul.addr %s159, 2
        %s161 = smul.addr %s160, 4
        %s162 = scalar_lea.vmem %s0, %s161
      $region28: #{_lambda_.7} parent=23 // pred_fallthru
        _
      // Predicated region
      $region29: #{_lambda_.7} parent=23 // pred_check
        %p163 = pneg %p98
      $region30: #{_lambda_.7} parent=23 // pred_check_branch
        %165 = sbr.rel (%p163) target = $region32
      $region31: #{_lambda_.7} parent=23 // pred_region
        %p166 = scmp.lt.s32.totalorder %s10, 1
        %s167 = scalar_select %p166, %s10, 1
        %s168 = smul.addr %s167, 4
        %s169 = scalar_lea.vmem %s3, %s168
      $region32: #{_lambda_.7} parent=23 // pred_fallthru
        _
    $region24: #{_lambda_.7} parent=5 // pred_fallthru
      _
    %p170 = scmp.le.s32.totalorder 1, %s10
    %p171 = scmp.lt.s32.totalorder %s10, 3
    %p172 = pnand %p170, %p171
    %p173 = pneg %p172
    // Predicated region
    $region33: #{_lambda_.7} parent=5 // pred_check
      _
    $region34: #{_lambda_.7} parent=5 // pred_check_branch
      %175 = sbr.rel (%p172) target = $region36
    $region35: #{_lambda_.7} parent=5 // pred_region
      %s176 = ssub.s32 %s10, 1
      %p177 = scmp.lt.s32.totalorder %s15, 1
      %s178 = scalar_select %p177, %s15, 1
      %s179 = smul.addr %s178, 2
      %s180 = smul.addr %s179, 4
      %s181 = scalar_lea.vmem %s0, %s180
      %p182 = pneg %p36
      %p183 = pneg %p33
      %p184 = pneg %p57
      %p185 = pneg %p54
      %p186 = pneg %p78
      %p187 = pneg %p75
      %p188 = scmp.lt.s32.totalorder %s15, 1
      %s189 = scalar_select %p188, %s15, 1
      %s190 = smul.addr %s189, 4
      %s191 = scalar_lea.vmem %s3, %s190
      %p192 = pneg %p104
      %p193 = pneg %p101
      %p194 = pneg %p130
      %p195 = pneg %p127
      %p196 = scmp.lt.s32.totalorder %s15, 1
      %s197 = scalar_select %p196, %s15, 1
      %s198 = smul.addr %s197, 8
      %s199 = scalar_lea.vmem %s4, %s198
      %p200 = scmp.lt.s32.totalorder %s15, 1
      %s201 = scalar_select %p200, %s15, 1
      %s202 = smul.addr %s201, 2
      %s203 = smul.addr %s202, 4
      %s204 = scalar_lea.vmem %s0, %s203
      %p205 = scmp.lt.s32.totalorder %s15, 1
      %s206 = scalar_select %p205, %s15, 1
      %s207 = smul.addr %s206, 4
      %s208 = scalar_lea.vmem %s3, %s207
      %p209 = scmp.lt.s32.totalorder %s15, 1
      %s210 = scalar_select %p209, %s15, 1
      %s211 = smul.addr %s210, 8
      %s212 = scalar_lea.vmem %s4, %s211
      %v214 = vld [vmem:[%s204] sm:$0xf]
      %v215 = vld [vmem:[%s1] sm:$0xf]
      %v216 = vld [vmem:[%s204] sm:$0xff]
      %s217 = scalar_lea.vmem %s1, 4
      %v218 = vld [vmem:[%s217] sm:$0xf]
      %v220 = vunpack.c.l.b16 %v216
      %v221 = vunpack.c.h.b16 %v216
      %v222 = vpack.c.b16 %v220, %v220
      %v223 = vpack.c.b16 %v221, %v221
      %224 = vrot.lane.b32.xlu0 %v222, 127
      %v225 = vpop.permute.xlu0 %224
      %226 = vrot.lane.b32.xlu0 %v223, 127
      %v227 = vpop.permute.xlu0 %226
      %vm228 = vcmask 1039360
      %v229 = vsel %vm228, %v225, %v227
      %vm230 = vcmask 64512
      %v232 = vsel %vm230, %v218, 0
      %vm234 = vcmask 1043456
      %v236 = vsel %vm234, %v229, 0
      %238 = vmatprep.subr.bf16.mxu0 0
      %239 = vmatpush1.bf16.msra.mxu0 %v236
      %240 = vmatprep.subr.bf16.mxu0 0
      %241 = vmatpush1.bf16.msra.mxu0 0
      %242 = vmatprep.subr.bf16.mxu0 0
      %243 = vmatpush1.bf16.msra.mxu0 0
      %244 = vmatprep.subr.bf16.mxu0 0
      %245 = vmatpush1.bf16.msra.mxu0 0
      %246 = vmatprep.subr.bf16.mxu0 0
      %247 = vmatpush1.bf16.msra.mxu0 0
      %248 = vmatprep.subr.bf16.mxu0 0
      %249 = vmatpush1.bf16.msra.mxu0 0
      %250 = vmatprep.subr.bf16.mxu0 0
      %251 = vmatpush1.bf16.msra.mxu0 0
      %252 = vmatprep.subr.bf16.mxu0 0
      %253 = vmatpush1.bf16.msra.mxu0 0
      %254 = vmatprep.subr.bf16.mxu0 0
      %255 = vmatpush1.bf16.msra.mxu0 0
      %256 = vmatprep.subr.bf16.mxu0 0
      %257 = vmatpush1.bf16.msra.mxu0 0
      %258 = vmatprep.subr.bf16.mxu0 0
      %259 = vmatpush1.bf16.msra.mxu0 0
      %260 = vmatprep.subr.bf16.mxu0 0
      %261 = vmatpush1.bf16.msra.mxu0 0
      %262 = vmatprep.subr.bf16.mxu0 0
      %263 = vmatpush1.bf16.msra.mxu0 0
      %264 = vmatprep.subr.bf16.mxu0 0
      %265 = vmatpush1.bf16.msra.mxu0 0
      %266 = vmatprep.subr.bf16.mxu0 0
      %267 = vmatpush1.bf16.msra.mxu0 0
      %268 = vmatprep.subr.bf16.mxu0 0
      %269 = vmatpush1.bf16.msra.mxu0 0
      %270 = vmatprep.mubr.bf16.mxu0 0
      %271 = vmatmul.mubr.bf16.gmra.mrb[0].mxu0 %v232
      %v272 = vpop.f32.mrb[0].mxu0
      %v273 = vadd.f32 0.0, %v272
      %v274 = vpop.f32.mrb[0].mxu0
      %v275 = vpop.f32.mrb[0].mxu0
      %v276 = vpop.f32.mrb[0].mxu0
      %277 = vdwg.mxu0
      %v279 = vsel %vm230, %v215, 0
      %v282 = vsel %vm234, %v214, 0
      %284 = vmatprep.subr.bf16.mxu0 0
      %285 = vmatpush1.bf16.msra.mxu0 %v282
      %286 = vmatprep.subr.bf16.mxu0 0
      %287 = vmatpush1.bf16.msra.mxu0 0
      %288 = vmatprep.subr.bf16.mxu0 0
      %289 = vmatpush1.bf16.msra.mxu0 0
      %290 = vmatprep.subr.bf16.mxu0 0
      %291 = vmatpush1.bf16.msra.mxu0 0
      %292 = vmatprep.subr.bf16.mxu0 0
      %293 = vmatpush1.bf16.msra.mxu0 0
      %294 = vmatprep.subr.bf16.mxu0 0
      %295 = vmatpush1.bf16.msra.mxu0 0
      %296 = vmatprep.subr.bf16.mxu0 0
      %297 = vmatpush1.bf16.msra.mxu0 0
      %298 = vmatprep.subr.bf16.mxu0 0
      %299 = vmatpush1.bf16.msra.mxu0 0
      %300 = vmatprep.subr.bf16.mxu0 0
      %301 = vmatpush1.bf16.msra.mxu0 0
      %302 = vmatprep.subr.bf16.mxu0 0
      %303 = vmatpush1.bf16.msra.mxu0 0
      %304 = vmatprep.subr.bf16.mxu0 0
      %305 = vmatpush1.bf16.msra.mxu0 0
      %306 = vmatprep.subr.bf16.mxu0 0
      %307 = vmatpush1.bf16.msra.mxu0 0
      %308 = vmatprep.subr.bf16.mxu0 0
      %309 = vmatpush1.bf16.msra.mxu0 0
      %310 = vmatprep.subr.bf16.mxu0 0
      %311 = vmatpush1.bf16.msra.mxu0 0
      %312 = vmatprep.subr.bf16.mxu0 0
      %313 = vmatpush1.bf16.msra.mxu0 0
      %314 = vmatprep.subr.bf16.mxu0 0
      %315 = vmatpush1.bf16.msra.mxu0 0
      %316 = vmatprep.mubr.bf16.mxu0 0
      %317 = vmatmul.mubr.bf16.gmra.mrb[0].mxu0 %v279
      %v318 = vpop.f32.mrb[0].mxu0
      %v319 = vadd.f32 %v273, %v318
      %v320 = vpop.f32.mrb[0].mxu0
      %v321 = vpop.f32.mrb[0].mxu0
      %v322 = vpop.f32.mrb[0].mxu0
      %323 = vdwg.mxu0
      %s324 = scalar_lea.vmem %s1, 8
      %v325 = vld [vmem:[%s324] sm:$0xf]
      %326 = vrot.lane.b32.xlu0 %v222, 126
      %v327 = vpop.permute.xlu0 %326
      %328 = vrot.lane.b32.xlu0 %v223, 126
      %v329 = vpop.permute.xlu0 %328
      %vm330 = vcmask 1031168
      %v331 = vsel %vm330, %v327, %v329
      %v333 = vsel %vm230, %v325, 0
      %v336 = vsel %vm234, %v331, 0
      %338 = vmatprep.subr.bf16.mxu0 0
      %339 = vmatpush1.bf16.msra.mxu0 %v336
      %340 = vmatprep.subr.bf16.mxu0 0
      %341 = vmatpush1.bf16.msra.mxu0 0
      %342 = vmatprep.subr.bf16.mxu0 0
      %343 = vmatpush1.bf16.msra.mxu0 0
      %344 = vmatprep.subr.bf16.mxu0 0
      %345 = vmatpush1.bf16.msra.mxu0 0
      %346 = vmatprep.subr.bf16.mxu0 0
      %347 = vmatpush1.bf16.msra.mxu0 0
      %348 = vmatprep.subr.bf16.mxu0 0
      %349 = vmatpush1.bf16.msra.mxu0 0
      %350 = vmatprep.subr.bf16.mxu0 0
      %351 = vmatpush1.bf16.msra.mxu0 0
      %352 = vmatprep.subr.bf16.mxu0 0
      %353 = vmatpush1.bf16.msra.mxu0 0
      %354 = vmatprep.subr.bf16.mxu0 0
      %355 = vmatpush1.bf16.msra.mxu0 0
      %356 = vmatprep.subr.bf16.mxu0 0
      %357 = vmatpush1.bf16.msra.mxu0 0
      %358 = vmatprep.subr.bf16.mxu0 0
      %359 = vmatpush1.bf16.msra.mxu0 0
      %360 = vmatprep.subr.bf16.mxu0 0
      %361 = vmatpush1.bf16.msra.mxu0 0
      %362 = vmatprep.subr.bf16.mxu0 0
      %363 = vmatpush1.bf16.msra.mxu0 0
      %364 = vmatprep.subr.bf16.mxu0 0
      %365 = vmatpush1.bf16.msra.mxu0 0
      %366 = vmatprep.subr.bf16.mxu0 0
      %367 = vmatpush1.bf16.msra.mxu0 0
      %368 = vmatprep.subr.bf16.mxu0 0
      %369 = vmatpush1.bf16.msra.mxu0 0
      %370 = vmatprep.mubr.bf16.mxu0 0
      %371 = vmatmul.mubr.bf16.gmra.mrb[0].mxu0 %v333
      %v372 = vpop.f32.mrb[0].mxu0
      %v373 = vadd.f32 0.0, %v372
      %v374 = vpop.f32.mrb[0].mxu0
      %v375 = vpop.f32.mrb[0].mxu0
      %v376 = vpop.f32.mrb[0].mxu0
      %377 = vdwg.mxu0
      %v378 = vadd.f32 %v319, %v373
      %s379 = scalar_lea.vmem %s1, 12
      %v380 = vld [vmem:[%s379] sm:$0xf]
      %381 = vrot.lane.b32.xlu0 %v222, 118
      %v382 = vpop.permute.xlu0 %381
      %383 = vrot.lane.b32.xlu0 %v223, 118
      %v384 = vpop.permute.xlu0 %383
      %vm385 = vcmask 965632
      %v386 = vsel %vm385, %v382, %v384
      %v388 = vsel %vm230, %v380, 0
      %v391 = vsel %vm234, %v386, 0
      %393 = vmatprep.subr.bf16.mxu0 0
      %394 = vmatpush1.bf16.msra.mxu0 %v391
      %395 = vmatprep.subr.bf16.mxu0 0
      %396 = vmatpush1.bf16.msra.mxu0 0
      %397 = vmatprep.subr.bf16.mxu0 0
      %398 = vmatpush1.bf16.msra.mxu0 0
      %399 = vmatprep.subr.bf16.mxu0 0
      %400 = vmatpush1.bf16.msra.mxu0 0
      %401 = vmatprep.subr.bf16.mxu0 0
      %402 = vmatpush1.bf16.msra.mxu0 0
      %403 = vmatprep.subr.bf16.mxu0 0
      %404 = vmatpush1.bf16.msra.mxu0 0
      %405 = vmatprep.subr.bf16.mxu0 0
      %406 = vmatpush1.bf16.msra.mxu0 0
      %407 = vmatprep.subr.bf16.mxu0 0
      %408 = vmatpush1.bf16.msra.mxu0 0
      %409 = vmatprep.subr.bf16.mxu0 0
      %410 = vmatpush1.bf16.msra.mxu0 0
      %411 = vmatprep.subr.bf16.mxu0 0
      %412 = vmatpush1.bf16.msra.mxu0 0
      %413 = vmatprep.subr.bf16.mxu0 0
      %414 = vmatpush1.bf16.msra.mxu0 0
      %415 = vmatprep.subr.bf16.mxu0 0
      %416 = vmatpush1.bf16.msra.mxu0 0
      %417 = vmatprep.subr.bf16.mxu0 0
      %418 = vmatpush1.bf16.msra.mxu0 0
      %419 = vmatprep.subr.bf16.mxu0 0
      %420 = vmatpush1.bf16.msra.mxu0 0
      %421 = vmatprep.subr.bf16.mxu0 0
      %422 = vmatpush1.bf16.msra.mxu0 0
      %423 = vmatprep.subr.bf16.mxu0 0
      %424 = vmatpush1.bf16.msra.mxu0 0
      %425 = vmatprep.mubr.bf16.mxu0 0
      %426 = vmatmul.mubr.bf16.gmra.mrb[0].mxu0 %v388
      %v427 = vpop.f32.mrb[0].mxu0
      %v428 = vadd.f32 0.0, %v427
      %v429 = vpop.f32.mrb[0].mxu0
      %v430 = vpop.f32.mrb[0].mxu0
      %v431 = vpop.f32.mrb[0].mxu0
      %432 = vdwg.mxu0
      %v433 = vadd.f32 %v378, %v428
      %s434 = scalar_lea.vmem %s1, 16
      %v435 = vld [vmem:[%s434] sm:$0xf]
      %436 = vrot.lane.b32.xlu0 %v222, 117
      %v437 = vpop.permute.xlu0 %436
      %438 = vrot.lane.b32.xlu0 %v223, 117
      %v439 = vpop.permute.xlu0 %438
      %vm440 = vcmask 957440
      %v441 = vsel %vm440, %v437, %v439
      %v443 = vsel %vm230, %v435, 0
      %v446 = vsel %vm234, %v441, 0
      %448 = vmatprep.subr.bf16.mxu0 0
      %449 = vmatpush1.bf16.msra.mxu0 %v446
      %450 = vmatprep.subr.bf16.mxu0 0
      %451 = vmatpush1.bf16.msra.mxu0 0
      %452 = vmatprep.subr.bf16.mxu0 0
      %453 = vmatpush1.bf16.msra.mxu0 0
      %454 = vmatprep.subr.bf16.mxu0 0
      %455 = vmatpush1.bf16.msra.mxu0 0
      %456 = vmatprep.subr.bf16.mxu0 0
      %457 = vmatpush1.bf16.msra.mxu0 0
      %458 = vmatprep.subr.bf16.mxu0 0
      %459 = vmatpush1.bf16.msra.mxu0 0
      %460 = vmatprep.subr.bf16.mxu0 0
      %461 = vmatpush1.bf16.msra.mxu0 0
      %462 = vmatprep.subr.bf16.mxu0 0
      %463 = vmatpush1.bf16.msra.mxu0 0
      %464 = vmatprep.subr.bf16.mxu0 0
      %465 = vmatpush1.bf16.msra.mxu0 0
      %466 = vmatprep.subr.bf16.mxu0 0
      %467 = vmatpush1.bf16.msra.mxu0 0
      %468 = vmatprep.subr.bf16.mxu0 0
      %469 = vmatpush1.bf16.msra.mxu0 0
      %470 = vmatprep.subr.bf16.mxu0 0
      %471 = vmatpush1.bf16.msra.mxu0 0
      %472 = vmatprep.subr.bf16.mxu0 0
      %473 = vmatpush1.bf16.msra.mxu0 0
      %474 = vmatprep.subr.bf16.mxu0 0
      %475 = vmatpush1.bf16.msra.mxu0 0
      %476 = vmatprep.subr.bf16.mxu0 0
      %477 = vmatpush1.bf16.msra.mxu0 0
      %478 = vmatprep.subr.bf16.mxu0 0
      %479 = vmatpush1.bf16.msra.mxu0 0
      %480 = vmatprep.mubr.bf16.mxu0 0
      %481 = vmatmul.mubr.bf16.gmra.mrb[0].mxu0 %v443
      %v482 = vpop.f32.mrb[0].mxu0
      %v483 = vadd.f32 0.0, %v482
      %v484 = vpop.f32.mrb[0].mxu0
      %v485 = vpop.f32.mrb[0].mxu0
      %v486 = vpop.f32.mrb[0].mxu0
      %487 = vdwg.mxu0
      %v488 = vadd.f32 %v433, %v483
      %s489 = scalar_lea.vmem %s1, 20
      %v490 = vld [vmem:[%s489] sm:$0xf]
      %491 = vrot.lane.b32.xlu0 %v222, 116
      %v492 = vpop.permute.xlu0 %491
      %493 = vrot.lane.b32.xlu0 %v223, 116
      %v494 = vpop.permute.xlu0 %493
      %vm495 = vcmask 949248
      %v496 = vsel %vm495, %v492, %v494
      %v498 = vsel %vm230, %v490, 0
      %v501 = vsel %vm234, %v496, 0
      %503 = vmatprep.subr.bf16.mxu0 0
      %504 = vmatpush1.bf16.msra.mxu0 %v501
      %505 = vmatprep.subr.bf16.mxu0 0
      %506 = vmatpush1.bf16.msra.mxu0 0
      %507 = vmatprep.subr.bf16.mxu0 0
      %508 = vmatpush1.bf16.msra.mxu0 0
      %509 = vmatprep.subr.bf16.mxu0 0
      %510 = vmatpush1.bf16.msra.mxu0 0
      %511 = vmatprep.subr.bf16.mxu0 0
      %512 = vmatpush1.bf16.msra.mxu0 0
      %513 = vmatprep.subr.bf16.mxu0 0
      %514 = vmatpush1.bf16.msra.mxu0 0
      %515 = vmatprep.subr.bf16.mxu0 0
      %516 = vmatpush1.bf16.msra.mxu0 0
      %517 = vmatprep.subr.bf16.mxu0 0
      %518 = vmatpush1.bf16.msra.mxu0 0
      %519 = vmatprep.subr.bf16.mxu0 0
      %520 = vmatpush1.bf16.msra.mxu0 0
      %521 = vmatprep.subr.bf16.mxu0 0
      %522 = vmatpush1.bf16.msra.mxu0 0
      %523 = vmatprep.subr.bf16.mxu0 0
      %524 = vmatpush1.bf16.msra.mxu0 0
      %525 = vmatprep.subr.bf16.mxu0 0
      %526 = vmatpush1.bf16.msra.mxu0 0
      %527 = vmatprep.subr.bf16.mxu0 0
      %528 = vmatpush1.bf16.msra.mxu0 0
      %529 = vmatprep.subr.bf16.mxu0 0
      %530 = vmatpush1.bf16.msra.mxu0 0
      %531 = vmatprep.subr.bf16.mxu0 0
      %532 = vmatpush1.bf16.msra.mxu0 0
      %533 = vmatprep.subr.bf16.mxu0 0
      %534 = vmatpush1.bf16.msra.mxu0 0
      %535 = vmatprep.mubr.bf16.mxu0 0
      %536 = vmatmul.mubr.bf16.gmra.mrb[0].mxu0 %v498
      %v537 = vpop.f32.mrb[0].mxu0
      %v538 = vadd.f32 0.0, %v537
      %v539 = vpop.f32.mrb[0].mxu0
      %v540 = vpop.f32.mrb[0].mxu0
      %v541 = vpop.f32.mrb[0].mxu0
      %542 = vdwg.mxu0
      %v543 = vadd.f32 %v488, %v538
      %s544 = scalar_lea.vmem %s1, 24
      %v545 = vld [vmem:[%s544] sm:$0xf]
      %546 = vrot.lane.b32.xlu0 %v222, 108
      %v547 = vpop.permute.xlu0 %546
      %548 = vrot.lane.b32.xlu0 %v223, 108
      %v549 = vpop.permute.xlu0 %548
      %vm550 = vcmask 883712
      %v551 = vsel %vm550, %v547, %v549
      %v553 = vsel %vm230, %v545, 0
      %v556 = vsel %vm234, %v551, 0
      %558 = vmatprep.subr.bf16.mxu0 0
      %559 = vmatpush1.bf16.msra.mxu0 %v556
      %560 = vmatprep.subr.bf16.mxu0 0
      %561 = vmatpush1.bf16.msra.mxu0 0
      %562 = vmatprep.subr.bf16.mxu0 0
      %563 = vmatpush1.bf16.msra.mxu0 0
      %564 = vmatprep.subr.bf16.mxu0 0
      %565 = vmatpush1.bf16.msra.mxu0 0
      %566 = vmatprep.subr.bf16.mxu0 0
      %567 = vmatpush1.bf16.msra.mxu0 0
      %568 = vmatprep.subr.bf16.mxu0 0
      %569 = vmatpush1.bf16.msra.mxu0 0
      %570 = vmatprep.subr.bf16.mxu0 0
      %571 = vmatpush1.bf16.msra.mxu0 0
      %572 = vmatprep.subr.bf16.mxu0 0
      %573 = vmatpush1.bf16.msra.mxu0 0
      %574 = vmatprep.subr.bf16.mxu0 0
      %575 = vmatpush1.bf16.msra.mxu0 0
      %576 = vmatprep.subr.bf16.mxu0 0
      %577 = vmatpush1.bf16.msra.mxu0 0
      %578 = vmatprep.subr.bf16.mxu0 0
      %579 = vmatpush1.bf16.msra.mxu0 0
      %580 = vmatprep.subr.bf16.mxu0 0
      %581 = vmatpush1.bf16.msra.mxu0 0
      %582 = vmatprep.subr.bf16.mxu0 0
      %583 = vmatpush1.bf16.msra.mxu0 0
      %584 = vmatprep.subr.bf16.mxu0 0
      %585 = vmatpush1.bf16.msra.mxu0 0
      %586 = vmatprep.subr.bf16.mxu0 0
      %587 = vmatpush1.bf16.msra.mxu0 0
      %588 = vmatprep.subr.bf16.mxu0 0
      %589 = vmatpush1.bf16.msra.mxu0 0
      %590 = vmatprep.mubr.bf16.mxu0 0
      %591 = vmatmul.mubr.bf16.gmra.mrb[0].mxu0 %v553
      %v592 = vpop.f32.mrb[0].mxu0
      %v593 = vadd.f32 0.0, %v592
      %v594 = vpop.f32.mrb[0].mxu0
      %v595 = vpop.f32.mrb[0].mxu0
      %v596 = vpop.f32.mrb[0].mxu0
      %597 = vdwg.mxu0
      %v598 = vadd.f32 %v543, %v593
      %s599 = scalar_lea.vmem %s1, 28
      %v600 = vld [vmem:[%s599] sm:$0xf]
      %601 = vrot.lane.b32.xlu0 %v222, 107
      %v602 = vpop.permute.xlu0 %601
      %603 = vrot.lane.b32.xlu0 %v223, 107
      %v604 = vpop.permute.xlu0 %603
      %vm605 = vcmask 875520
      %v606 = vsel %vm605, %v602, %v604
      %v608 = vsel %vm230, %v600, 0
      %v611 = vsel %vm234, %v606, 0
      %613 = vmatprep.subr.bf16.mxu0 0
      %614 = vmatpush1.bf16.msra.mxu0 %v611
      %615 = vmatprep.subr.bf16.mxu0 0
      %616 = vmatpush1.bf16.msra.mxu0 0
      %617 = vmatprep.subr.bf16.mxu0 0
      %618 = vmatpush1.bf16.msra.mxu0 0
      %619 = vmatprep.subr.bf16.mxu0 0
      %620 = vmatpush1.bf16.msra.mxu0 0
      %621 = vmatprep.subr.bf16.mxu0 0
      %622 = vmatpush1.bf16.msra.mxu0 0
      %623 = vmatprep.subr.bf16.mxu0 0
      %624 = vmatpush1.bf16.msra.mxu0 0
      %625 = vmatprep.subr.bf16.mxu0 0
      %626 = vmatpush1.bf16.msra.mxu0 0
      %627 = vmatprep.subr.bf16.mxu0 0
      %628 = vmatpush1.bf16.msra.mxu0 0
      %629 = vmatprep.subr.bf16.mxu0 0
      %630 = vmatpush1.bf16.msra.mxu0 0
      %631 = vmatprep.subr.bf16.mxu0 0
      %632 = vmatpush1.bf16.msra.mxu0 0
      %633 = vmatprep.subr.bf16.mxu0 0
      %634 = vmatpush1.bf16.msra.mxu0 0
      %635 = vmatprep.subr.bf16.mxu0 0
      %636 = vmatpush1.bf16.msra.mxu0 0
      %637 = vmatprep.subr.bf16.mxu0 0
      %638 = vmatpush1.bf16.msra.mxu0 0
      %639 = vmatprep.subr.bf16.mxu0 0
      %640 = vmatpush1.bf16.msra.mxu0 0
      %641 = vmatprep.subr.bf16.mxu0 0
      %642 = vmatpush1.bf16.msra.mxu0 0
      %643 = vmatprep.subr.bf16.mxu0 0
      %644 = vmatpush1.bf16.msra.mxu0 0
      %645 = vmatprep.mubr.bf16.mxu0 0
      %646 = vmatmul.mubr.bf16.gmra.mrb[0].mxu0 %v608
      %v647 = vpop.f32.mrb[0].mxu0
      %v648 = vadd.f32 0.0, %v647
      %v649 = vpop.f32.mrb[0].mxu0
      %v650 = vpop.f32.mrb[0].mxu0
      %v651 = vpop.f32.mrb[0].mxu0
      %652 = vdwg.mxu0
      %v653 = vadd.f32 %v598, %v648
      %s654 = scalar_lea.vmem %s1, 32
      %v655 = vld [vmem:[%s654] sm:$0xf]
      %656 = vrot.lane.b32.xlu0 %v222, 106
      %v657 = vpop.permute.xlu0 %656
      %658 = vrot.lane.b32.xlu0 %v223, 106
      %v659 = vpop.permute.xlu0 %658
      %vm660 = vcmask 867328
      %v661 = vsel %vm660, %v657, %v659
      %v663 = vsel %vm230, %v655, 0
      %v666 = vsel %vm234, %v661, 0
      %668 = vmatprep.subr.bf16.mxu0 0
      %669 = vmatpush1.bf16.msra.mxu0 %v666
      %670 = vmatprep.subr.bf16.mxu0 0
      %671 = vmatpush1.bf16.msra.mxu0 0
      %672 = vmatprep.subr.bf16.mxu0 0
      %673 = vmatpush1.bf16.msra.mxu0 0
      %674 = vmatprep.subr.bf16.mxu0 0
      %675 = vmatpush1.bf16.msra.mxu0 0
      %676 = vmatprep.subr.bf16.mxu0 0
      %677 = vmatpush1.bf16.msra.mxu0 0
      %678 = vmatprep.subr.bf16.mxu0 0
      %679 = vmatpush1.bf16.msra.mxu0 0
      %680 = vmatprep.subr.bf16.mxu0 0
      %681 = vmatpush1.bf16.msra.mxu0 0
      %682 = vmatprep.subr.bf16.mxu0 0
      %683 = vmatpush1.bf16.msra.mxu0 0
      %684 = vmatprep.subr.bf16.mxu0 0
      %685 = vmatpush1.bf16.msra.mxu0 0
      %686 = vmatprep.subr.bf16.mxu0 0
      %687 = vmatpush1.bf16.msra.mxu0 0
      %688 = vmatprep.subr.bf16.mxu0 0
      %689 = vmatpush1.bf16.msra.mxu0 0
      %690 = vmatprep.subr.bf16.mxu0 0
      %691 = vmatpush1.bf16.msra.mxu0 0
      %692 = vmatprep.subr.bf16.mxu0 0
      %693 = vmatpush1.bf16.msra.mxu0 0
      %694 = vmatprep.subr.bf16.mxu0 0
      %695 = vmatpush1.bf16.msra.mxu0 0
      %696 = vmatprep.subr.bf16.mxu0 0
      %697 = vmatpush1.bf16.msra.mxu0 0
      %698 = vmatprep.subr.bf16.mxu0 0
      %699 = vmatpush1.bf16.msra.mxu0 0
      %700 = vmatprep.mubr.bf16.mxu0 0
      %701 = vmatmul.mubr.bf16.gmra.mrb[0].mxu0 %v663
      %v702 = vpop.f32.mrb[0].mxu0
      %v703 = vadd.f32 0.0, %v702
      %v704 = vpop.f32.mrb[0].mxu0
      %v705 = vpop.f32.mrb[0].mxu0
      %v706 = vpop.f32.mrb[0].mxu0
      %707 = vdwg.mxu0
      %v708 = vadd.f32 %v653, %v703
      %v709 = vld [vmem:[%s2] sm:$0xff]
      %711 = vset.pattern.permute.xlu0 0
      %712 = vperm.xlu0 %711, %v709
      %v713 = vpop.permute.xlu0 %712
      %v715 = vadd.f32 %v708, %v713
      %v716 = vld [vmem:[%s208] sm:$0xf]
      %v717 = vunpack.c.l.bf16 %v716
      %v718 = vadd.f32 %v715, %v717
      %v719 = vmax.f32 %v718, 0.0
      %720 = vst [vmem:[%s212] sm:$0xff] %v719
      %p721 = scmp.lt.s32.totalorder %s15, 1
      %s722 = scalar_select %p721, %s15, 1
      %s723 = smul.addr %s722, 8
      %s724 = scalar_lea.vmem %s4, %s723
      // Predicated region
      $region37: #{_lambda_.7} parent=35 // pred_check
        %p725 = pneg %p127
      $region38: #{_lambda_.7} parent=35 // pred_check_branch
        %727 = sbr.rel (%p725) target = $region40
      $region39: #{_lambda_.7} parent=35 // pred_region
        _
      $region40: #{_lambda_.7} parent=35 // pred_fallthru
        _
    $region36: #{_lambda_.7} parent=5 // pred_fallthru
      _
    %p728 = scmp.le.s32.totalorder 2, %s10
    // Predicated region
    $region41: #{_lambda_.7} parent=5 // pred_check
      %p729 = pneg %p728
    $region42: #{_lambda_.7} parent=5 // pred_check_branch
      %731 = sbr.rel (%p729) target = $region44
    $region43: #{_lambda_.7} parent=5 // pred_region
      %s732 = ssub.s32 %s10, 2
      // Predicated region
      $region45: #{_lambda_.7} parent=43 // pred_check
        %p733 = pneg %p133
      $region46: #{_lambda_.7} parent=43 // pred_check_branch
        %735 = sbr.rel (%p733) target = $region48
      $region47: #{_lambda_.7} parent=43 // pred_region
        %p736 = scmp.lt.s32.totalorder %s16, 1
        %s737 = scalar_select %p736, %s16, 1
        %s738 = smul.addr %s737, 8
        %s739 = scalar_lea.vmem %s4, %s738
      $region48: #{_lambda_.7} parent=43 // pred_fallthru
        _
    $region44: #{_lambda_.7} parent=5 // pred_fallthru
      _
  $region6: #{_lambda_.7} parent=0 // loop_footer
    %s14 = sadd.s32 1, %s10
  $region7: #{_lambda_.7} parent=0 // loop_footer_branch
    %9 = sbr.rel target = $region3
  $region8: #{_lambda_.7} parent=0 // loop_exit
    _

</llo_original>
